<compile_context>
chip_gen: v5e
topology: v5e:2x2
jax: 0.10.0
libtpu: 0.0.40
codegen_flags: <defaults>
</compile_context>

<pallas_src>
import functools
import math

import numpy as np

import jax
import jax.numpy as jnp
from jax import lax
from jax.experimental import pallas as pl
from jax.experimental.pallas import tpu as pltpu


# ------------------------------------------------------------ kernel helpers --

def _norm(x, alpha, bias, eps):
    # Matches PyTorch `Norm`: alpha*(x-mean)/(std+eps)+bias with torch.std's
    # unbiased estimator (divide by D-1).  Exact divide (an approximate
    # reciprocal here would rescale the entire activation).
    d = x.shape[-1]
    mean = jnp.mean(x, axis=-1, keepdims=True)
    xc = x - mean
    var = jnp.sum(xc * xc, axis=-1, keepdims=True) * (1.0 / (d - 1))
    return alpha * xc / (jnp.sqrt(var) + eps) + bias


def _attention(q_all, k_all, v_all, wo, bo, add_mask, heads, dk, mm_dtype):
    """Multi-head attention core on already-projected rows.

    q_all: (Nq, H*dk), k_all/v_all: (Nk, H*dk), add_mask: (Nq, Nk) additive
    (0 where attention is allowed, -1e9 elsewhere; encodes causal + per-sample
    block-diagonal structure, so all B samples are handled in one shot).
    Per-head score/softmax/p@v (tiny matmuls), then one fused output
    projection on the lane-concatenated head outputs.
    """
    scale = 1.0 / math.sqrt(dk)
    head_outs = []
    for h in range(heads):                      # TODO(synk): fori_loop at large H
        sl = slice(h * dk, (h + 1) * dk)
        q = q_all[:, sl]
        k = k_all[:, sl]
        v = v_all[:, sl]
        # scores = q @ k.T (contract last dims, no transpose) + hoisted mask
        s = lax.dot_general(q, k, (((1,), (1,)), ((), ())),
                            preferred_element_type=jnp.float32) * scale
        s = s + add_mask
        m = jnp.max(s, axis=-1, keepdims=True)
        e = jnp.exp(s - m)
        # approx reciprocal only for the softmax denominator (EUP slot).
        p = e * pl.reciprocal(jnp.sum(e, axis=-1, keepdims=True), approx=True)
        head_outs.append(jnp.dot(p, v, preferred_element_type=jnp.float32))
    concat = jnp.concatenate(head_outs, axis=-1)            # (Nq, H*dk)
    return jnp.dot(concat.astype(mm_dtype), wo,
                   preferred_element_type=jnp.float32) + bo


def _decoder_kernel(trg_ref, eout_ref, pe_ref, smask_ref, cmask_ref,
                    wqkv_s_ref, bqkv_s_ref, wo_s_ref, bo_s_ref,
                    wq_c_ref, bq_c_ref, wkv_c_ref, bkv_c_ref,
                    wo_c_ref, bo_c_ref,
                    w1_ref, b1_ref, w2_ref, b2_ref,
                    ln_a_ref, ln_b_ref, fn_a_ref, fn_b_ref,
                    o_ref, *, n_layers, heads, d_model, eps):
    mm_dtype = wqkv_s_ref.dtype
    dk = d_model // heads
    hdk = heads * dk                                       # == d_model

    # PositionalEncoder: x*sqrt(d_model) + pe (pe already tiled to (B*St, D)).
    x = trg_ref[...] * math.sqrt(d_model) + pe_ref[...]    # (B*St, D)
    e_out = eout_ref[...]                                   # (B*Ss, D)
    self_mask = smask_ref[...]                              # hoisted, loaded once
    cross_mask = cmask_ref[...]

    for l in range(n_layers):   # TODO(synk): grid axis / fori_loop at large L
        # --- masked self-attention (pre-norm, residual): one fused QKV matmul
        x2 = _norm(x, ln_a_ref[3 * l + 0], ln_b_ref[3 * l + 0], eps)
        qkv = jnp.dot(x2.astype(mm_dtype), wqkv_s_ref[l],
                      preferred_element_type=jnp.float32) + bqkv_s_ref[l]
        x = x + _attention(qkv[:, :hdk], qkv[:, hdk:2 * hdk], qkv[:, 2 * hdk:],
                           wo_s_ref[l], bo_s_ref[l], self_mask,
                           heads, dk, mm_dtype)

        # --- cross-attention with encoder outputs: fused Q and fused KV matmuls
        x2 = _norm(x, ln_a_ref[3 * l + 1], ln_b_ref[3 * l + 1], eps)
        q = jnp.dot(x2.astype(mm_dtype), wq_c_ref[l],
                    preferred_element_type=jnp.float32) + bq_c_ref[l]
        kv = jnp.dot(e_out.astype(mm_dtype), wkv_c_ref[l],
                     preferred_element_type=jnp.float32) + bkv_c_ref[l]
        x = x + _attention(q, kv[:, :hdk], kv[:, hdk:],
                           wo_c_ref[l], bo_c_ref[l], cross_mask,
                           heads, dk, mm_dtype)

        # --- feed-forward ---
        x2 = _norm(x, ln_a_ref[3 * l + 2], ln_b_ref[3 * l + 2], eps)
        h1 = jnp.maximum(
            jnp.dot(x2.astype(mm_dtype), w1_ref[l],
                    preferred_element_type=jnp.float32) + b1_ref[l], 0.0)
        x = x + jnp.dot(h1.astype(mm_dtype), w2_ref[l],
                        preferred_element_type=jnp.float32) + b2_ref[l]

    # Final Norm -> only HBM store of the whole forward pass.
    o_ref[...] = _norm(x, fn_a_ref[...], fn_b_ref[...], eps)


# ----------------------------------------------------------------- wrapper ----

def decoder_forward(params, trg, e_outputs, trg_mask=None, *,
                    heads, n_layers, eps=1e-6):
    """trg: (B, S_t, D), e_outputs: (B, S_s, D) -> (B, S_t, D)."""
    B, St, D = trg.shape
    Ss = e_outputs.shape[1]

    # Fold the batch: all projection / FF matmuls run on (B*S, D) slabs.
    trg_flat = trg.reshape(B * St, D)
    eout_flat = e_outputs.reshape(B * Ss, D)
    pe_tiled = jnp.tile(params["pe"][:St], (B, 1))           # (B*St, D)

    # Additive masks built once, outside the kernel (hoisted out of all loops):
    #   self-attn : per-sample block-diagonal AND the trg (no-peak) mask
    #   cross-attn: per-sample block-diagonal (src mask assumed all-ones)
    if trg_mask is None:
        trg_mask = (jnp.arange(St)[:, None] >= jnp.arange(St)[None, :])
    else:
        trg_mask = trg_mask.reshape(St, St) != 0
    row_b = jnp.repeat(jnp.arange(B), St)
    col_b = jnp.repeat(jnp.arange(B), Ss)
    same_tt = row_b[:, None] == row_b[None, :]
    same_ts = row_b[:, None] == col_b[None, :]
    self_mask = jnp.where(same_tt & jnp.tile(trg_mask, (B, B)),
                          0.0, -1e9).astype(jnp.float32)     # (B*St, B*St)
    cross_mask = jnp.where(same_ts, 0.0, -1e9).astype(jnp.float32)  # (B*St, B*Ss)

    weight_names = ["wqkv_self", "bqkv_self", "wo_self", "bo_self",
                    "wq_cross", "bq_cross", "wkv_cross", "bkv_cross",
                    "wo_cross", "bo_cross",
                    "ff_w1", "ff_b1", "ff_w2", "ff_b2",
                    "ln_a", "ln_b", "fn_a", "fn_b"]
    weights = [params[n] for n in weight_names]

    operands = [trg_flat, eout_flat, pe_tiled, self_mask, cross_mask] + weights

    kernel = functools.partial(_decoder_kernel, n_layers=n_layers, heads=heads,
                               d_model=D, eps=eps)

    # No grid: single invocation, every operand is a whole-array VMEM-resident
    # block (no double-buffering).  At these sizes weights+activations << VMEM.
    vmem_spec = pl.BlockSpec(memory_space=pltpu.MemorySpace.VMEM)
    out_flat = pl.pallas_call(
        kernel,
        out_shape=jax.ShapeDtypeStruct((B * St, D), jnp.float32),
        in_specs=[vmem_spec] * len(operands),
        out_specs=vmem_spec,
        compiler_params=pltpu.CompilerParams(
            vmem_limit_bytes=32 * 1024 * 1024),
    )(*operands)
    return out_flat.reshape(B, St, D)


# ------------------------------------------------------------- param init ----

def _pe_table(window, d_model):
    # Standard blog PositionalEncoder table (d_model assumed even).
    pe = np.zeros((window, d_model), np.float32)
    for pos in range(window):
        for i in range(0, d_model, 2):
            pe[pos, i] = math.sin(pos / (10000 ** ((2 * i) / d_model)))
            pe[pos, i + 1] = math.cos(pos / (10000 ** ((2 * (i + 1)) / d_model)))
    return jnp.asarray(pe)


def init_decoder(key, *, d_model, n_layers, heads, d_ff, window,
                 matmul_dtype=jnp.float32):
    # matmul_dtype=jnp.bfloat16 halves weight VMEM/HBM traffic and uses the
    # MXU at its native bf16 rate on v5e/v6e; kept f32 here for fidelity.
    L, D, F = n_layers, d_model, d_ff
    hdk = (d_model // heads) * heads            # == d_model
    ks = jax.random.split(key, 7)

    def w(k, shape):
        return (0.02 * jax.random.normal(k, shape, jnp.float32)).astype(matmul_dtype)

    return {
        # Lane-dense, per-layer fused weights (last dim is the wide matmul dim).
        "wqkv_self": w(ks[0], (L, D, 3 * hdk)),
        "bqkv_self": jnp.zeros((L, 1, 3 * hdk), jnp.float32),
        "wo_self":   w(ks[1], (L, hdk, D)),
        "bo_self":   jnp.zeros((L, 1, D), jnp.float32),
        "wq_cross":  w(ks[2], (L, D, hdk)),
        "bq_cross":  jnp.zeros((L, 1, hdk), jnp.float32),
        "wkv_cross": w(ks[3], (L, D, 2 * hdk)),
        "bkv_cross": jnp.zeros((L, 1, 2 * hdk), jnp.float32),
        "wo_cross":  w(ks[4], (L, hdk, D)),
        "bo_cross":  jnp.zeros((L, 1, D), jnp.float32),
        "ff_w1":     w(ks[5], (L, D, F)),
        "ff_b1":     jnp.zeros((L, 1, F), jnp.float32),
        "ff_w2":     w(ks[6], (L, F, D)),
        "ff_b2":     jnp.zeros((L, 1, D), jnp.float32),
        "ln_a":      jnp.ones((L * 3, 1, D), jnp.float32),
        "ln_b":      jnp.zeros((L * 3, 1, D), jnp.float32),
        "fn_a":      jnp.ones((1, D), jnp.float32),
        "fn_b":      jnp.zeros((1, D), jnp.float32),
        "pe":        _pe_table(window, D),
    }


# ---------------------------------------------------------------------- main --

if __name__ == "__main__":
    B = 2
    window = 8          # encoder seq = window; decoder seq = window - 1
    d_model = 32
    heads = 4           # the `attention` ctor arg = number of heads
    n_layers = 2
    d_ff = 64

    key = jax.random.PRNGKey(0)
    k_trg, k_enc, k_param = jax.random.split(key, 3)

    trg = jax.random.normal(k_trg, (B, window - 1, d_model), jnp.float32)
    e_outputs = jax.random.normal(k_enc, (B, window, d_model), jnp.float32)
    # Decoder.forward's `mask` argument: standard no-peak causal mask (default
    # built inside decoder_forward; an explicit (St, St) mask may be passed).

    params = init_decoder(k_param, d_model=d_model, n_layers=n_layers,
                          heads=heads, d_ff=d_ff, window=window)

    out = decoder_forward(params, trg, e_outputs, heads=heads,
                          n_layers=n_layers)
    out = jax.block_until_ready(out)

    assert out.shape == (B, window - 1, d_model), out.shape
    assert bool(jnp.all(jnp.isfinite(out)))
    print("KERNEL_OK")
</pallas_src>

<mosaic_0001>
module attributes {stable_mosaic.version = 11 : i64} {
  func.func @_decoder_kernel(%arg0: memref<14x32xf32, #tpu.memory_space<vmem>>, %arg1: memref<16x32xf32, #tpu.memory_space<vmem>>, %arg2: memref<14x32xf32, #tpu.memory_space<vmem>>, %arg3: memref<14x14xf32, #tpu.memory_space<vmem>>, %arg4: memref<14x16xf32, #tpu.memory_space<vmem>>, %arg5: memref<2x32x96xf32, #tpu.memory_space<vmem>>, %arg6: memref<2x1x96xf32, #tpu.memory_space<vmem>>, %arg7: memref<2x32x32xf32, #tpu.memory_space<vmem>>, %arg8: memref<2x1x32xf32, #tpu.memory_space<vmem>>, %arg9: memref<2x32x32xf32, #tpu.memory_space<vmem>>, %arg10: memref<2x1x32xf32, #tpu.memory_space<vmem>>, %arg11: memref<2x32x64xf32, #tpu.memory_space<vmem>>, %arg12: memref<2x1x64xf32, #tpu.memory_space<vmem>>, %arg13: memref<2x32x32xf32, #tpu.memory_space<vmem>>, %arg14: memref<2x1x32xf32, #tpu.memory_space<vmem>>, %arg15: memref<2x32x64xf32, #tpu.memory_space<vmem>>, %arg16: memref<2x1x64xf32, #tpu.memory_space<vmem>>, %arg17: memref<2x64x32xf32, #tpu.memory_space<vmem>>, %arg18: memref<2x1x32xf32, #tpu.memory_space<vmem>>, %arg19: memref<6x1x32xf32, #tpu.memory_space<vmem>>, %arg20: memref<6x1x32xf32, #tpu.memory_space<vmem>>, %arg21: memref<1x32xf32, #tpu.memory_space<vmem>>, %arg22: memref<1x32xf32, #tpu.memory_space<vmem>>, %arg23: memref<14x32xf32, #tpu.memory_space<vmem>>) attributes {dimension_semantics = [], scalar_prefetch = 0 : i64, scratch_operands = 0 : i64, tpu.core_type = #tpu.core_type<tc>} {
    %c0 = arith.constant 0 : index
    %c0_0 = arith.constant 0 : index
    %0 = vector.load %arg0[%c0, %c0_0] : memref<14x32xf32, #tpu.memory_space<vmem>>, vector<14x32xf32>
    %cst = arith.constant 5.65685415 : f32
    %1 = vector.broadcast %cst : f32 to vector<14x32xf32>
    %2 = arith.mulf %0, %1 : vector<14x32xf32>
    %c0_1 = arith.constant 0 : index
    %c0_2 = arith.constant 0 : index
    %3 = vector.load %arg2[%c0_1, %c0_2] : memref<14x32xf32, #tpu.memory_space<vmem>>, vector<14x32xf32>
    %4 = arith.addf %2, %3 : vector<14x32xf32>
    %c0_3 = arith.constant 0 : index
    %c0_4 = arith.constant 0 : index
    %5 = vector.load %arg1[%c0_3, %c0_4] : memref<16x32xf32, #tpu.memory_space<vmem>>, vector<16x32xf32>
    %c0_5 = arith.constant 0 : index
    %c0_6 = arith.constant 0 : index
    %6 = vector.load %arg3[%c0_5, %c0_6] : memref<14x14xf32, #tpu.memory_space<vmem>>, vector<14x14xf32>
    %c0_7 = arith.constant 0 : index
    %c0_8 = arith.constant 0 : index
    %7 = vector.load %arg4[%c0_7, %c0_8] : memref<14x16xf32, #tpu.memory_space<vmem>>, vector<14x16xf32>
    %c0_9 = arith.constant 0 : index
    %c0_10 = arith.constant 0 : index
    %c0_11 = arith.constant 0 : index
    %8 = vector.load %arg19[%c0_9, %c0_10, %c0_11] : memref<6x1x32xf32, #tpu.memory_space<vmem>>, vector<1x1x32xf32>
    %9 = vector.shape_cast %8 : vector<1x1x32xf32> to vector<1x32xf32>
    %c0_12 = arith.constant 0 : index
    %c0_13 = arith.constant 0 : index
    %c0_14 = arith.constant 0 : index
    %10 = vector.load %arg20[%c0_12, %c0_13, %c0_14] : memref<6x1x32xf32, #tpu.memory_space<vmem>>, vector<1x1x32xf32>
    %11 = vector.shape_cast %10 : vector<1x1x32xf32> to vector<1x32xf32>
    %cst_15 = arith.constant dense<0.000000e+00> : vector<14xf32>
    %12 = vector.multi_reduction <add>, %4, %cst_15 [1] : vector<14x32xf32> to vector<14xf32>
    %13 = vector.shape_cast %12 : vector<14xf32> to vector<14x1xf32>
    %cst_16 = arith.constant 3.200000e+01 : f32
    %14 = vector.broadcast %cst_16 : f32 to vector<14x1xf32>
    %15 = arith.divf %13, %14 : vector<14x1xf32>
    %16 = vector.broadcast %15 : vector<14x1xf32> to vector<14x32xf32>
    %17 = arith.subf %4, %16 : vector<14x32xf32>
    %18 = arith.mulf %17, %17 : vector<14x32xf32>
    %cst_17 = arith.constant dense<0.000000e+00> : vector<14xf32>
    %19 = vector.multi_reduction <add>, %18, %cst_17 [1] : vector<14x32xf32> to vector<14xf32>
    %20 = vector.shape_cast %19 : vector<14xf32> to vector<14x1xf32>
    %cst_18 = arith.constant 0.0322580636 : f32
    %21 = vector.broadcast %cst_18 : f32 to vector<14x1xf32>
    %22 = arith.mulf %20, %21 : vector<14x1xf32>
    %23 = vector.broadcast %9 : vector<1x32xf32> to vector<14x32xf32>
    %24 = arith.mulf %23, %17 : vector<14x32xf32>
    %25 = math.sqrt %22 : vector<14x1xf32>
    %cst_19 = arith.constant 9.99999997E-7 : f32
    %26 = vector.broadcast %cst_19 : f32 to vector<14x1xf32>
    %27 = arith.addf %25, %26 : vector<14x1xf32>
    %28 = vector.broadcast %27 : vector<14x1xf32> to vector<14x32xf32>
    %29 = arith.divf %24, %28 : vector<14x32xf32>
    %30 = vector.broadcast %11 : vector<1x32xf32> to vector<14x32xf32>
    %31 = arith.addf %29, %30 : vector<14x32xf32>
    %c0_20 = arith.constant 0 : index
    %c0_21 = arith.constant 0 : index
    %c0_22 = arith.constant 0 : index
    %32 = vector.load %arg5[%c0_20, %c0_21, %c0_22] : memref<2x32x96xf32, #tpu.memory_space<vmem>>, vector<1x32x96xf32>
    %33 = vector.shape_cast %32 : vector<1x32x96xf32> to vector<32x96xf32>
    %cst_23 = arith.constant dense<0.000000e+00> : vector<14x96xf32>
    %34 = tpu.matmul %31, %33, %cst_23 {dimension_numbers = #tpu.dot_dimension_numbers<[1], [0], [0], [1], [0, 0, 1, 1], [], []>} : vector<14x32xf32>, vector<32x96xf32>, vector<14x96xf32> -> vector<14x96xf32>
    %c0_24 = arith.constant 0 : index
    %c0_25 = arith.constant 0 : index
    %c0_26 = arith.constant 0 : index
    %35 = vector.load %arg6[%c0_24, %c0_25, %c0_26] : memref<2x1x96xf32, #tpu.memory_space<vmem>>, vector<1x1x96xf32>
    %36 = vector.shape_cast %35 : vector<1x1x96xf32> to vector<1x96xf32>
    %37 = vector.broadcast %36 : vector<1x96xf32> to vector<14x96xf32>
    %38 = arith.addf %34, %37 : vector<14x96xf32>
    %39 = vector.extract_strided_slice %38 {offsets = [0, 0], sizes = [14, 32], strides = [1, 1]} : vector<14x96xf32> to vector<14x32xf32>
    %40 = vector.extract_strided_slice %38 {offsets = [0, 32], sizes = [14, 32], strides = [1, 1]} : vector<14x96xf32> to vector<14x32xf32>
    %41 = vector.extract_strided_slice %38 {offsets = [0, 64], sizes = [14, 32], strides = [1, 1]} : vector<14x96xf32> to vector<14x32xf32>
    %c0_27 = arith.constant 0 : index
    %c0_28 = arith.constant 0 : index
    %c0_29 = arith.constant 0 : index
    %42 = vector.load %arg7[%c0_27, %c0_28, %c0_29] : memref<2x32x32xf32, #tpu.memory_space<vmem>>, vector<1x32x32xf32>
    %43 = vector.shape_cast %42 : vector<1x32x32xf32> to vector<32x32xf32>
    %c0_30 = arith.constant 0 : index
    %c0_31 = arith.constant 0 : index
    %c0_32 = arith.constant 0 : index
    %44 = vector.load %arg8[%c0_30, %c0_31, %c0_32] : memref<2x1x32xf32, #tpu.memory_space<vmem>>, vector<1x1x32xf32>
    %45 = vector.shape_cast %44 : vector<1x1x32xf32> to vector<1x32xf32>
    %46 = vector.extract_strided_slice %39 {offsets = [0, 0], sizes = [14, 8], strides = [1, 1]} : vector<14x32xf32> to vector<14x8xf32>
    %47 = vector.extract_strided_slice %40 {offsets = [0, 0], sizes = [14, 8], strides = [1, 1]} : vector<14x32xf32> to vector<14x8xf32>
    %48 = vector.extract_strided_slice %41 {offsets = [0, 0], sizes = [14, 8], strides = [1, 1]} : vector<14x32xf32> to vector<14x8xf32>
    %cst_33 = arith.constant dense<0.000000e+00> : vector<14x14xf32>
    %49 = tpu.matmul %46, %47, %cst_33 {dimension_numbers = #tpu.dot_dimension_numbers<[1], [1], [0], [0], [0, 0, 1, 0], [], []>} : vector<14x8xf32>, vector<14x8xf32>, vector<14x14xf32> -> vector<14x14xf32>
    %cst_34 = arith.constant 0.353553385 : f32
    %50 = vector.broadcast %cst_34 : f32 to vector<14x14xf32>
    %51 = arith.mulf %49, %50 : vector<14x14xf32>
    %52 = arith.addf %51, %6 : vector<14x14xf32>
    %cst_35 = arith.constant dense<0xFF800000> : vector<14xf32>
    %53 = vector.multi_reduction <maximumf>, %52, %cst_35 [1] : vector<14x14xf32> to vector<14xf32>
    %54 = vector.shape_cast %53 : vector<14xf32> to vector<14x1xf32>
    %55 = vector.broadcast %54 : vector<14x1xf32> to vector<14x14xf32>
    %56 = arith.subf %52, %55 : vector<14x14xf32>
    %57 = math.exp %56 : vector<14x14xf32>
    %cst_36 = arith.constant dense<0.000000e+00> : vector<14xf32>
    %58 = vector.multi_reduction <add>, %57, %cst_36 [1] : vector<14x14xf32> to vector<14xf32>
    %59 = vector.shape_cast %58 : vector<14xf32> to vector<14x1xf32>
    %60 = tpu.reciprocal %59 {approx = true} : vector<14x1xf32> -> vector<14x1xf32>
    %61 = vector.broadcast %60 : vector<14x1xf32> to vector<14x14xf32>
    %62 = arith.mulf %57, %61 : vector<14x14xf32>
    %cst_37 = arith.constant dense<0.000000e+00> : vector<14x8xf32>
    %63 = tpu.matmul %62, %48, %cst_37 {dimension_numbers = #tpu.dot_dimension_numbers<[1], [0], [0], [1], [0, 0, 1, 1], [], []>} : vector<14x14xf32>, vector<14x8xf32>, vector<14x8xf32> -> vector<14x8xf32>
    %64 = vector.extract_strided_slice %39 {offsets = [0, 8], sizes = [14, 8], strides = [1, 1]} : vector<14x32xf32> to vector<14x8xf32>
    %65 = vector.extract_strided_slice %40 {offsets = [0, 8], sizes = [14, 8], strides = [1, 1]} : vector<14x32xf32> to vector<14x8xf32>
    %66 = vector.extract_strided_slice %41 {offsets = [0, 8], sizes = [14, 8], strides = [1, 1]} : vector<14x32xf32> to vector<14x8xf32>
    %cst_38 = arith.constant dense<0.000000e+00> : vector<14x14xf32>
    %67 = tpu.matmul %64, %65, %cst_38 {dimension_numbers = #tpu.dot_dimension_numbers<[1], [1], [0], [0], [0, 0, 1, 0], [], []>} : vector<14x8xf32>, vector<14x8xf32>, vector<14x14xf32> -> vector<14x14xf32>
    %cst_39 = arith.constant 0.353553385 : f32
    %68 = vector.broadcast %cst_39 : f32 to vector<14x14xf32>
    %69 = arith.mulf %67, %68 : vector<14x14xf32>
    %70 = arith.addf %69, %6 : vector<14x14xf32>
    %cst_40 = arith.constant dense<0xFF800000> : vector<14xf32>
    %71 = vector.multi_reduction <maximumf>, %70, %cst_40 [1] : vector<14x14xf32> to vector<14xf32>
    %72 = vector.shape_cast %71 : vector<14xf32> to vector<14x1xf32>
    %73 = vector.broadcast %72 : vector<14x1xf32> to vector<14x14xf32>
    %74 = arith.subf %70, %73 : vector<14x14xf32>
    %75 = math.exp %74 : vector<14x14xf32>
    %cst_41 = arith.constant dense<0.000000e+00> : vector<14xf32>
    %76 = vector.multi_reduction <add>, %75, %cst_41 [1] : vector<14x14xf32> to vector<14xf32>
    %77 = vector.shape_cast %76 : vector<14xf32> to vector<14x1xf32>
    %78 = tpu.reciprocal %77 {approx = true} : vector<14x1xf32> -> vector<14x1xf32>
    %79 = vector.broadcast %78 : vector<14x1xf32> to vector<14x14xf32>
    %80 = arith.mulf %75, %79 : vector<14x14xf32>
    %cst_42 = arith.constant dense<0.000000e+00> : vector<14x8xf32>
    %81 = tpu.matmul %80, %66, %cst_42 {dimension_numbers = #tpu.dot_dimension_numbers<[1], [0], [0], [1], [0, 0, 1, 1], [], []>} : vector<14x14xf32>, vector<14x8xf32>, vector<14x8xf32> -> vector<14x8xf32>
    %82 = vector.extract_strided_slice %39 {offsets = [0, 16], sizes = [14, 8], strides = [1, 1]} : vector<14x32xf32> to vector<14x8xf32>
    %83 = vector.extract_strided_slice %40 {offsets = [0, 16], sizes = [14, 8], strides = [1, 1]} : vector<14x32xf32> to vector<14x8xf32>
    %84 = vector.extract_strided_slice %41 {offsets = [0, 16], sizes = [14, 8], strides = [1, 1]} : vector<14x32xf32> to vector<14x8xf32>
    %cst_43 = arith.constant dense<0.000000e+00> : vector<14x14xf32>
    %85 = tpu.matmul %82, %83, %cst_43 {dimension_numbers = #tpu.dot_dimension_numbers<[1], [1], [0], [0], [0, 0, 1, 0], [], []>} : vector<14x8xf32>, vector<14x8xf32>, vector<14x14xf32> -> vector<14x14xf32>
    %cst_44 = arith.constant 0.353553385 : f32
    %86 = vector.broadcast %cst_44 : f32 to vector<14x14xf32>
    %87 = arith.mulf %85, %86 : vector<14x14xf32>
    %88 = arith.addf %87, %6 : vector<14x14xf32>
    %cst_45 = arith.constant dense<0xFF800000> : vector<14xf32>
    %89 = vector.multi_reduction <maximumf>, %88, %cst_45 [1] : vector<14x14xf32> to vector<14xf32>
    %90 = vector.shape_cast %89 : vector<14xf32> to vector<14x1xf32>
    %91 = vector.broadcast %90 : vector<14x1xf32> to vector<14x14xf32>
    %92 = arith.subf %88, %91 : vector<14x14xf32>
    %93 = math.exp %92 : vector<14x14xf32>
    %cst_46 = arith.constant dense<0.000000e+00> : vector<14xf32>
    %94 = vector.multi_reduction <add>, %93, %cst_46 [1] : vector<14x14xf32> to vector<14xf32>
    %95 = vector.shape_cast %94 : vector<14xf32> to vector<14x1xf32>
    %96 = tpu.reciprocal %95 {approx = true} : vector<14x1xf32> -> vector<14x1xf32>
    %97 = vector.broadcast %96 : vector<14x1xf32> to vector<14x14xf32>
    %98 = arith.mulf %93, %97 : vector<14x14xf32>
    %cst_47 = arith.constant dense<0.000000e+00> : vector<14x8xf32>
    %99 = tpu.matmul %98, %84, %cst_47 {dimension_numbers = #tpu.dot_dimension_numbers<[1], [0], [0], [1], [0, 0, 1, 1], [], []>} : vector<14x14xf32>, vector<14x8xf32>, vector<14x8xf32> -> vector<14x8xf32>
    %100 = vector.extract_strided_slice %39 {offsets = [0, 24], sizes = [14, 8], strides = [1, 1]} : vector<14x32xf32> to vector<14x8xf32>
    %101 = vector.extract_strided_slice %40 {offsets = [0, 24], sizes = [14, 8], strides = [1, 1]} : vector<14x32xf32> to vector<14x8xf32>
    %102 = vector.extract_strided_slice %41 {offsets = [0, 24], sizes = [14, 8], strides = [1, 1]} : vector<14x32xf32> to vector<14x8xf32>
    %cst_48 = arith.constant dense<0.000000e+00> : vector<14x14xf32>
    %103 = tpu.matmul %100, %101, %cst_48 {dimension_numbers = #tpu.dot_dimension_numbers<[1], [1], [0], [0], [0, 0, 1, 0], [], []>} : vector<14x8xf32>, vector<14x8xf32>, vector<14x14xf32> -> vector<14x14xf32>
    %cst_49 = arith.constant 0.353553385 : f32
    %104 = vector.broadcast %cst_49 : f32 to vector<14x14xf32>
    %105 = arith.mulf %103, %104 : vector<14x14xf32>
    %106 = arith.addf %105, %6 : vector<14x14xf32>
    %cst_50 = arith.constant dense<0xFF800000> : vector<14xf32>
    %107 = vector.multi_reduction <maximumf>, %106, %cst_50 [1] : vector<14x14xf32> to vector<14xf32>
    %108 = vector.shape_cast %107 : vector<14xf32> to vector<14x1xf32>
    %109 = vector.broadcast %108 : vector<14x1xf32> to vector<14x14xf32>
    %110 = arith.subf %106, %109 : vector<14x14xf32>
    %111 = math.exp %110 : vector<14x14xf32>
    %cst_51 = arith.constant dense<0.000000e+00> : vector<14xf32>
    %112 = vector.multi_reduction <add>, %111, %cst_51 [1] : vector<14x14xf32> to vector<14xf32>
    %113 = vector.shape_cast %112 : vector<14xf32> to vector<14x1xf32>
    %114 = tpu.reciprocal %113 {approx = true} : vector<14x1xf32> -> vector<14x1xf32>
    %115 = vector.broadcast %114 : vector<14x1xf32> to vector<14x14xf32>
    %116 = arith.mulf %111, %115 : vector<14x14xf32>
    %cst_52 = arith.constant dense<0.000000e+00> : vector<14x8xf32>
    %117 = tpu.matmul %116, %102, %cst_52 {dimension_numbers = #tpu.dot_dimension_numbers<[1], [0], [0], [1], [0, 0, 1, 1], [], []>} : vector<14x14xf32>, vector<14x8xf32>, vector<14x8xf32> -> vector<14x8xf32>
    %118 = tpu.concatenate %63, %81, %99, %117 in 1 : vector<14x8xf32>, vector<14x8xf32>, vector<14x8xf32>, vector<14x8xf32> -> vector<14x32xf32>
    %cst_53 = arith.constant dense<0.000000e+00> : vector<14x32xf32>
    %119 = tpu.matmul %118, %43, %cst_53 {dimension_numbers = #tpu.dot_dimension_numbers<[1], [0], [0], [1], [0, 0, 1, 1], [], []>} : vector<14x32xf32>, vector<32x32xf32>, vector<14x32xf32> -> vector<14x32xf32>
    %120 = vector.broadcast %45 : vector<1x32xf32> to vector<14x32xf32>
    %121 = arith.addf %119, %120 : vector<14x32xf32>
    %122 = arith.addf %4, %121 : vector<14x32xf32>
    %c1 = arith.constant 1 : index
    %c0_54 = arith.constant 0 : index
    %c0_55 = arith.constant 0 : index
    %123 = vector.load %arg19[%c1, %c0_54, %c0_55] : memref<6x1x32xf32, #tpu.memory_space<vmem>>, vector<1x1x32xf32>
    %124 = vector.shape_cast %123 : vector<1x1x32xf32> to vector<1x32xf32>
    %c1_56 = arith.constant 1 : index
    %c0_57 = arith.constant 0 : index
    %c0_58 = arith.constant 0 : index
    %125 = vector.load %arg20[%c1_56, %c0_57, %c0_58] : memref<6x1x32xf32, #tpu.memory_space<vmem>>, vector<1x1x32xf32>
    %126 = vector.shape_cast %125 : vector<1x1x32xf32> to vector<1x32xf32>
    %cst_59 = arith.constant dense<0.000000e+00> : vector<14xf32>
    %127 = vector.multi_reduction <add>, %122, %cst_59 [1] : vector<14x32xf32> to vector<14xf32>
    %128 = vector.shape_cast %127 : vector<14xf32> to vector<14x1xf32>
    %cst_60 = arith.constant 3.200000e+01 : f32
    %129 = vector.broadcast %cst_60 : f32 to vector<14x1xf32>
    %130 = arith.divf %128, %129 : vector<14x1xf32>
    %131 = vector.broadcast %130 : vector<14x1xf32> to vector<14x32xf32>
    %132 = arith.subf %122, %131 : vector<14x32xf32>
    %133 = arith.mulf %132, %132 : vector<14x32xf32>
    %cst_61 = arith.constant dense<0.000000e+00> : vector<14xf32>
    %134 = vector.multi_reduction <add>, %133, %cst_61 [1] : vector<14x32xf32> to vector<14xf32>
    %135 = vector.shape_cast %134 : vector<14xf32> to vector<14x1xf32>
    %cst_62 = arith.constant 0.0322580636 : f32
    %136 = vector.broadcast %cst_62 : f32 to vector<14x1xf32>
    %137 = arith.mulf %135, %136 : vector<14x1xf32>
    %138 = vector.broadcast %124 : vector<1x32xf32> to vector<14x32xf32>
    %139 = arith.mulf %138, %132 : vector<14x32xf32>
    %140 = math.sqrt %137 : vector<14x1xf32>
    %cst_63 = arith.constant 9.99999997E-7 : f32
    %141 = vector.broadcast %cst_63 : f32 to vector<14x1xf32>
    %142 = arith.addf %140, %141 : vector<14x1xf32>
    %143 = vector.broadcast %142 : vector<14x1xf32> to vector<14x32xf32>
    %144 = arith.divf %139, %143 : vector<14x32xf32>
    %145 = vector.broadcast %126 : vector<1x32xf32> to vector<14x32xf32>
    %146 = arith.addf %144, %145 : vector<14x32xf32>
    %c0_64 = arith.constant 0 : index
    %c0_65 = arith.constant 0 : index
    %c0_66 = arith.constant 0 : index
    %147 = vector.load %arg9[%c0_64, %c0_65, %c0_66] : memref<2x32x32xf32, #tpu.memory_space<vmem>>, vector<1x32x32xf32>
    %148 = vector.shape_cast %147 : vector<1x32x32xf32> to vector<32x32xf32>
    %cst_67 = arith.constant dense<0.000000e+00> : vector<14x32xf32>
    %149 = tpu.matmul %146, %148, %cst_67 {dimension_numbers = #tpu.dot_dimension_numbers<[1], [0], [0], [1], [0, 0, 1, 1], [], []>} : vector<14x32xf32>, vector<32x32xf32>, vector<14x32xf32> -> vector<14x32xf32>
    %c0_68 = arith.constant 0 : index
    %c0_69 = arith.constant 0 : index
    %c0_70 = arith.constant 0 : index
    %150 = vector.load %arg10[%c0_68, %c0_69, %c0_70] : memref<2x1x32xf32, #tpu.memory_space<vmem>>, vector<1x1x32xf32>
    %151 = vector.shape_cast %150 : vector<1x1x32xf32> to vector<1x32xf32>
    %152 = vector.broadcast %151 : vector<1x32xf32> to vector<14x32xf32>
    %153 = arith.addf %149, %152 : vector<14x32xf32>
    %c0_71 = arith.constant 0 : index
    %c0_72 = arith.constant 0 : index
    %c0_73 = arith.constant 0 : index
    %154 = vector.load %arg11[%c0_71, %c0_72, %c0_73] : memref<2x32x64xf32, #tpu.memory_space<vmem>>, vector<1x32x64xf32>
    %155 = vector.shape_cast %154 : vector<1x32x64xf32> to vector<32x64xf32>
    %cst_74 = arith.constant dense<0.000000e+00> : vector<16x64xf32>
    %156 = tpu.matmul %5, %155, %cst_74 {dimension_numbers = #tpu.dot_dimension_numbers<[1], [0], [0], [1], [0, 0, 1, 1], [], []>} : vector<16x32xf32>, vector<32x64xf32>, vector<16x64xf32> -> vector<16x64xf32>
    %c0_75 = arith.constant 0 : index
    %c0_76 = arith.constant 0 : index
    %c0_77 = arith.constant 0 : index
    %157 = vector.load %arg12[%c0_75, %c0_76, %c0_77] : memref<2x1x64xf32, #tpu.memory_space<vmem>>, vector<1x1x64xf32>
    %158 = vector.shape_cast %157 : vector<1x1x64xf32> to vector<1x64xf32>
    %159 = vector.broadcast %158 : vector<1x64xf32> to vector<16x64xf32>
    %160 = arith.addf %156, %159 : vector<16x64xf32>
    %161 = vector.extract_strided_slice %160 {offsets = [0, 0], sizes = [16, 32], strides = [1, 1]} : vector<16x64xf32> to vector<16x32xf32>
    %162 = vector.extract_strided_slice %160 {offsets = [0, 32], sizes = [16, 32], strides = [1, 1]} : vector<16x64xf32> to vector<16x32xf32>
    %c0_78 = arith.constant 0 : index
    %c0_79 = arith.constant 0 : index
    %c0_80 = arith.constant 0 : index
    %163 = vector.load %arg13[%c0_78, %c0_79, %c0_80] : memref<2x32x32xf32, #tpu.memory_space<vmem>>, vector<1x32x32xf32>
    %164 = vector.shape_cast %163 : vector<1x32x32xf32> to vector<32x32xf32>
    %c0_81 = arith.constant 0 : index
    %c0_82 = arith.constant 0 : index
    %c0_83 = arith.constant 0 : index
    %165 = vector.load %arg14[%c0_81, %c0_82, %c0_83] : memref<2x1x32xf32, #tpu.memory_space<vmem>>, vector<1x1x32xf32>
    %166 = vector.shape_cast %165 : vector<1x1x32xf32> to vector<1x32xf32>
    %167 = vector.extract_strided_slice %153 {offsets = [0, 0], sizes = [14, 8], strides = [1, 1]} : vector<14x32xf32> to vector<14x8xf32>
    %168 = vector.extract_strided_slice %161 {offsets = [0, 0], sizes = [16, 8], strides = [1, 1]} : vector<16x32xf32> to vector<16x8xf32>
    %169 = vector.extract_strided_slice %162 {offsets = [0, 0], sizes = [16, 8], strides = [1, 1]} : vector<16x32xf32> to vector<16x8xf32>
    %cst_84 = arith.constant dense<0.000000e+00> : vector<14x16xf32>
    %170 = tpu.matmul %167, %168, %cst_84 {dimension_numbers = #tpu.dot_dimension_numbers<[1], [1], [0], [0], [0, 0, 1, 0], [], []>} : vector<14x8xf32>, vector<16x8xf32>, vector<14x16xf32> -> vector<14x16xf32>
    %cst_85 = arith.constant 0.353553385 : f32
    %171 = vector.broadcast %cst_85 : f32 to vector<14x16xf32>
    %172 = arith.mulf %170, %171 : vector<14x16xf32>
    %173 = arith.addf %172, %7 : vector<14x16xf32>
    %cst_86 = arith.constant dense<0xFF800000> : vector<14xf32>
    %174 = vector.multi_reduction <maximumf>, %173, %cst_86 [1] : vector<14x16xf32> to vector<14xf32>
    %175 = vector.shape_cast %174 : vector<14xf32> to vector<14x1xf32>
    %176 = vector.broadcast %175 : vector<14x1xf32> to vector<14x16xf32>
    %177 = arith.subf %173, %176 : vector<14x16xf32>
    %178 = math.exp %177 : vector<14x16xf32>
    %cst_87 = arith.constant dense<0.000000e+00> : vector<14xf32>
    %179 = vector.multi_reduction <add>, %178, %cst_87 [1] : vector<14x16xf32> to vector<14xf32>
    %180 = vector.shape_cast %179 : vector<14xf32> to vector<14x1xf32>
    %181 = tpu.reciprocal %180 {approx = true} : vector<14x1xf32> -> vector<14x1xf32>
    %182 = vector.broadcast %181 : vector<14x1xf32> to vector<14x16xf32>
    %183 = arith.mulf %178, %182 : vector<14x16xf32>
    %cst_88 = arith.constant dense<0.000000e+00> : vector<14x8xf32>
    %184 = tpu.matmul %183, %169, %cst_88 {dimension_numbers = #tpu.dot_dimension_numbers<[1], [0], [0], [1], [0, 0, 1, 1], [], []>} : vector<14x16xf32>, vector<16x8xf32>, vector<14x8xf32> -> vector<14x8xf32>
    %185 = vector.extract_strided_slice %153 {offsets = [0, 8], sizes = [14, 8], strides = [1, 1]} : vector<14x32xf32> to vector<14x8xf32>
    %186 = vector.extract_strided_slice %161 {offsets = [0, 8], sizes = [16, 8], strides = [1, 1]} : vector<16x32xf32> to vector<16x8xf32>
    %187 = vector.extract_strided_slice %162 {offsets = [0, 8], sizes = [16, 8], strides = [1, 1]} : vector<16x32xf32> to vector<16x8xf32>
    %cst_89 = arith.constant dense<0.000000e+00> : vector<14x16xf32>
    %188 = tpu.matmul %185, %186, %cst_89 {dimension_numbers = #tpu.dot_dimension_numbers<[1], [1], [0], [0], [0, 0, 1, 0], [], []>} : vector<14x8xf32>, vector<16x8xf32>, vector<14x16xf32> -> vector<14x16xf32>
    %cst_90 = arith.constant 0.353553385 : f32
    %189 = vector.broadcast %cst_90 : f32 to vector<14x16xf32>
    %190 = arith.mulf %188, %189 : vector<14x16xf32>
    %191 = arith.addf %190, %7 : vector<14x16xf32>
    %cst_91 = arith.constant dense<0xFF800000> : vector<14xf32>
    %192 = vector.multi_reduction <maximumf>, %191, %cst_91 [1] : vector<14x16xf32> to vector<14xf32>
    %193 = vector.shape_cast %192 : vector<14xf32> to vector<14x1xf32>
    %194 = vector.broadcast %193 : vector<14x1xf32> to vector<14x16xf32>
    %195 = arith.subf %191, %194 : vector<14x16xf32>
    %196 = math.exp %195 : vector<14x16xf32>
    %cst_92 = arith.constant dense<0.000000e+00> : vector<14xf32>
    %197 = vector.multi_reduction <add>, %196, %cst_92 [1] : vector<14x16xf32> to vector<14xf32>
    %198 = vector.shape_cast %197 : vector<14xf32> to vector<14x1xf32>
    %199 = tpu.reciprocal %198 {approx = true} : vector<14x1xf32> -> vector<14x1xf32>
    %200 = vector.broadcast %199 : vector<14x1xf32> to vector<14x16xf32>
    %201 = arith.mulf %196, %200 : vector<14x16xf32>
    %cst_93 = arith.constant dense<0.000000e+00> : vector<14x8xf32>
    %202 = tpu.matmul %201, %187, %cst_93 {dimension_numbers = #tpu.dot_dimension_numbers<[1], [0], [0], [1], [0, 0, 1, 1], [], []>} : vector<14x16xf32>, vector<16x8xf32>, vector<14x8xf32> -> vector<14x8xf32>
    %203 = vector.extract_strided_slice %153 {offsets = [0, 16], sizes = [14, 8], strides = [1, 1]} : vector<14x32xf32> to vector<14x8xf32>
    %204 = vector.extract_strided_slice %161 {offsets = [0, 16], sizes = [16, 8], strides = [1, 1]} : vector<16x32xf32> to vector<16x8xf32>
    %205 = vector.extract_strided_slice %162 {offsets = [0, 16], sizes = [16, 8], strides = [1, 1]} : vector<16x32xf32> to vector<16x8xf32>
    %cst_94 = arith.constant dense<0.000000e+00> : vector<14x16xf32>
    %206 = tpu.matmul %203, %204, %cst_94 {dimension_numbers = #tpu.dot_dimension_numbers<[1], [1], [0], [0], [0, 0, 1, 0], [], []>} : vector<14x8xf32>, vector<16x8xf32>, vector<14x16xf32> -> vector<14x16xf32>
    %cst_95 = arith.constant 0.353553385 : f32
    %207 = vector.broadcast %cst_95 : f32 to vector<14x16xf32>
    %208 = arith.mulf %206, %207 : vector<14x16xf32>
    %209 = arith.addf %208, %7 : vector<14x16xf32>
    %cst_96 = arith.constant dense<0xFF800000> : vector<14xf32>
    %210 = vector.multi_reduction <maximumf>, %209, %cst_96 [1] : vector<14x16xf32> to vector<14xf32>
    %211 = vector.shape_cast %210 : vector<14xf32> to vector<14x1xf32>
    %212 = vector.broadcast %211 : vector<14x1xf32> to vector<14x16xf32>
    %213 = arith.subf %209, %212 : vector<14x16xf32>
    %214 = math.exp %213 : vector<14x16xf32>
    %cst_97 = arith.constant dense<0.000000e+00> : vector<14xf32>
    %215 = vector.multi_reduction <add>, %214, %cst_97 [1] : vector<14x16xf32> to vector<14xf32>
    %216 = vector.shape_cast %215 : vector<14xf32> to vector<14x1xf32>
    %217 = tpu.reciprocal %216 {approx = true} : vector<14x1xf32> -> vector<14x1xf32>
    %218 = vector.broadcast %217 : vector<14x1xf32> to vector<14x16xf32>
    %219 = arith.mulf %214, %218 : vector<14x16xf32>
    %cst_98 = arith.constant dense<0.000000e+00> : vector<14x8xf32>
    %220 = tpu.matmul %219, %205, %cst_98 {dimension_numbers = #tpu.dot_dimension_numbers<[1], [0], [0], [1], [0, 0, 1, 1], [], []>} : vector<14x16xf32>, vector<16x8xf32>, vector<14x8xf32> -> vector<14x8xf32>
    %221 = vector.extract_strided_slice %153 {offsets = [0, 24], sizes = [14, 8], strides = [1, 1]} : vector<14x32xf32> to vector<14x8xf32>
    %222 = vector.extract_strided_slice %161 {offsets = [0, 24], sizes = [16, 8], strides = [1, 1]} : vector<16x32xf32> to vector<16x8xf32>
    %223 = vector.extract_strided_slice %162 {offsets = [0, 24], sizes = [16, 8], strides = [1, 1]} : vector<16x32xf32> to vector<16x8xf32>
    %cst_99 = arith.constant dense<0.000000e+00> : vector<14x16xf32>
    %224 = tpu.matmul %221, %222, %cst_99 {dimension_numbers = #tpu.dot_dimension_numbers<[1], [1], [0], [0], [0, 0, 1, 0], [], []>} : vector<14x8xf32>, vector<16x8xf32>, vector<14x16xf32> -> vector<14x16xf32>
    %cst_100 = arith.constant 0.353553385 : f32
    %225 = vector.broadcast %cst_100 : f32 to vector<14x16xf32>
    %226 = arith.mulf %224, %225 : vector<14x16xf32>
    %227 = arith.addf %226, %7 : vector<14x16xf32>
    %cst_101 = arith.constant dense<0xFF800000> : vector<14xf32>
    %228 = vector.multi_reduction <maximumf>, %227, %cst_101 [1] : vector<14x16xf32> to vector<14xf32>
    %229 = vector.shape_cast %228 : vector<14xf32> to vector<14x1xf32>
    %230 = vector.broadcast %229 : vector<14x1xf32> to vector<14x16xf32>
    %231 = arith.subf %227, %230 : vector<14x16xf32>
    %232 = math.exp %231 : vector<14x16xf32>
    %cst_102 = arith.constant dense<0.000000e+00> : vector<14xf32>
    %233 = vector.multi_reduction <add>, %232, %cst_102 [1] : vector<14x16xf32> to vector<14xf32>
    %234 = vector.shape_cast %233 : vector<14xf32> to vector<14x1xf32>
    %235 = tpu.reciprocal %234 {approx = true} : vector<14x1xf32> -> vector<14x1xf32>
    %236 = vector.broadcast %235 : vector<14x1xf32> to vector<14x16xf32>
    %237 = arith.mulf %232, %236 : vector<14x16xf32>
    %cst_103 = arith.constant dense<0.000000e+00> : vector<14x8xf32>
    %238 = tpu.matmul %237, %223, %cst_103 {dimension_numbers = #tpu.dot_dimension_numbers<[1], [0], [0], [1], [0, 0, 1, 1], [], []>} : vector<14x16xf32>, vector<16x8xf32>, vector<14x8xf32> -> vector<14x8xf32>
    %239 = tpu.concatenate %184, %202, %220, %238 in 1 : vector<14x8xf32>, vector<14x8xf32>, vector<14x8xf32>, vector<14x8xf32> -> vector<14x32xf32>
    %cst_104 = arith.constant dense<0.000000e+00> : vector<14x32xf32>
    %240 = tpu.matmul %239, %164, %cst_104 {dimension_numbers = #tpu.dot_dimension_numbers<[1], [0], [0], [1], [0, 0, 1, 1], [], []>} : vector<14x32xf32>, vector<32x32xf32>, vector<14x32xf32> -> vector<14x32xf32>
    %241 = vector.broadcast %166 : vector<1x32xf32> to vector<14x32xf32>
    %242 = arith.addf %240, %241 : vector<14x32xf32>
    %243 = arith.addf %122, %242 : vector<14x32xf32>
    %c2 = arith.constant 2 : index
    %c0_105 = arith.constant 0 : index
    %c0_106 = arith.constant 0 : index
    %244 = vector.load %arg19[%c2, %c0_105, %c0_106] : memref<6x1x32xf32, #tpu.memory_space<vmem>>, vector<1x1x32xf32>
    %245 = vector.shape_cast %244 : vector<1x1x32xf32> to vector<1x32xf32>
    %c2_107 = arith.constant 2 : index
    %c0_108 = arith.constant 0 : index
    %c0_109 = arith.constant 0 : index
    %246 = vector.load %arg20[%c2_107, %c0_108, %c0_109] : memref<6x1x32xf32, #tpu.memory_space<vmem>>, vector<1x1x32xf32>
    %247 = vector.shape_cast %246 : vector<1x1x32xf32> to vector<1x32xf32>
    %cst_110 = arith.constant dense<0.000000e+00> : vector<14xf32>
    %248 = vector.multi_reduction <add>, %243, %cst_110 [1] : vector<14x32xf32> to vector<14xf32>
    %249 = vector.shape_cast %248 : vector<14xf32> to vector<14x1xf32>
    %cst_111 = arith.constant 3.200000e+01 : f32
    %250 = vector.broadcast %cst_111 : f32 to vector<14x1xf32>
    %251 = arith.divf %249, %250 : vector<14x1xf32>
    %252 = vector.broadcast %251 : vector<14x1xf32> to vector<14x32xf32>
    %253 = arith.subf %243, %252 : vector<14x32xf32>
    %254 = arith.mulf %253, %253 : vector<14x32xf32>
    %cst_112 = arith.constant dense<0.000000e+00> : vector<14xf32>
    %255 = vector.multi_reduction <add>, %254, %cst_112 [1] : vector<14x32xf32> to vector<14xf32>
    %256 = vector.shape_cast %255 : vector<14xf32> to vector<14x1xf32>
    %cst_113 = arith.constant 0.0322580636 : f32
    %257 = vector.broadcast %cst_113 : f32 to vector<14x1xf32>
    %258 = arith.mulf %256, %257 : vector<14x1xf32>
    %259 = vector.broadcast %245 : vector<1x32xf32> to vector<14x32xf32>
    %260 = arith.mulf %259, %253 : vector<14x32xf32>
    %261 = math.sqrt %258 : vector<14x1xf32>
    %cst_114 = arith.constant 9.99999997E-7 : f32
    %262 = vector.broadcast %cst_114 : f32 to vector<14x1xf32>
    %263 = arith.addf %261, %262 : vector<14x1xf32>
    %264 = vector.broadcast %263 : vector<14x1xf32> to vector<14x32xf32>
    %265 = arith.divf %260, %264 : vector<14x32xf32>
    %266 = vector.broadcast %247 : vector<1x32xf32> to vector<14x32xf32>
    %267 = arith.addf %265, %266 : vector<14x32xf32>
    %c0_115 = arith.constant 0 : index
    %c0_116 = arith.constant 0 : index
    %c0_117 = arith.constant 0 : index
    %268 = vector.load %arg15[%c0_115, %c0_116, %c0_117] : memref<2x32x64xf32, #tpu.memory_space<vmem>>, vector<1x32x64xf32>
    %269 = vector.shape_cast %268 : vector<1x32x64xf32> to vector<32x64xf32>
    %cst_118 = arith.constant dense<0.000000e+00> : vector<14x64xf32>
    %270 = tpu.matmul %267, %269, %cst_118 {dimension_numbers = #tpu.dot_dimension_numbers<[1], [0], [0], [1], [0, 0, 1, 1], [], []>} : vector<14x32xf32>, vector<32x64xf32>, vector<14x64xf32> -> vector<14x64xf32>
    %c0_119 = arith.constant 0 : index
    %c0_120 = arith.constant 0 : index
    %c0_121 = arith.constant 0 : index
    %271 = vector.load %arg16[%c0_119, %c0_120, %c0_121] : memref<2x1x64xf32, #tpu.memory_space<vmem>>, vector<1x1x64xf32>
    %272 = vector.shape_cast %271 : vector<1x1x64xf32> to vector<1x64xf32>
    %273 = vector.broadcast %272 : vector<1x64xf32> to vector<14x64xf32>
    %274 = arith.addf %270, %273 : vector<14x64xf32>
    %cst_122 = arith.constant 0.000000e+00 : f32
    %275 = vector.broadcast %cst_122 : f32 to vector<14x64xf32>
    %276 = arith.maximumf %274, %275 : vector<14x64xf32>
    %c0_123 = arith.constant 0 : index
    %c0_124 = arith.constant 0 : index
    %c0_125 = arith.constant 0 : index
    %277 = vector.load %arg17[%c0_123, %c0_124, %c0_125] : memref<2x64x32xf32, #tpu.memory_space<vmem>>, vector<1x64x32xf32>
    %278 = vector.shape_cast %277 : vector<1x64x32xf32> to vector<64x32xf32>
    %cst_126 = arith.constant dense<0.000000e+00> : vector<14x32xf32>
    %279 = tpu.matmul %276, %278, %cst_126 {dimension_numbers = #tpu.dot_dimension_numbers<[1], [0], [0], [1], [0, 0, 1, 1], [], []>} : vector<14x64xf32>, vector<64x32xf32>, vector<14x32xf32> -> vector<14x32xf32>
    %280 = arith.addf %243, %279 : vector<14x32xf32>
    %c0_127 = arith.constant 0 : index
    %c0_128 = arith.constant 0 : index
    %c0_129 = arith.constant 0 : index
    %281 = vector.load %arg18[%c0_127, %c0_128, %c0_129] : memref<2x1x32xf32, #tpu.memory_space<vmem>>, vector<1x1x32xf32>
    %282 = vector.shape_cast %281 : vector<1x1x32xf32> to vector<1x32xf32>
    %283 = vector.broadcast %282 : vector<1x32xf32> to vector<14x32xf32>
    %284 = arith.addf %280, %283 : vector<14x32xf32>
    %c3 = arith.constant 3 : index
    %c0_130 = arith.constant 0 : index
    %c0_131 = arith.constant 0 : index
    %285 = vector.load %arg19[%c3, %c0_130, %c0_131] : memref<6x1x32xf32, #tpu.memory_space<vmem>>, vector<1x1x32xf32>
    %286 = vector.shape_cast %285 : vector<1x1x32xf32> to vector<1x32xf32>
    %c3_132 = arith.constant 3 : index
    %c0_133 = arith.constant 0 : index
    %c0_134 = arith.constant 0 : index
    %287 = vector.load %arg20[%c3_132, %c0_133, %c0_134] : memref<6x1x32xf32, #tpu.memory_space<vmem>>, vector<1x1x32xf32>
    %288 = vector.shape_cast %287 : vector<1x1x32xf32> to vector<1x32xf32>
    %cst_135 = arith.constant dense<0.000000e+00> : vector<14xf32>
    %289 = vector.multi_reduction <add>, %284, %cst_135 [1] : vector<14x32xf32> to vector<14xf32>
    %290 = vector.shape_cast %289 : vector<14xf32> to vector<14x1xf32>
    %cst_136 = arith.constant 3.200000e+01 : f32
    %291 = vector.broadcast %cst_136 : f32 to vector<14x1xf32>
    %292 = arith.divf %290, %291 : vector<14x1xf32>
    %293 = vector.broadcast %292 : vector<14x1xf32> to vector<14x32xf32>
    %294 = arith.subf %284, %293 : vector<14x32xf32>
    %295 = arith.mulf %294, %294 : vector<14x32xf32>
    %cst_137 = arith.constant dense<0.000000e+00> : vector<14xf32>
    %296 = vector.multi_reduction <add>, %295, %cst_137 [1] : vector<14x32xf32> to vector<14xf32>
    %297 = vector.shape_cast %296 : vector<14xf32> to vector<14x1xf32>
    %cst_138 = arith.constant 0.0322580636 : f32
    %298 = vector.broadcast %cst_138 : f32 to vector<14x1xf32>
    %299 = arith.mulf %297, %298 : vector<14x1xf32>
    %300 = vector.broadcast %286 : vector<1x32xf32> to vector<14x32xf32>
    %301 = arith.mulf %300, %294 : vector<14x32xf32>
    %302 = math.sqrt %299 : vector<14x1xf32>
    %cst_139 = arith.constant 9.99999997E-7 : f32
    %303 = vector.broadcast %cst_139 : f32 to vector<14x1xf32>
    %304 = arith.addf %302, %303 : vector<14x1xf32>
    %305 = vector.broadcast %304 : vector<14x1xf32> to vector<14x32xf32>
    %306 = arith.divf %301, %305 : vector<14x32xf32>
    %307 = vector.broadcast %288 : vector<1x32xf32> to vector<14x32xf32>
    %308 = arith.addf %306, %307 : vector<14x32xf32>
    %c1_140 = arith.constant 1 : index
    %c0_141 = arith.constant 0 : index
    %c0_142 = arith.constant 0 : index
    %309 = vector.load %arg5[%c1_140, %c0_141, %c0_142] : memref<2x32x96xf32, #tpu.memory_space<vmem>>, vector<1x32x96xf32>
    %310 = vector.shape_cast %309 : vector<1x32x96xf32> to vector<32x96xf32>
    %cst_143 = arith.constant dense<0.000000e+00> : vector<14x96xf32>
    %311 = tpu.matmul %308, %310, %cst_143 {dimension_numbers = #tpu.dot_dimension_numbers<[1], [0], [0], [1], [0, 0, 1, 1], [], []>} : vector<14x32xf32>, vector<32x96xf32>, vector<14x96xf32> -> vector<14x96xf32>
    %c1_144 = arith.constant 1 : index
    %c0_145 = arith.constant 0 : index
    %c0_146 = arith.constant 0 : index
    %312 = vector.load %arg6[%c1_144, %c0_145, %c0_146] : memref<2x1x96xf32, #tpu.memory_space<vmem>>, vector<1x1x96xf32>
    %313 = vector.shape_cast %312 : vector<1x1x96xf32> to vector<1x96xf32>
    %314 = vector.broadcast %313 : vector<1x96xf32> to vector<14x96xf32>
    %315 = arith.addf %311, %314 : vector<14x96xf32>
    %316 = vector.extract_strided_slice %315 {offsets = [0, 0], sizes = [14, 32], strides = [1, 1]} : vector<14x96xf32> to vector<14x32xf32>
    %317 = vector.extract_strided_slice %315 {offsets = [0, 32], sizes = [14, 32], strides = [1, 1]} : vector<14x96xf32> to vector<14x32xf32>
    %318 = vector.extract_strided_slice %315 {offsets = [0, 64], sizes = [14, 32], strides = [1, 1]} : vector<14x96xf32> to vector<14x32xf32>
    %c1_147 = arith.constant 1 : index
    %c0_148 = arith.constant 0 : index
    %c0_149 = arith.constant 0 : index
    %319 = vector.load %arg7[%c1_147, %c0_148, %c0_149] : memref<2x32x32xf32, #tpu.memory_space<vmem>>, vector<1x32x32xf32>
    %320 = vector.shape_cast %319 : vector<1x32x32xf32> to vector<32x32xf32>
    %c1_150 = arith.constant 1 : index
    %c0_151 = arith.constant 0 : index
    %c0_152 = arith.constant 0 : index
    %321 = vector.load %arg8[%c1_150, %c0_151, %c0_152] : memref<2x1x32xf32, #tpu.memory_space<vmem>>, vector<1x1x32xf32>
    %322 = vector.shape_cast %321 : vector<1x1x32xf32> to vector<1x32xf32>
    %323 = vector.extract_strided_slice %316 {offsets = [0, 0], sizes = [14, 8], strides = [1, 1]} : vector<14x32xf32> to vector<14x8xf32>
    %324 = vector.extract_strided_slice %317 {offsets = [0, 0], sizes = [14, 8], strides = [1, 1]} : vector<14x32xf32> to vector<14x8xf32>
    %325 = vector.extract_strided_slice %318 {offsets = [0, 0], sizes = [14, 8], strides = [1, 1]} : vector<14x32xf32> to vector<14x8xf32>
    %cst_153 = arith.constant dense<0.000000e+00> : vector<14x14xf32>
    %326 = tpu.matmul %323, %324, %cst_153 {dimension_numbers = #tpu.dot_dimension_numbers<[1], [1], [0], [0], [0, 0, 1, 0], [], []>} : vector<14x8xf32>, vector<14x8xf32>, vector<14x14xf32> -> vector<14x14xf32>
    %cst_154 = arith.constant 0.353553385 : f32
    %327 = vector.broadcast %cst_154 : f32 to vector<14x14xf32>
    %328 = arith.mulf %326, %327 : vector<14x14xf32>
    %329 = arith.addf %328, %6 : vector<14x14xf32>
    %cst_155 = arith.constant dense<0xFF800000> : vector<14xf32>
    %330 = vector.multi_reduction <maximumf>, %329, %cst_155 [1] : vector<14x14xf32> to vector<14xf32>
    %331 = vector.shape_cast %330 : vector<14xf32> to vector<14x1xf32>
    %332 = vector.broadcast %331 : vector<14x1xf32> to vector<14x14xf32>
    %333 = arith.subf %329, %332 : vector<14x14xf32>
    %334 = math.exp %333 : vector<14x14xf32>
    %cst_156 = arith.constant dense<0.000000e+00> : vector<14xf32>
    %335 = vector.multi_reduction <add>, %334, %cst_156 [1] : vector<14x14xf32> to vector<14xf32>
    %336 = vector.shape_cast %335 : vector<14xf32> to vector<14x1xf32>
    %337 = tpu.reciprocal %336 {approx = true} : vector<14x1xf32> -> vector<14x1xf32>
    %338 = vector.broadcast %337 : vector<14x1xf32> to vector<14x14xf32>
    %339 = arith.mulf %334, %338 : vector<14x14xf32>
    %cst_157 = arith.constant dense<0.000000e+00> : vector<14x8xf32>
    %340 = tpu.matmul %339, %325, %cst_157 {dimension_numbers = #tpu.dot_dimension_numbers<[1], [0], [0], [1], [0, 0, 1, 1], [], []>} : vector<14x14xf32>, vector<14x8xf32>, vector<14x8xf32> -> vector<14x8xf32>
    %341 = vector.extract_strided_slice %316 {offsets = [0, 8], sizes = [14, 8], strides = [1, 1]} : vector<14x32xf32> to vector<14x8xf32>
    %342 = vector.extract_strided_slice %317 {offsets = [0, 8], sizes = [14, 8], strides = [1, 1]} : vector<14x32xf32> to vector<14x8xf32>
    %343 = vector.extract_strided_slice %318 {offsets = [0, 8], sizes = [14, 8], strides = [1, 1]} : vector<14x32xf32> to vector<14x8xf32>
    %cst_158 = arith.constant dense<0.000000e+00> : vector<14x14xf32>
    %344 = tpu.matmul %341, %342, %cst_158 {dimension_numbers = #tpu.dot_dimension_numbers<[1], [1], [0], [0], [0, 0, 1, 0], [], []>} : vector<14x8xf32>, vector<14x8xf32>, vector<14x14xf32> -> vector<14x14xf32>
    %cst_159 = arith.constant 0.353553385 : f32
    %345 = vector.broadcast %cst_159 : f32 to vector<14x14xf32>
    %346 = arith.mulf %344, %345 : vector<14x14xf32>
    %347 = arith.addf %346, %6 : vector<14x14xf32>
    %cst_160 = arith.constant dense<0xFF800000> : vector<14xf32>
    %348 = vector.multi_reduction <maximumf>, %347, %cst_160 [1] : vector<14x14xf32> to vector<14xf32>
    %349 = vector.shape_cast %348 : vector<14xf32> to vector<14x1xf32>
    %350 = vector.broadcast %349 : vector<14x1xf32> to vector<14x14xf32>
    %351 = arith.subf %347, %350 : vector<14x14xf32>
    %352 = math.exp %351 : vector<14x14xf32>
    %cst_161 = arith.constant dense<0.000000e+00> : vector<14xf32>
    %353 = vector.multi_reduction <add>, %352, %cst_161 [1] : vector<14x14xf32> to vector<14xf32>
    %354 = vector.shape_cast %353 : vector<14xf32> to vector<14x1xf32>
    %355 = tpu.reciprocal %354 {approx = true} : vector<14x1xf32> -> vector<14x1xf32>
    %356 = vector.broadcast %355 : vector<14x1xf32> to vector<14x14xf32>
    %357 = arith.mulf %352, %356 : vector<14x14xf32>
    %cst_162 = arith.constant dense<0.000000e+00> : vector<14x8xf32>
    %358 = tpu.matmul %357, %343, %cst_162 {dimension_numbers = #tpu.dot_dimension_numbers<[1], [0], [0], [1], [0, 0, 1, 1], [], []>} : vector<14x14xf32>, vector<14x8xf32>, vector<14x8xf32> -> vector<14x8xf32>
    %359 = vector.extract_strided_slice %316 {offsets = [0, 16], sizes = [14, 8], strides = [1, 1]} : vector<14x32xf32> to vector<14x8xf32>
    %360 = vector.extract_strided_slice %317 {offsets = [0, 16], sizes = [14, 8], strides = [1, 1]} : vector<14x32xf32> to vector<14x8xf32>
    %361 = vector.extract_strided_slice %318 {offsets = [0, 16], sizes = [14, 8], strides = [1, 1]} : vector<14x32xf32> to vector<14x8xf32>
    %cst_163 = arith.constant dense<0.000000e+00> : vector<14x14xf32>
    %362 = tpu.matmul %359, %360, %cst_163 {dimension_numbers = #tpu.dot_dimension_numbers<[1], [1], [0], [0], [0, 0, 1, 0], [], []>} : vector<14x8xf32>, vector<14x8xf32>, vector<14x14xf32> -> vector<14x14xf32>
    %cst_164 = arith.constant 0.353553385 : f32
    %363 = vector.broadcast %cst_164 : f32 to vector<14x14xf32>
    %364 = arith.mulf %362, %363 : vector<14x14xf32>
    %365 = arith.addf %364, %6 : vector<14x14xf32>
    %cst_165 = arith.constant dense<0xFF800000> : vector<14xf32>
    %366 = vector.multi_reduction <maximumf>, %365, %cst_165 [1] : vector<14x14xf32> to vector<14xf32>
    %367 = vector.shape_cast %366 : vector<14xf32> to vector<14x1xf32>
    %368 = vector.broadcast %367 : vector<14x1xf32> to vector<14x14xf32>
    %369 = arith.subf %365, %368 : vector<14x14xf32>
    %370 = math.exp %369 : vector<14x14xf32>
    %cst_166 = arith.constant dense<0.000000e+00> : vector<14xf32>
    %371 = vector.multi_reduction <add>, %370, %cst_166 [1] : vector<14x14xf32> to vector<14xf32>
    %372 = vector.shape_cast %371 : vector<14xf32> to vector<14x1xf32>
    %373 = tpu.reciprocal %372 {approx = true} : vector<14x1xf32> -> vector<14x1xf32>
    %374 = vector.broadcast %373 : vector<14x1xf32> to vector<14x14xf32>
    %375 = arith.mulf %370, %374 : vector<14x14xf32>
    %cst_167 = arith.constant dense<0.000000e+00> : vector<14x8xf32>
    %376 = tpu.matmul %375, %361, %cst_167 {dimension_numbers = #tpu.dot_dimension_numbers<[1], [0], [0], [1], [0, 0, 1, 1], [], []>} : vector<14x14xf32>, vector<14x8xf32>, vector<14x8xf32> -> vector<14x8xf32>
    %377 = vector.extract_strided_slice %316 {offsets = [0, 24], sizes = [14, 8], strides = [1, 1]} : vector<14x32xf32> to vector<14x8xf32>
    %378 = vector.extract_strided_slice %317 {offsets = [0, 24], sizes = [14, 8], strides = [1, 1]} : vector<14x32xf32> to vector<14x8xf32>
    %379 = vector.extract_strided_slice %318 {offsets = [0, 24], sizes = [14, 8], strides = [1, 1]} : vector<14x32xf32> to vector<14x8xf32>
    %cst_168 = arith.constant dense<0.000000e+00> : vector<14x14xf32>
    %380 = tpu.matmul %377, %378, %cst_168 {dimension_numbers = #tpu.dot_dimension_numbers<[1], [1], [0], [0], [0, 0, 1, 0], [], []>} : vector<14x8xf32>, vector<14x8xf32>, vector<14x14xf32> -> vector<14x14xf32>
    %cst_169 = arith.constant 0.353553385 : f32
    %381 = vector.broadcast %cst_169 : f32 to vector<14x14xf32>
    %382 = arith.mulf %380, %381 : vector<14x14xf32>
    %383 = arith.addf %382, %6 : vector<14x14xf32>
    %cst_170 = arith.constant dense<0xFF800000> : vector<14xf32>
    %384 = vector.multi_reduction <maximumf>, %383, %cst_170 [1] : vector<14x14xf32> to vector<14xf32>
    %385 = vector.shape_cast %384 : vector<14xf32> to vector<14x1xf32>
    %386 = vector.broadcast %385 : vector<14x1xf32> to vector<14x14xf32>
    %387 = arith.subf %383, %386 : vector<14x14xf32>
    %388 = math.exp %387 : vector<14x14xf32>
    %cst_171 = arith.constant dense<0.000000e+00> : vector<14xf32>
    %389 = vector.multi_reduction <add>, %388, %cst_171 [1] : vector<14x14xf32> to vector<14xf32>
    %390 = vector.shape_cast %389 : vector<14xf32> to vector<14x1xf32>
    %391 = tpu.reciprocal %390 {approx = true} : vector<14x1xf32> -> vector<14x1xf32>
    %392 = vector.broadcast %391 : vector<14x1xf32> to vector<14x14xf32>
    %393 = arith.mulf %388, %392 : vector<14x14xf32>
    %cst_172 = arith.constant dense<0.000000e+00> : vector<14x8xf32>
    %394 = tpu.matmul %393, %379, %cst_172 {dimension_numbers = #tpu.dot_dimension_numbers<[1], [0], [0], [1], [0, 0, 1, 1], [], []>} : vector<14x14xf32>, vector<14x8xf32>, vector<14x8xf32> -> vector<14x8xf32>
    %395 = tpu.concatenate %340, %358, %376, %394 in 1 : vector<14x8xf32>, vector<14x8xf32>, vector<14x8xf32>, vector<14x8xf32> -> vector<14x32xf32>
    %cst_173 = arith.constant dense<0.000000e+00> : vector<14x32xf32>
    %396 = tpu.matmul %395, %320, %cst_173 {dimension_numbers = #tpu.dot_dimension_numbers<[1], [0], [0], [1], [0, 0, 1, 1], [], []>} : vector<14x32xf32>, vector<32x32xf32>, vector<14x32xf32> -> vector<14x32xf32>
    %397 = vector.broadcast %322 : vector<1x32xf32> to vector<14x32xf32>
    %398 = arith.addf %396, %397 : vector<14x32xf32>
    %399 = arith.addf %284, %398 : vector<14x32xf32>
    %c4 = arith.constant 4 : index
    %c0_174 = arith.constant 0 : index
    %c0_175 = arith.constant 0 : index
    %400 = vector.load %arg19[%c4, %c0_174, %c0_175] : memref<6x1x32xf32, #tpu.memory_space<vmem>>, vector<1x1x32xf32>
    %401 = vector.shape_cast %400 : vector<1x1x32xf32> to vector<1x32xf32>
    %c4_176 = arith.constant 4 : index
    %c0_177 = arith.constant 0 : index
    %c0_178 = arith.constant 0 : index
    %402 = vector.load %arg20[%c4_176, %c0_177, %c0_178] : memref<6x1x32xf32, #tpu.memory_space<vmem>>, vector<1x1x32xf32>
    %403 = vector.shape_cast %402 : vector<1x1x32xf32> to vector<1x32xf32>
    %cst_179 = arith.constant dense<0.000000e+00> : vector<14xf32>
    %404 = vector.multi_reduction <add>, %399, %cst_179 [1] : vector<14x32xf32> to vector<14xf32>
    %405 = vector.shape_cast %404 : vector<14xf32> to vector<14x1xf32>
    %cst_180 = arith.constant 3.200000e+01 : f32
    %406 = vector.broadcast %cst_180 : f32 to vector<14x1xf32>
    %407 = arith.divf %405, %406 : vector<14x1xf32>
    %408 = vector.broadcast %407 : vector<14x1xf32> to vector<14x32xf32>
    %409 = arith.subf %399, %408 : vector<14x32xf32>
    %410 = arith.mulf %409, %409 : vector<14x32xf32>
    %cst_181 = arith.constant dense<0.000000e+00> : vector<14xf32>
    %411 = vector.multi_reduction <add>, %410, %cst_181 [1] : vector<14x32xf32> to vector<14xf32>
    %412 = vector.shape_cast %411 : vector<14xf32> to vector<14x1xf32>
    %cst_182 = arith.constant 0.0322580636 : f32
    %413 = vector.broadcast %cst_182 : f32 to vector<14x1xf32>
    %414 = arith.mulf %412, %413 : vector<14x1xf32>
    %415 = vector.broadcast %401 : vector<1x32xf32> to vector<14x32xf32>
    %416 = arith.mulf %415, %409 : vector<14x32xf32>
    %417 = math.sqrt %414 : vector<14x1xf32>
    %cst_183 = arith.constant 9.99999997E-7 : f32
    %418 = vector.broadcast %cst_183 : f32 to vector<14x1xf32>
    %419 = arith.addf %417, %418 : vector<14x1xf32>
    %420 = vector.broadcast %419 : vector<14x1xf32> to vector<14x32xf32>
    %421 = arith.divf %416, %420 : vector<14x32xf32>
    %422 = vector.broadcast %403 : vector<1x32xf32> to vector<14x32xf32>
    %423 = arith.addf %421, %422 : vector<14x32xf32>
    %c1_184 = arith.constant 1 : index
    %c0_185 = arith.constant 0 : index
    %c0_186 = arith.constant 0 : index
    %424 = vector.load %arg9[%c1_184, %c0_185, %c0_186] : memref<2x32x32xf32, #tpu.memory_space<vmem>>, vector<1x32x32xf32>
    %425 = vector.shape_cast %424 : vector<1x32x32xf32> to vector<32x32xf32>
    %cst_187 = arith.constant dense<0.000000e+00> : vector<14x32xf32>
    %426 = tpu.matmul %423, %425, %cst_187 {dimension_numbers = #tpu.dot_dimension_numbers<[1], [0], [0], [1], [0, 0, 1, 1], [], []>} : vector<14x32xf32>, vector<32x32xf32>, vector<14x32xf32> -> vector<14x32xf32>
    %c1_188 = arith.constant 1 : index
    %c0_189 = arith.constant 0 : index
    %c0_190 = arith.constant 0 : index
    %427 = vector.load %arg10[%c1_188, %c0_189, %c0_190] : memref<2x1x32xf32, #tpu.memory_space<vmem>>, vector<1x1x32xf32>
    %428 = vector.shape_cast %427 : vector<1x1x32xf32> to vector<1x32xf32>
    %429 = vector.broadcast %428 : vector<1x32xf32> to vector<14x32xf32>
    %430 = arith.addf %426, %429 : vector<14x32xf32>
    %c1_191 = arith.constant 1 : index
    %c0_192 = arith.constant 0 : index
    %c0_193 = arith.constant 0 : index
    %431 = vector.load %arg11[%c1_191, %c0_192, %c0_193] : memref<2x32x64xf32, #tpu.memory_space<vmem>>, vector<1x32x64xf32>
    %432 = vector.shape_cast %431 : vector<1x32x64xf32> to vector<32x64xf32>
    %cst_194 = arith.constant dense<0.000000e+00> : vector<16x64xf32>
    %433 = tpu.matmul %5, %432, %cst_194 {dimension_numbers = #tpu.dot_dimension_numbers<[1], [0], [0], [1], [0, 0, 1, 1], [], []>} : vector<16x32xf32>, vector<32x64xf32>, vector<16x64xf32> -> vector<16x64xf32>
    %c1_195 = arith.constant 1 : index
    %c0_196 = arith.constant 0 : index
    %c0_197 = arith.constant 0 : index
    %434 = vector.load %arg12[%c1_195, %c0_196, %c0_197] : memref<2x1x64xf32, #tpu.memory_space<vmem>>, vector<1x1x64xf32>
    %435 = vector.shape_cast %434 : vector<1x1x64xf32> to vector<1x64xf32>
    %436 = vector.broadcast %435 : vector<1x64xf32> to vector<16x64xf32>
    %437 = arith.addf %433, %436 : vector<16x64xf32>
    %438 = vector.extract_strided_slice %437 {offsets = [0, 0], sizes = [16, 32], strides = [1, 1]} : vector<16x64xf32> to vector<16x32xf32>
    %439 = vector.extract_strided_slice %437 {offsets = [0, 32], sizes = [16, 32], strides = [1, 1]} : vector<16x64xf32> to vector<16x32xf32>
    %c1_198 = arith.constant 1 : index
    %c0_199 = arith.constant 0 : index
    %c0_200 = arith.constant 0 : index
    %440 = vector.load %arg13[%c1_198, %c0_199, %c0_200] : memref<2x32x32xf32, #tpu.memory_space<vmem>>, vector<1x32x32xf32>
    %441 = vector.shape_cast %440 : vector<1x32x32xf32> to vector<32x32xf32>
    %c1_201 = arith.constant 1 : index
    %c0_202 = arith.constant 0 : index
    %c0_203 = arith.constant 0 : index
    %442 = vector.load %arg14[%c1_201, %c0_202, %c0_203] : memref<2x1x32xf32, #tpu.memory_space<vmem>>, vector<1x1x32xf32>
    %443 = vector.shape_cast %442 : vector<1x1x32xf32> to vector<1x32xf32>
    %444 = vector.extract_strided_slice %430 {offsets = [0, 0], sizes = [14, 8], strides = [1, 1]} : vector<14x32xf32> to vector<14x8xf32>
    %445 = vector.extract_strided_slice %438 {offsets = [0, 0], sizes = [16, 8], strides = [1, 1]} : vector<16x32xf32> to vector<16x8xf32>
    %446 = vector.extract_strided_slice %439 {offsets = [0, 0], sizes = [16, 8], strides = [1, 1]} : vector<16x32xf32> to vector<16x8xf32>
    %cst_204 = arith.constant dense<0.000000e+00> : vector<14x16xf32>
    %447 = tpu.matmul %444, %445, %cst_204 {dimension_numbers = #tpu.dot_dimension_numbers<[1], [1], [0], [0], [0, 0, 1, 0], [], []>} : vector<14x8xf32>, vector<16x8xf32>, vector<14x16xf32> -> vector<14x16xf32>
    %cst_205 = arith.constant 0.353553385 : f32
    %448 = vector.broadcast %cst_205 : f32 to vector<14x16xf32>
    %449 = arith.mulf %447, %448 : vector<14x16xf32>
    %450 = arith.addf %449, %7 : vector<14x16xf32>
    %cst_206 = arith.constant dense<0xFF800000> : vector<14xf32>
    %451 = vector.multi_reduction <maximumf>, %450, %cst_206 [1] : vector<14x16xf32> to vector<14xf32>
    %452 = vector.shape_cast %451 : vector<14xf32> to vector<14x1xf32>
    %453 = vector.broadcast %452 : vector<14x1xf32> to vector<14x16xf32>
    %454 = arith.subf %450, %453 : vector<14x16xf32>
    %455 = math.exp %454 : vector<14x16xf32>
    %cst_207 = arith.constant dense<0.000000e+00> : vector<14xf32>
    %456 = vector.multi_reduction <add>, %455, %cst_207 [1] : vector<14x16xf32> to vector<14xf32>
    %457 = vector.shape_cast %456 : vector<14xf32> to vector<14x1xf32>
    %458 = tpu.reciprocal %457 {approx = true} : vector<14x1xf32> -> vector<14x1xf32>
    %459 = vector.broadcast %458 : vector<14x1xf32> to vector<14x16xf32>
    %460 = arith.mulf %455, %459 : vector<14x16xf32>
    %cst_208 = arith.constant dense<0.000000e+00> : vector<14x8xf32>
    %461 = tpu.matmul %460, %446, %cst_208 {dimension_numbers = #tpu.dot_dimension_numbers<[1], [0], [0], [1], [0, 0, 1, 1], [], []>} : vector<14x16xf32>, vector<16x8xf32>, vector<14x8xf32> -> vector<14x8xf32>
    %462 = vector.extract_strided_slice %430 {offsets = [0, 8], sizes = [14, 8], strides = [1, 1]} : vector<14x32xf32> to vector<14x8xf32>
    %463 = vector.extract_strided_slice %438 {offsets = [0, 8], sizes = [16, 8], strides = [1, 1]} : vector<16x32xf32> to vector<16x8xf32>
    %464 = vector.extract_strided_slice %439 {offsets = [0, 8], sizes = [16, 8], strides = [1, 1]} : vector<16x32xf32> to vector<16x8xf32>
    %cst_209 = arith.constant dense<0.000000e+00> : vector<14x16xf32>
    %465 = tpu.matmul %462, %463, %cst_209 {dimension_numbers = #tpu.dot_dimension_numbers<[1], [1], [0], [0], [0, 0, 1, 0], [], []>} : vector<14x8xf32>, vector<16x8xf32>, vector<14x16xf32> -> vector<14x16xf32>
    %cst_210 = arith.constant 0.353553385 : f32
    %466 = vector.broadcast %cst_210 : f32 to vector<14x16xf32>
    %467 = arith.mulf %465, %466 : vector<14x16xf32>
    %468 = arith.addf %467, %7 : vector<14x16xf32>
    %cst_211 = arith.constant dense<0xFF800000> : vector<14xf32>
    %469 = vector.multi_reduction <maximumf>, %468, %cst_211 [1] : vector<14x16xf32> to vector<14xf32>
    %470 = vector.shape_cast %469 : vector<14xf32> to vector<14x1xf32>
    %471 = vector.broadcast %470 : vector<14x1xf32> to vector<14x16xf32>
    %472 = arith.subf %468, %471 : vector<14x16xf32>
    %473 = math.exp %472 : vector<14x16xf32>
    %cst_212 = arith.constant dense<0.000000e+00> : vector<14xf32>
    %474 = vector.multi_reduction <add>, %473, %cst_212 [1] : vector<14x16xf32> to vector<14xf32>
    %475 = vector.shape_cast %474 : vector<14xf32> to vector<14x1xf32>
    %476 = tpu.reciprocal %475 {approx = true} : vector<14x1xf32> -> vector<14x1xf32>
    %477 = vector.broadcast %476 : vector<14x1xf32> to vector<14x16xf32>
    %478 = arith.mulf %473, %477 : vector<14x16xf32>
    %cst_213 = arith.constant dense<0.000000e+00> : vector<14x8xf32>
    %479 = tpu.matmul %478, %464, %cst_213 {dimension_numbers = #tpu.dot_dimension_numbers<[1], [0], [0], [1], [0, 0, 1, 1], [], []>} : vector<14x16xf32>, vector<16x8xf32>, vector<14x8xf32> -> vector<14x8xf32>
    %480 = vector.extract_strided_slice %430 {offsets = [0, 16], sizes = [14, 8], strides = [1, 1]} : vector<14x32xf32> to vector<14x8xf32>
    %481 = vector.extract_strided_slice %438 {offsets = [0, 16], sizes = [16, 8], strides = [1, 1]} : vector<16x32xf32> to vector<16x8xf32>
    %482 = vector.extract_strided_slice %439 {offsets = [0, 16], sizes = [16, 8], strides = [1, 1]} : vector<16x32xf32> to vector<16x8xf32>
    %cst_214 = arith.constant dense<0.000000e+00> : vector<14x16xf32>
    %483 = tpu.matmul %480, %481, %cst_214 {dimension_numbers = #tpu.dot_dimension_numbers<[1], [1], [0], [0], [0, 0, 1, 0], [], []>} : vector<14x8xf32>, vector<16x8xf32>, vector<14x16xf32> -> vector<14x16xf32>
    %cst_215 = arith.constant 0.353553385 : f32
    %484 = vector.broadcast %cst_215 : f32 to vector<14x16xf32>
    %485 = arith.mulf %483, %484 : vector<14x16xf32>
    %486 = arith.addf %485, %7 : vector<14x16xf32>
    %cst_216 = arith.constant dense<0xFF800000> : vector<14xf32>
    %487 = vector.multi_reduction <maximumf>, %486, %cst_216 [1] : vector<14x16xf32> to vector<14xf32>
    %488 = vector.shape_cast %487 : vector<14xf32> to vector<14x1xf32>
    %489 = vector.broadcast %488 : vector<14x1xf32> to vector<14x16xf32>
    %490 = arith.subf %486, %489 : vector<14x16xf32>
    %491 = math.exp %490 : vector<14x16xf32>
    %cst_217 = arith.constant dense<0.000000e+00> : vector<14xf32>
    %492 = vector.multi_reduction <add>, %491, %cst_217 [1] : vector<14x16xf32> to vector<14xf32>
    %493 = vector.shape_cast %492 : vector<14xf32> to vector<14x1xf32>
    %494 = tpu.reciprocal %493 {approx = true} : vector<14x1xf32> -> vector<14x1xf32>
    %495 = vector.broadcast %494 : vector<14x1xf32> to vector<14x16xf32>
    %496 = arith.mulf %491, %495 : vector<14x16xf32>
    %cst_218 = arith.constant dense<0.000000e+00> : vector<14x8xf32>
    %497 = tpu.matmul %496, %482, %cst_218 {dimension_numbers = #tpu.dot_dimension_numbers<[1], [0], [0], [1], [0, 0, 1, 1], [], []>} : vector<14x16xf32>, vector<16x8xf32>, vector<14x8xf32> -> vector<14x8xf32>
    %498 = vector.extract_strided_slice %430 {offsets = [0, 24], sizes = [14, 8], strides = [1, 1]} : vector<14x32xf32> to vector<14x8xf32>
    %499 = vector.extract_strided_slice %438 {offsets = [0, 24], sizes = [16, 8], strides = [1, 1]} : vector<16x32xf32> to vector<16x8xf32>
    %500 = vector.extract_strided_slice %439 {offsets = [0, 24], sizes = [16, 8], strides = [1, 1]} : vector<16x32xf32> to vector<16x8xf32>
    %cst_219 = arith.constant dense<0.000000e+00> : vector<14x16xf32>
    %501 = tpu.matmul %498, %499, %cst_219 {dimension_numbers = #tpu.dot_dimension_numbers<[1], [1], [0], [0], [0, 0, 1, 0], [], []>} : vector<14x8xf32>, vector<16x8xf32>, vector<14x16xf32> -> vector<14x16xf32>
    %cst_220 = arith.constant 0.353553385 : f32
    %502 = vector.broadcast %cst_220 : f32 to vector<14x16xf32>
    %503 = arith.mulf %501, %502 : vector<14x16xf32>
    %504 = arith.addf %503, %7 : vector<14x16xf32>
    %cst_221 = arith.constant dense<0xFF800000> : vector<14xf32>
    %505 = vector.multi_reduction <maximumf>, %504, %cst_221 [1] : vector<14x16xf32> to vector<14xf32>
    %506 = vector.shape_cast %505 : vector<14xf32> to vector<14x1xf32>
    %507 = vector.broadcast %506 : vector<14x1xf32> to vector<14x16xf32>
    %508 = arith.subf %504, %507 : vector<14x16xf32>
    %509 = math.exp %508 : vector<14x16xf32>
    %cst_222 = arith.constant dense<0.000000e+00> : vector<14xf32>
    %510 = vector.multi_reduction <add>, %509, %cst_222 [1] : vector<14x16xf32> to vector<14xf32>
    %511 = vector.shape_cast %510 : vector<14xf32> to vector<14x1xf32>
    %512 = tpu.reciprocal %511 {approx = true} : vector<14x1xf32> -> vector<14x1xf32>
    %513 = vector.broadcast %512 : vector<14x1xf32> to vector<14x16xf32>
    %514 = arith.mulf %509, %513 : vector<14x16xf32>
    %cst_223 = arith.constant dense<0.000000e+00> : vector<14x8xf32>
    %515 = tpu.matmul %514, %500, %cst_223 {dimension_numbers = #tpu.dot_dimension_numbers<[1], [0], [0], [1], [0, 0, 1, 1], [], []>} : vector<14x16xf32>, vector<16x8xf32>, vector<14x8xf32> -> vector<14x8xf32>
    %516 = tpu.concatenate %461, %479, %497, %515 in 1 : vector<14x8xf32>, vector<14x8xf32>, vector<14x8xf32>, vector<14x8xf32> -> vector<14x32xf32>
    %cst_224 = arith.constant dense<0.000000e+00> : vector<14x32xf32>
    %517 = tpu.matmul %516, %441, %cst_224 {dimension_numbers = #tpu.dot_dimension_numbers<[1], [0], [0], [1], [0, 0, 1, 1], [], []>} : vector<14x32xf32>, vector<32x32xf32>, vector<14x32xf32> -> vector<14x32xf32>
    %518 = vector.broadcast %443 : vector<1x32xf32> to vector<14x32xf32>
    %519 = arith.addf %517, %518 : vector<14x32xf32>
    %520 = arith.addf %399, %519 : vector<14x32xf32>
    %c5 = arith.constant 5 : index
    %c0_225 = arith.constant 0 : index
    %c0_226 = arith.constant 0 : index
    %521 = vector.load %arg19[%c5, %c0_225, %c0_226] : memref<6x1x32xf32, #tpu.memory_space<vmem>>, vector<1x1x32xf32>
    %522 = vector.shape_cast %521 : vector<1x1x32xf32> to vector<1x32xf32>
    %c5_227 = arith.constant 5 : index
    %c0_228 = arith.constant 0 : index
    %c0_229 = arith.constant 0 : index
    %523 = vector.load %arg20[%c5_227, %c0_228, %c0_229] : memref<6x1x32xf32, #tpu.memory_space<vmem>>, vector<1x1x32xf32>
    %524 = vector.shape_cast %523 : vector<1x1x32xf32> to vector<1x32xf32>
    %cst_230 = arith.constant dense<0.000000e+00> : vector<14xf32>
    %525 = vector.multi_reduction <add>, %520, %cst_230 [1] : vector<14x32xf32> to vector<14xf32>
    %526 = vector.shape_cast %525 : vector<14xf32> to vector<14x1xf32>
    %cst_231 = arith.constant 3.200000e+01 : f32
    %527 = vector.broadcast %cst_231 : f32 to vector<14x1xf32>
    %528 = arith.divf %526, %527 : vector<14x1xf32>
    %529 = vector.broadcast %528 : vector<14x1xf32> to vector<14x32xf32>
    %530 = arith.subf %520, %529 : vector<14x32xf32>
    %531 = arith.mulf %530, %530 : vector<14x32xf32>
    %cst_232 = arith.constant dense<0.000000e+00> : vector<14xf32>
    %532 = vector.multi_reduction <add>, %531, %cst_232 [1] : vector<14x32xf32> to vector<14xf32>
    %533 = vector.shape_cast %532 : vector<14xf32> to vector<14x1xf32>
    %cst_233 = arith.constant 0.0322580636 : f32
    %534 = vector.broadcast %cst_233 : f32 to vector<14x1xf32>
    %535 = arith.mulf %533, %534 : vector<14x1xf32>
    %536 = vector.broadcast %522 : vector<1x32xf32> to vector<14x32xf32>
    %537 = arith.mulf %536, %530 : vector<14x32xf32>
    %538 = math.sqrt %535 : vector<14x1xf32>
    %cst_234 = arith.constant 9.99999997E-7 : f32
    %539 = vector.broadcast %cst_234 : f32 to vector<14x1xf32>
    %540 = arith.addf %538, %539 : vector<14x1xf32>
    %541 = vector.broadcast %540 : vector<14x1xf32> to vector<14x32xf32>
    %542 = arith.divf %537, %541 : vector<14x32xf32>
    %543 = vector.broadcast %524 : vector<1x32xf32> to vector<14x32xf32>
    %544 = arith.addf %542, %543 : vector<14x32xf32>
    %c1_235 = arith.constant 1 : index
    %c0_236 = arith.constant 0 : index
    %c0_237 = arith.constant 0 : index
    %545 = vector.load %arg15[%c1_235, %c0_236, %c0_237] : memref<2x32x64xf32, #tpu.memory_space<vmem>>, vector<1x32x64xf32>
    %546 = vector.shape_cast %545 : vector<1x32x64xf32> to vector<32x64xf32>
    %cst_238 = arith.constant dense<0.000000e+00> : vector<14x64xf32>
    %547 = tpu.matmul %544, %546, %cst_238 {dimension_numbers = #tpu.dot_dimension_numbers<[1], [0], [0], [1], [0, 0, 1, 1], [], []>} : vector<14x32xf32>, vector<32x64xf32>, vector<14x64xf32> -> vector<14x64xf32>
    %c1_239 = arith.constant 1 : index
    %c0_240 = arith.constant 0 : index
    %c0_241 = arith.constant 0 : index
    %548 = vector.load %arg16[%c1_239, %c0_240, %c0_241] : memref<2x1x64xf32, #tpu.memory_space<vmem>>, vector<1x1x64xf32>
    %549 = vector.shape_cast %548 : vector<1x1x64xf32> to vector<1x64xf32>
    %550 = vector.broadcast %549 : vector<1x64xf32> to vector<14x64xf32>
    %551 = arith.addf %547, %550 : vector<14x64xf32>
    %cst_242 = arith.constant 0.000000e+00 : f32
    %552 = vector.broadcast %cst_242 : f32 to vector<14x64xf32>
    %553 = arith.maximumf %551, %552 : vector<14x64xf32>
    %c1_243 = arith.constant 1 : index
    %c0_244 = arith.constant 0 : index
    %c0_245 = arith.constant 0 : index
    %554 = vector.load %arg17[%c1_243, %c0_244, %c0_245] : memref<2x64x32xf32, #tpu.memory_space<vmem>>, vector<1x64x32xf32>
    %555 = vector.shape_cast %554 : vector<1x64x32xf32> to vector<64x32xf32>
    %cst_246 = arith.constant dense<0.000000e+00> : vector<14x32xf32>
    %556 = tpu.matmul %553, %555, %cst_246 {dimension_numbers = #tpu.dot_dimension_numbers<[1], [0], [0], [1], [0, 0, 1, 1], [], []>} : vector<14x64xf32>, vector<64x32xf32>, vector<14x32xf32> -> vector<14x32xf32>
    %557 = arith.addf %520, %556 : vector<14x32xf32>
    %c1_247 = arith.constant 1 : index
    %c0_248 = arith.constant 0 : index
    %c0_249 = arith.constant 0 : index
    %558 = vector.load %arg18[%c1_247, %c0_248, %c0_249] : memref<2x1x32xf32, #tpu.memory_space<vmem>>, vector<1x1x32xf32>
    %559 = vector.shape_cast %558 : vector<1x1x32xf32> to vector<1x32xf32>
    %560 = vector.broadcast %559 : vector<1x32xf32> to vector<14x32xf32>
    %561 = arith.addf %557, %560 : vector<14x32xf32>
    %c0_250 = arith.constant 0 : index
    %c0_251 = arith.constant 0 : index
    %562 = vector.load %arg21[%c0_250, %c0_251] : memref<1x32xf32, #tpu.memory_space<vmem>>, vector<1x32xf32>
    %c0_252 = arith.constant 0 : index
    %c0_253 = arith.constant 0 : index
    %563 = vector.load %arg22[%c0_252, %c0_253] : memref<1x32xf32, #tpu.memory_space<vmem>>, vector<1x32xf32>
    %cst_254 = arith.constant dense<0.000000e+00> : vector<14xf32>
    %564 = vector.multi_reduction <add>, %561, %cst_254 [1] : vector<14x32xf32> to vector<14xf32>
    %565 = vector.shape_cast %564 : vector<14xf32> to vector<14x1xf32>
    %cst_255 = arith.constant 3.200000e+01 : f32
    %566 = vector.broadcast %cst_255 : f32 to vector<14x1xf32>
    %567 = arith.divf %565, %566 : vector<14x1xf32>
    %568 = vector.broadcast %567 : vector<14x1xf32> to vector<14x32xf32>
    %569 = arith.subf %561, %568 : vector<14x32xf32>
    %570 = arith.mulf %569, %569 : vector<14x32xf32>
    %cst_256 = arith.constant dense<0.000000e+00> : vector<14xf32>
    %571 = vector.multi_reduction <add>, %570, %cst_256 [1] : vector<14x32xf32> to vector<14xf32>
    %572 = vector.shape_cast %571 : vector<14xf32> to vector<14x1xf32>
    %cst_257 = arith.constant 0.0322580636 : f32
    %573 = vector.broadcast %cst_257 : f32 to vector<14x1xf32>
    %574 = arith.mulf %572, %573 : vector<14x1xf32>
    %575 = vector.broadcast %562 : vector<1x32xf32> to vector<14x32xf32>
    %576 = arith.mulf %575, %569 : vector<14x32xf32>
    %577 = math.sqrt %574 : vector<14x1xf32>
    %cst_258 = arith.constant 9.99999997E-7 : f32
    %578 = vector.broadcast %cst_258 : f32 to vector<14x1xf32>
    %579 = arith.addf %577, %578 : vector<14x1xf32>
    %580 = vector.broadcast %579 : vector<14x1xf32> to vector<14x32xf32>
    %581 = arith.divf %576, %580 : vector<14x32xf32>
    %582 = vector.broadcast %563 : vector<1x32xf32> to vector<14x32xf32>
    %583 = arith.addf %581, %582 : vector<14x32xf32>
    %c0_259 = arith.constant 0 : index
    %c0_260 = arith.constant 0 : index
    %584 = vector.load %arg23[%c0_259, %c0_260] : memref<14x32xf32, #tpu.memory_space<vmem>>, vector<14x32xf32>
    tpu.vector_store %arg23[%c0_259, %c0_260], %583 {strides = array<i32>} : memref<14x32xf32, #tpu.memory_space<vmem>>, vector<14x32xf32>,
    return
  }
}

</mosaic_0001>

<llo_original>
// kernel: tpu_custom_call.1
$region0: #{tpu_custom_call.1}
  #allocation0 [shape = 'u32[]', space=smem, size = 0x4, offset = 0x4, fixed_abs, tag = 'smem constant byte address 0x4 - core index']
  #allocation1 [shape = 'u32[72,128]{1,0:T(1,128)}', space=vmem, size = 0x9000, scoped, tag = 'internal scratch']
  %s0 = inlined_call_operand.hbm [shape: f32[14,32], index: 0, kind: input, shape index: {}]
  %s1 = inlined_call_operand.hbm [shape: f32[16,32], index: 1, kind: input, shape index: {}]
  %s2 = inlined_call_operand.hbm [shape: f32[14,32], index: 2, kind: input, shape index: {}]
  %s3 = inlined_call_operand.hbm [shape: f32[14,14], index: 3, kind: input, shape index: {}]
  %s4 = inlined_call_operand.hbm [shape: f32[14,16], index: 4, kind: input, shape index: {}]
  %s5 = inlined_call_operand.vmem [shape: f32[2,32,96], index: 5, kind: input, shape index: {}]
  %s6 = inlined_call_operand.vmem [shape: f32[2,1,96], index: 6, kind: input, shape index: {}]
  %s7 = inlined_call_operand.vmem [shape: f32[2,32,32], index: 7, kind: input, shape index: {}]
  %s8 = inlined_call_operand.hbm [shape: f32[2,1,32], index: 8, kind: input, shape index: {}]
  %s9 = inlined_call_operand.vmem [shape: f32[2,32,32], index: 9, kind: input, shape index: {}]
  %s10 = inlined_call_operand.hbm [shape: f32[2,1,32], index: 10, kind: input, shape index: {}]
  %s11 = inlined_call_operand.hbm [shape: f32[2,32,64], index: 11, kind: input, shape index: {}]
  %s12 = inlined_call_operand.hbm [shape: f32[2,1,64], index: 12, kind: input, shape index: {}]
  %s13 = inlined_call_operand.hbm [shape: f32[2,32,32], index: 13, kind: input, shape index: {}]
  %s14 = inlined_call_operand.hbm [shape: f32[2,1,32], index: 14, kind: input, shape index: {}]
  %s15 = inlined_call_operand.hbm [shape: f32[2,32,64], index: 15, kind: input, shape index: {}]
  %s16 = inlined_call_operand.hbm [shape: f32[2,1,64], index: 16, kind: input, shape index: {}]
  %s17 = inlined_call_operand.vmem [shape: f32[2,64,32], index: 17, kind: input, shape index: {}]
  %s18 = inlined_call_operand.vmem [shape: f32[2,1,32], index: 18, kind: input, shape index: {}]
  %s19 = inlined_call_operand.vmem [shape: f32[6,1,32], index: 19, kind: input, shape index: {}]
  %s20 = inlined_call_operand.vmem [shape: f32[6,1,32], index: 20, kind: input, shape index: {}]
  %s21 = inlined_call_operand.vmem [shape: f32[1,32], index: 21, kind: input, shape index: {}]
  %s22 = inlined_call_operand.vmem [shape: f32[1,32], index: 22, kind: input, shape index: {}]
  %s23 = inlined_call_operand.hbm [shape: f32[14,32], index: 23, kind: output, shape index: {}]
  %s24 = sld [smem:[#allocation0]]
  $region154: #{tpu_custom_call.1} parent=0
    _
  %s26 = ssub.s32 1, %s24
  %s27 = scalar_select 0, %s26, %s24
  $region1: #{tpu_custom_call.1} parent=0
    #allocation2 [shape = 'u8[8192]{0}', space=vmem, size = 0x2000, scoped, tag = 'input window, operand 0, single buffered']
    #allocation3 [shape = 's32[1]{0}', space=sflag, size = 0x4, scoped, tag = 'scoped memory for tpu_custom_call.1']
    #allocation4 [shape = 's32[1]{0}', space=sflag, size = 0x4, scoped, tag = 'scoped memory for tpu_custom_call.1']
    #allocation5 [shape = 'u8[8192]{0}', space=vmem, size = 0x2000, scoped, tag = 'input window, operand 1, single buffered']
    #allocation6 [shape = 's32[1]{0}', space=sflag, size = 0x4, scoped, tag = 'scoped memory for tpu_custom_call.1']
    #allocation7 [shape = 'u8[8192]{0}', space=vmem, size = 0x2000, scoped, tag = 'input window, operand 2, single buffered']
    #allocation8 [shape = 'u8[8192]{0}', space=vmem, size = 0x2000, scoped, tag = 'input window, operand 3, single buffered']
    #allocation9 [shape = 's32[1]{0}', space=sflag, size = 0x4, scoped, tag = 'scoped memory for tpu_custom_call.1']
    #allocation10 [shape = 'u8[8192]{0}', space=vmem, size = 0x2000, scoped, tag = 'input window, operand 4, single buffered']
    #allocation11 [shape = 'u8[1024]{0}', space=vmem, size = 0x400, scoped, tag = 'input window, operand 8, single buffered']
    #allocation12 [shape = 's32[1]{0}', space=sflag, size = 0x4, scoped, tag = 'scoped memory for tpu_custom_call.1']
    #allocation13 [shape = 'u8[1024]{0}', space=vmem, size = 0x400, scoped, tag = 'input window, operand 10, single buffered']
    #allocation14 [shape = 'u8[32768]{0}', space=vmem, size = 0x8000, scoped, tag = 'input window, operand 11, single buffered']
    #allocation15 [shape = 's32[1]{0}', space=sflag, size = 0x4, scoped, tag = 'scoped memory for tpu_custom_call.1']
    #allocation16 [shape = 'u8[1024]{0}', space=vmem, size = 0x400, scoped, tag = 'input window, operand 12, single buffered']
    #allocation17 [shape = 'u8[32768]{0}', space=vmem, size = 0x8000, scoped, tag = 'input window, operand 13, single buffered']
    #allocation18 [shape = 's32[1]{0}', space=sflag, size = 0x4, scoped, tag = 'scoped memory for tpu_custom_call.1']
    #allocation19 [shape = 'u8[1024]{0}', space=vmem, size = 0x400, scoped, tag = 'input window, operand 14, single buffered']
    #allocation20 [shape = 'u8[32768]{0}', space=vmem, size = 0x8000, scoped, tag = 'input window, operand 15, single buffered']
    #allocation21 [shape = 's32[1]{0}', space=sflag, size = 0x4, scoped, tag = 'scoped memory for tpu_custom_call.1']
    #allocation22 [shape = 'u8[1024]{0}', space=vmem, size = 0x400, scoped, tag = 'input window, operand 16, single buffered']
    #allocation23 [shape = 'u8[8192]{0}', space=vmem, size = 0x2000, scoped, tag = 'output window, operand 0, single buffered']
    %28 = vsyncpa [#allocation3], 0
    %29 = vsyncpa [#allocation6], 0
    %30 = vsyncpa [#allocation9], 0
    %31 = vsyncpa [#allocation12], 0
    %32 = vsyncpa [#allocation15], 0
    %33 = vsyncpa [#allocation18], 0
    %34 = vsyncpa [#allocation21], 0
    %35 = vsyncpa [#allocation4], 0
    // Predicated region
    $region2: #{tpu_custom_call.1} parent=1 // pred_check
      _
    $region3: #{tpu_custom_call.1} parent=1 // pred_check_branch
      %37 = sbr.rel (0) target = $region5
    $region4: #{tpu_custom_call.1} parent=1 // pred_region
      %39 = vsyncadd [#allocation3], 0
      %s40 = sshll.u32 %s0, 4
      %s41 = int_to_ptr.hbm [resolvable:$true] %s40
      %s42 = sshll.u32 [#allocation2], 4
      %s43 = int_to_ptr.vmem [resolvable:$true] %s42
      %48 = dma.hbm_to_vmem [thread:$0]  %s41, 256, %s43, [#allocation3], 128, 128, 8
    $region5: #{tpu_custom_call.1} parent=1 // pred_fallthru
      _
    // Predicated region
    $region6: #{tpu_custom_call.1} parent=1 // pred_check
      _
    $region7: #{tpu_custom_call.1} parent=1 // pred_check_branch
      %50 = sbr.rel (0) target = $region9
    $region8: #{tpu_custom_call.1} parent=1 // pred_region
      %52 = vsyncadd [#allocation6], 0
      %s53 = sshll.u32 %s1, 4
      %s54 = int_to_ptr.hbm [resolvable:$true] %s53
      %s55 = sshll.u32 [#allocation5], 4
      %s56 = int_to_ptr.vmem [resolvable:$true] %s55
      %61 = dma.hbm_to_vmem [thread:$0]  %s54, 256, %s56, [#allocation6], 128, 128, 8
    $region9: #{tpu_custom_call.1} parent=1 // pred_fallthru
      _
    // Predicated region
    $region10: #{tpu_custom_call.1} parent=1 // pred_check
      _
    $region11: #{tpu_custom_call.1} parent=1 // pred_check_branch
      %63 = sbr.rel (0) target = $region13
    $region12: #{tpu_custom_call.1} parent=1 // pred_region
      %65 = vsyncadd [#allocation6], 0
      %s66 = sshll.u32 %s2, 4
      %s67 = int_to_ptr.hbm [resolvable:$true] %s66
      %s68 = sshll.u32 [#allocation7], 4
      %s69 = int_to_ptr.vmem [resolvable:$true] %s68
      %74 = dma.hbm_to_vmem [thread:$0]  %s67, 256, %s69, [#allocation6], 128, 128, 8
    $region13: #{tpu_custom_call.1} parent=1 // pred_fallthru
      _
    // Predicated region
    $region14: #{tpu_custom_call.1} parent=1 // pred_check
      _
    $region15: #{tpu_custom_call.1} parent=1 // pred_check_branch
      %76 = sbr.rel (0) target = $region17
    $region16: #{tpu_custom_call.1} parent=1 // pred_region
      %78 = vsyncadd [#allocation9], 0
      %s79 = sshll.u32 %s3, 4
      %s80 = int_to_ptr.hbm [resolvable:$true] %s79
      %s81 = sshll.u32 [#allocation8], 4
      %s82 = int_to_ptr.vmem [resolvable:$true] %s81
      %87 = dma.hbm_to_vmem [thread:$0]  %s80, 256, %s82, [#allocation9], 128, 128, 8
    $region17: #{tpu_custom_call.1} parent=1 // pred_fallthru
      _
    // Predicated region
    $region18: #{tpu_custom_call.1} parent=1 // pred_check
      _
    $region19: #{tpu_custom_call.1} parent=1 // pred_check_branch
      %89 = sbr.rel (0) target = $region21
    $region20: #{tpu_custom_call.1} parent=1 // pred_region
      %91 = vsyncadd [#allocation9], 0
      %s92 = sshll.u32 %s4, 4
      %s93 = int_to_ptr.hbm [resolvable:$true] %s92
      %s94 = sshll.u32 [#allocation10], 4
      %s95 = int_to_ptr.vmem [resolvable:$true] %s94
      %100 = dma.hbm_to_vmem [thread:$0]  %s93, 256, %s95, [#allocation9], 128, 128, 8
    $region21: #{tpu_custom_call.1} parent=1 // pred_fallthru
      _
    // Predicated region
    $region22: #{tpu_custom_call.1} parent=1 // pred_check
      _
    $region23: #{tpu_custom_call.1} parent=1 // pred_check_branch
      %102 = sbr.rel (0) target = $region25
    $region24: #{tpu_custom_call.1} parent=1 // pred_region
      _
    $region25: #{tpu_custom_call.1} parent=1 // pred_fallthru
      _
    // Predicated region
    $region26: #{tpu_custom_call.1} parent=1 // pred_check
      _
    $region27: #{tpu_custom_call.1} parent=1 // pred_check_branch
      %104 = sbr.rel (0) target = $region29
    $region28: #{tpu_custom_call.1} parent=1 // pred_region
      _
    $region29: #{tpu_custom_call.1} parent=1 // pred_fallthru
      _
    // Predicated region
    $region30: #{tpu_custom_call.1} parent=1 // pred_check
      _
    $region31: #{tpu_custom_call.1} parent=1 // pred_check_branch
      %106 = sbr.rel (0) target = $region33
    $region32: #{tpu_custom_call.1} parent=1 // pred_region
      _
    $region33: #{tpu_custom_call.1} parent=1 // pred_fallthru
      _
    // Predicated region
    $region34: #{tpu_custom_call.1} parent=1 // pred_check
      _
    $region35: #{tpu_custom_call.1} parent=1 // pred_check_branch
      %108 = sbr.rel (0) target = $region37
    $region36: #{tpu_custom_call.1} parent=1 // pred_region
      %110 = vsyncadd [#allocation12], 0
      %s111 = sshll.u32 %s8, 4
      %s112 = int_to_ptr.hbm [resolvable:$true] %s111
      %s113 = sshll.u32 [#allocation11], 4
      %s114 = int_to_ptr.vmem [resolvable:$true] %s113
      %119 = dma.hbm_to_vmem [thread:$0]  %s112, 32, %s114, [#allocation12], 16, 16, 1
    $region37: #{tpu_custom_call.1} parent=1 // pred_fallthru
      _
    // Predicated region
    $region38: #{tpu_custom_call.1} parent=1 // pred_check
      _
    $region39: #{tpu_custom_call.1} parent=1 // pred_check_branch
      %121 = sbr.rel (0) target = $region41
    $region40: #{tpu_custom_call.1} parent=1 // pred_region
      _
    $region41: #{tpu_custom_call.1} parent=1 // pred_fallthru
      _
    // Predicated region
    $region42: #{tpu_custom_call.1} parent=1 // pred_check
      _
    $region43: #{tpu_custom_call.1} parent=1 // pred_check_branch
      %123 = sbr.rel (0) target = $region45
    $region44: #{tpu_custom_call.1} parent=1 // pred_region
      %125 = vsyncadd [#allocation12], 0
      %s126 = sshll.u32 %s10, 4
      %s127 = int_to_ptr.hbm [resolvable:$true] %s126
      %s128 = sshll.u32 [#allocation13], 4
      %s129 = int_to_ptr.vmem [resolvable:$true] %s128
      %134 = dma.hbm_to_vmem [thread:$0]  %s127, 32, %s129, [#allocation12], 16, 16, 1
    $region45: #{tpu_custom_call.1} parent=1 // pred_fallthru
      _
    // Predicated region
    $region46: #{tpu_custom_call.1} parent=1 // pred_check
      _
    $region47: #{tpu_custom_call.1} parent=1 // pred_check_branch
      %136 = sbr.rel (0) target = $region49
    $region48: #{tpu_custom_call.1} parent=1 // pred_region
      %138 = vsyncadd [#allocation15], 0
      %s139 = sshll.u32 %s11, 4
      %s140 = int_to_ptr.hbm [resolvable:$true] %s139
      %s141 = sshll.u32 [#allocation14], 4
      %s142 = int_to_ptr.vmem [resolvable:$true] %s141
      %147 = dma.hbm_to_vmem [thread:$0]  %s140, 1024, %s142, [#allocation15], 128, 128, 8
    $region49: #{tpu_custom_call.1} parent=1 // pred_fallthru
      _
    // Predicated region
    $region50: #{tpu_custom_call.1} parent=1 // pred_check
      _
    $region51: #{tpu_custom_call.1} parent=1 // pred_check_branch
      %149 = sbr.rel (0) target = $region53
    $region52: #{tpu_custom_call.1} parent=1 // pred_region
      %151 = vsyncadd [#allocation15], 0
      %s152 = sshll.u32 %s12, 4
      %s153 = int_to_ptr.hbm [resolvable:$true] %s152
      %s154 = sshll.u32 [#allocation16], 4
      %s155 = int_to_ptr.vmem [resolvable:$true] %s154
      %160 = dma.hbm_to_vmem [thread:$0]  %s153, 32, %s155, [#allocation15], 16, 16, 1
    $region53: #{tpu_custom_call.1} parent=1 // pred_fallthru
      _
    // Predicated region
    $region54: #{tpu_custom_call.1} parent=1 // pred_check
      _
    $region55: #{tpu_custom_call.1} parent=1 // pred_check_branch
      %162 = sbr.rel (0) target = $region57
    $region56: #{tpu_custom_call.1} parent=1 // pred_region
      %164 = vsyncadd [#allocation18], 0
      %s165 = sshll.u32 %s13, 4
      %s166 = int_to_ptr.hbm [resolvable:$true] %s165
      %s167 = sshll.u32 [#allocation17], 4
      %s168 = int_to_ptr.vmem [resolvable:$true] %s167
      %173 = dma.hbm_to_vmem [thread:$0]  %s166, 1024, %s168, [#allocation18], 128, 128, 8
    $region57: #{tpu_custom_call.1} parent=1 // pred_fallthru
      _
    // Predicated region
    $region58: #{tpu_custom_call.1} parent=1 // pred_check
      _
    $region59: #{tpu_custom_call.1} parent=1 // pred_check_branch
      %175 = sbr.rel (0) target = $region61
    $region60: #{tpu_custom_call.1} parent=1 // pred_region
      %177 = vsyncadd [#allocation18], 0
      %s178 = sshll.u32 %s14, 4
      %s179 = int_to_ptr.hbm [resolvable:$true] %s178
      %s180 = sshll.u32 [#allocation19], 4
      %s181 = int_to_ptr.vmem [resolvable:$true] %s180
      %186 = dma.hbm_to_vmem [thread:$0]  %s179, 32, %s181, [#allocation18], 16, 16, 1
    $region61: #{tpu_custom_call.1} parent=1 // pred_fallthru
      _
    // Predicated region
    $region62: #{tpu_custom_call.1} parent=1 // pred_check
      _
    $region63: #{tpu_custom_call.1} parent=1 // pred_check_branch
      %188 = sbr.rel (0) target = $region65
    $region64: #{tpu_custom_call.1} parent=1 // pred_region
      %190 = vsyncadd [#allocation21], 0
      %s191 = sshll.u32 %s15, 4
      %s192 = int_to_ptr.hbm [resolvable:$true] %s191
      %s193 = sshll.u32 [#allocation20], 4
      %s194 = int_to_ptr.vmem [resolvable:$true] %s193
      %199 = dma.hbm_to_vmem [thread:$0]  %s192, 1024, %s194, [#allocation21], 128, 128, 8
    $region65: #{tpu_custom_call.1} parent=1 // pred_fallthru
      _
    // Predicated region
    $region66: #{tpu_custom_call.1} parent=1 // pred_check
      _
    $region67: #{tpu_custom_call.1} parent=1 // pred_check_branch
      %201 = sbr.rel (0) target = $region69
    $region68: #{tpu_custom_call.1} parent=1 // pred_region
      %203 = vsyncadd [#allocation21], 0
      %s204 = sshll.u32 %s16, 4
      %s205 = int_to_ptr.hbm [resolvable:$true] %s204
      %s206 = sshll.u32 [#allocation22], 4
      %s207 = int_to_ptr.vmem [resolvable:$true] %s206
      %212 = dma.hbm_to_vmem [thread:$0]  %s205, 32, %s207, [#allocation21], 16, 16, 1
    $region69: #{tpu_custom_call.1} parent=1 // pred_fallthru
      _
    // Predicated region
    $region70: #{tpu_custom_call.1} parent=1 // pred_check
      _
    $region71: #{tpu_custom_call.1} parent=1 // pred_check_branch
      %214 = sbr.rel (0) target = $region73
    $region72: #{tpu_custom_call.1} parent=1 // pred_region
      _
    $region73: #{tpu_custom_call.1} parent=1 // pred_fallthru
      _
    // Predicated region
    $region74: #{tpu_custom_call.1} parent=1 // pred_check
      _
    $region75: #{tpu_custom_call.1} parent=1 // pred_check_branch
      %216 = sbr.rel (0) target = $region77
    $region76: #{tpu_custom_call.1} parent=1 // pred_region
      _
    $region77: #{tpu_custom_call.1} parent=1 // pred_fallthru
      _
    // Predicated region
    $region78: #{tpu_custom_call.1} parent=1 // pred_check
      _
    $region79: #{tpu_custom_call.1} parent=1 // pred_check_branch
      %218 = sbr.rel (0) target = $region81
    $region80: #{tpu_custom_call.1} parent=1 // pred_region
      _
    $region81: #{tpu_custom_call.1} parent=1 // pred_fallthru
      _
    // Predicated region
    $region82: #{tpu_custom_call.1} parent=1 // pred_check
      _
    $region83: #{tpu_custom_call.1} parent=1 // pred_check_branch
      %220 = sbr.rel (0) target = $region85
    $region84: #{tpu_custom_call.1} parent=1 // pred_region
      _
    $region85: #{tpu_custom_call.1} parent=1 // pred_fallthru
      _
    // Predicated region
    $region86: #{tpu_custom_call.1} parent=1 // pred_check
      _
    $region87: #{tpu_custom_call.1} parent=1 // pred_check_branch
      %222 = sbr.rel (0) target = $region89
    $region88: #{tpu_custom_call.1} parent=1 // pred_region
      _
    $region89: #{tpu_custom_call.1} parent=1 // pred_fallthru
      _
    // Predicated region
    $region90: #{tpu_custom_call.1} parent=1 // pred_check
      _
    $region91: #{tpu_custom_call.1} parent=1 // pred_check_branch
      %224 = sbr.rel (0) target = $region93
    $region92: #{tpu_custom_call.1} parent=1 // pred_region
      _
    $region93: #{tpu_custom_call.1} parent=1 // pred_fallthru
      _
    // Predicated region
    $region94: #{tpu_custom_call.1} parent=1 // pred_check
      _
    $region95: #{tpu_custom_call.1} parent=1 // pred_check_branch
      %226 = sbr.rel (0) target = $region97
    $region96: #{tpu_custom_call.1} parent=1 // pred_region
      %228 = dma.done [#allocation3], 256
    $region97: #{tpu_custom_call.1} parent=1 // pred_fallthru
      _
    // Predicated region
    $region98: #{tpu_custom_call.1} parent=1 // pred_check
      _
    $region99: #{tpu_custom_call.1} parent=1 // pred_check_branch
      %230 = sbr.rel (0) target = $region101
    $region100: #{tpu_custom_call.1} parent=1 // pred_region
      %232 = dma.done [#allocation6], 256
    $region101: #{tpu_custom_call.1} parent=1 // pred_fallthru
      _
    // Predicated region
    $region102: #{tpu_custom_call.1} parent=1 // pred_check
      _
    $region103: #{tpu_custom_call.1} parent=1 // pred_check_branch
      %234 = sbr.rel (0) target = $region105
    $region104: #{tpu_custom_call.1} parent=1 // pred_region
      %236 = dma.done [#allocation6], 256
    $region105: #{tpu_custom_call.1} parent=1 // pred_fallthru
      _
    // Predicated region
    $region106: #{tpu_custom_call.1} parent=1 // pred_check
      _
    $region107: #{tpu_custom_call.1} parent=1 // pred_check_branch
      %238 = sbr.rel (0) target = $region109
    $region108: #{tpu_custom_call.1} parent=1 // pred_region
      %240 = dma.done [#allocation9], 256
    $region109: #{tpu_custom_call.1} parent=1 // pred_fallthru
      _
    // Predicated region
    $region110: #{tpu_custom_call.1} parent=1 // pred_check
      _
    $region111: #{tpu_custom_call.1} parent=1 // pred_check_branch
      %242 = sbr.rel (0) target = $region113
    $region112: #{tpu_custom_call.1} parent=1 // pred_region
      %244 = dma.done [#allocation9], 256
    $region113: #{tpu_custom_call.1} parent=1 // pred_fallthru
      _
    // Predicated region
    $region114: #{tpu_custom_call.1} parent=1 // pred_check
      _
    $region115: #{tpu_custom_call.1} parent=1 // pred_check_branch
      %246 = sbr.rel (0) target = $region117
    $region116: #{tpu_custom_call.1} parent=1 // pred_region
      %248 = dma.done [#allocation12], 32
    $region117: #{tpu_custom_call.1} parent=1 // pred_fallthru
      _
    // Predicated region
    $region118: #{tpu_custom_call.1} parent=1 // pred_check
      _
    $region119: #{tpu_custom_call.1} parent=1 // pred_check_branch
      %250 = sbr.rel (0) target = $region121
    $region120: #{tpu_custom_call.1} parent=1 // pred_region
      %252 = dma.done [#allocation12], 32
    $region121: #{tpu_custom_call.1} parent=1 // pred_fallthru
      _
    // Predicated region
    $region122: #{tpu_custom_call.1} parent=1 // pred_check
      _
    $region123: #{tpu_custom_call.1} parent=1 // pred_check_branch
      %254 = sbr.rel (0) target = $region125
    $region124: #{tpu_custom_call.1} parent=1 // pred_region
      %256 = dma.done [#allocation15], 1024
    $region125: #{tpu_custom_call.1} parent=1 // pred_fallthru
      _
    // Predicated region
    $region126: #{tpu_custom_call.1} parent=1 // pred_check
      _
    $region127: #{tpu_custom_call.1} parent=1 // pred_check_branch
      %258 = sbr.rel (0) target = $region129
    $region128: #{tpu_custom_call.1} parent=1 // pred_region
      %260 = dma.done [#allocation15], 32
    $region129: #{tpu_custom_call.1} parent=1 // pred_fallthru
      _
    // Predicated region
    $region130: #{tpu_custom_call.1} parent=1 // pred_check
      _
    $region131: #{tpu_custom_call.1} parent=1 // pred_check_branch
      %262 = sbr.rel (0) target = $region133
    $region132: #{tpu_custom_call.1} parent=1 // pred_region
      %264 = dma.done [#allocation18], 1024
    $region133: #{tpu_custom_call.1} parent=1 // pred_fallthru
      _
    // Predicated region
    $region134: #{tpu_custom_call.1} parent=1 // pred_check
      _
    $region135: #{tpu_custom_call.1} parent=1 // pred_check_branch
      %266 = sbr.rel (0) target = $region137
    $region136: #{tpu_custom_call.1} parent=1 // pred_region
      %268 = dma.done [#allocation18], 32
    $region137: #{tpu_custom_call.1} parent=1 // pred_fallthru
      _
    // Predicated region
    $region138: #{tpu_custom_call.1} parent=1 // pred_check
      _
    $region139: #{tpu_custom_call.1} parent=1 // pred_check_branch
      %270 = sbr.rel (0) target = $region141
    $region140: #{tpu_custom_call.1} parent=1 // pred_region
      %272 = dma.done [#allocation21], 1024
    $region141: #{tpu_custom_call.1} parent=1 // pred_fallthru
      _
    // Predicated region
    $region142: #{tpu_custom_call.1} parent=1 // pred_check
      _
    $region143: #{tpu_custom_call.1} parent=1 // pred_check_branch
      %274 = sbr.rel (0) target = $region145
    $region144: #{tpu_custom_call.1} parent=1 // pred_region
      %276 = dma.done [#allocation21], 32
    $region145: #{tpu_custom_call.1} parent=1 // pred_fallthru
      _
    %v277 = vld [vmem:[#allocation2] sm:$0xff]
    %v278 = vld [vmem:[#allocation2 + $0x8] sm:$0x3f]
    %v279 = vmul.f32 %v277, 5.656854
    %v280 = vmul.f32 %v278, 5.656854
    %v281 = vld [vmem:[#allocation7] sm:$0xff]
    %v282 = vld [vmem:[#allocation7 + $0x8] sm:$0x3f]
    %v283 = vadd.f32 %v279, %v281
    %v284 = vadd.f32 %v280, %v282
    %v285 = vld [vmem:[#allocation5] sm:$0xff]
    %v286 = vld [vmem:[#allocation5 + $0x8] sm:$0xff]
    %v287 = vld [vmem:[#allocation8] sm:$0xff]
    %v288 = vld [vmem:[#allocation8 + $0x8] sm:$0x3f]
    %v289 = vld [vmem:[#allocation10] sm:$0xff]
    %v290 = vld [vmem:[#allocation10 + $0x8] sm:$0x3f]
    %v291 = vld [vmem:[%s19] sm:$0x1]
    %v292 = vld [vmem:[%s20] sm:$0x1]
    %vm293 = vcmask 261120
    %v294 = vsel %vm293, %v283, 0.0
    %295 = vadd.xlane.f32.xlu0 %v294
    %v296 = vpop.xlane.xlu0 %295
    %vm297 = vcmask 259072
    %v298 = vsel %vm297, %v284, 0.0
    %299 = vadd.xlane.f32.xlu0 %v298
    %v300 = vpop.xlane.xlu0 %299
    %v301 = vrcp.pop 32.0
    %v302 = vmul.f32 32.0, %v301
    %v303 = vsub.f32 1.0, %v302
    %v304 = vmul.f32 %v301, %v303
    %v305 = vadd.f32 %v301, %v304
    %vm306 = vweird.f32 %v301
    %v307 = vsel %vm306, %v301, %v305
    %v308 = vmul.f32 %v296, %v307
    %v309 = vmul.f32 %v300, %v307
    %v310 = vsub.f32 %v283, %v308
    %v311 = vsub.f32 %v284, %v309
    %v312 = vmul.f32 %v310, %v310
    %v313 = vmul.f32 %v311, %v311
    %v314 = vsel %vm293, %v312, 0.0
    %315 = vadd.xlane.f32.xlu0 %v314
    %v316 = vpop.xlane.xlu0 %315
    %v317 = vsel %vm297, %v313, 0.0
    %318 = vadd.xlane.f32.xlu0 %v317
    %v319 = vpop.xlane.xlu0 %318
    %v320 = vmul.f32 %v316, 0.032258064
    %v321 = vmul.f32 %v319, 0.032258064
    %v323 = vperm.slane %v291, 0
    %v325 = vmul.f32 %v323, %v310
    %v326 = vmul.f32 %v323, %v311
    %v327 = vrsqrt.pop %v320
    %v328 = vmul.f32 %v327, %v320
    %v329 = vmul.f32 %v328, %v327
    %v330 = vmul.f32 0.5, %v329
    %v331 = vsub.f32 1.5, %v330
    %v332 = vmul.f32 %v327, %v331
    %v333 = vmul.f32 %v320, %v332
    %vm334 = vcmp.eq.f32.partialorder %v320, inf
    %v335 = vsel %vm334, %v320, %v333
    %vm336 = vcmp.eq.f32.partialorder %v320, 0.0
    %v337 = vand.u32 %v320, 2147483648
    %v338 = vsel %vm336, %v337, %v335
    %v339 = vrsqrt.pop %v321
    %v340 = vmul.f32 %v339, %v321
    %v341 = vmul.f32 %v340, %v339
    %v342 = vmul.f32 0.5, %v341
    %v343 = vsub.f32 1.5, %v342
    %v344 = vmul.f32 %v339, %v343
    %v345 = vmul.f32 %v321, %v344
    %vm346 = vcmp.eq.f32.partialorder %v321, inf
    %v347 = vsel %vm346, %v321, %v345
    %vm348 = vcmp.eq.f32.partialorder %v321, 0.0
    %v349 = vand.u32 %v321, 2147483648
    %v350 = vsel %vm348, %v349, %v347
    %v351 = vadd.f32 %v338, 1e-06
    %v352 = vadd.f32 %v350, 1e-06
    %v353 = vrcp.pop %v351
    %v354 = vmul.f32 %v351, %v353
    %v355 = vsub.f32 1.0, %v354
    %v356 = vmul.f32 %v353, %v355
    %v357 = vadd.f32 %v353, %v356
    %vm358 = vweird.f32 %v351
    %vm359 = vweird.f32 %v353
    %vm360 = vmor %vm358, %vm359
    %v361 = vsel %vm360, %v353, %v357
    %v362 = vand.u32 2147483647, %v351
    %vm363 = vcmp.eq.f32.partialorder %v362, 8.507059e+37
    %v364 = vand.u32 %v351, 2147483648
    %v365 = vor.u32 1.1754944e-38, %v364
    %v366 = vsel %vm363, %v365, %v361
    %v367 = vmul.f32 %v325, %v366
    %v368 = vrcp.pop %v352
    %v369 = vmul.f32 %v352, %v368
    %v370 = vsub.f32 1.0, %v369
    %v371 = vmul.f32 %v368, %v370
    %v372 = vadd.f32 %v368, %v371
    %vm373 = vweird.f32 %v352
    %vm374 = vweird.f32 %v368
    %vm375 = vmor %vm373, %vm374
    %v376 = vsel %vm375, %v368, %v372
    %v377 = vand.u32 2147483647, %v352
    %vm378 = vcmp.eq.f32.partialorder %v377, 8.507059e+37
    %v379 = vand.u32 %v352, 2147483648
    %v380 = vor.u32 1.1754944e-38, %v379
    %v381 = vsel %vm378, %v380, %v376
    %v382 = vmul.f32 %v326, %v381
    %v384 = vperm.slane %v292, 0
    %v386 = vadd.f32 %v367, %v384
    %v387 = vadd.f32 %v382, %v384
    %v388 = vld [vmem:[%s5] sm:$0xff]
    %v389 = vld [vmem:[%s5 + $0x8] sm:$0xff]
    %v390 = vld [vmem:[%s5 + $0x10] sm:$0xff]
    %v391 = vld [vmem:[%s5 + $0x18] sm:$0xff]
    %v392 = vld [vmem:[%s6] sm:$0x1]
    %v394 = vperm.slane %v392, 0
    %v397 = vsel %vm293, %v386, 0
    %v400 = vsel %vm293, %v387, 0
    %402 = vmatpush.msra.mxu0 0.0
    %403 = vmatpush.msra.mxu0 0.0
    %404 = vmatpush.msra.mxu0 0.0
    %405 = vmatpush.msra.mxu0 0.0
    %406 = vmatpush.msra.mxu0 0.0
    %407 = vmatpush.msra.mxu0 0.0
    %408 = vmatpush.msra.mxu0 0.0
    %409 = vmatpush.msra.mxu0 0.0
    %410 = vmatpush.msra.mxu0 0.0
    %411 = vmatpush.msra.mxu0 0.0
    %412 = vmatpush.msra.mxu0 0.0
    %413 = vmatpush.msra.mxu0 0.0
    %414 = vmatpush.msra.mxu0 %v391
    %415 = vmatpush.msra.mxu0 %v390
    %416 = vmatpush.msra.mxu0 %v389
    %417 = vmatpush.msra.mxu0 %v388
    %418 = vmatmul.f32.gmra.mxu0 %v397
    %v419 = vpop.f32.mrf.mxu0
    %v420 = vadd.f32 %v394, %v419
    %421 = vmatmul.f32.gmra.mxu0 %v400
    %v422 = vpop.f32.mrf.mxu0
    %v423 = vadd.f32 %v394, %v422
    %424 = vdwg.mxu0
    %v425 = vld [vmem:[%s7] sm:$0xff]
    %v426 = vld [vmem:[%s7 + $0x8] sm:$0xff]
    %v427 = vld [vmem:[%s7 + $0x10] sm:$0xff]
    %v428 = vld [vmem:[%s7 + $0x18] sm:$0xff]
    %v429 = vld [vmem:[#allocation11] sm:$0x1]
    %432 = vrot.lane.b32.xlu0 %v420, 96
    %v433 = vpop.permute.xlu0 %432
    %434 = vrot.lane.b32.xlu0 %v423, 96
    %v435 = vpop.permute.xlu0 %434
    %vm436 = vcmask 64512
    %v437 = vsel %vm436, %v420, 0
    %v439 = vsel %vm436, %v423, 0
    %v441 = vsel %vm436, %v433, 0
    %v443 = vsel %vm436, %v435, 0
    %445 = vmatpush.xpose.msra.mxu0 0.0
    %446 = vmatpush.xpose.msra.mxu0 0.0
    %447 = vmatpush.xpose.msra.mxu0 0.0
    %448 = vmatpush.xpose.msra.mxu0 0.0
    %449 = vmatpush.xpose.msra.mxu0 0.0
    %450 = vmatpush.xpose.msra.mxu0 0.0
    %451 = vmatpush.xpose.msra.mxu0 0.0
    %452 = vmatpush.xpose.msra.mxu0 0.0
    %453 = vmatpush.xpose.msra.mxu0 0.0
    %454 = vmatpush.xpose.msra.mxu0 0.0
    %455 = vmatpush.xpose.msra.mxu0 0.0
    %456 = vmatpush.xpose.msra.mxu0 0.0
    %457 = vmatpush.xpose.msra.mxu0 0.0
    %458 = vmatpush.xpose.msra.mxu0 0.0
    %459 = vmatpush.xpose.msra.mxu0 %v443
    %460 = vmatpush.xpose.msra.mxu0 %v441
    %461 = vmatmul.f32.gmra.mxu0 %v437
    %v462 = vpop.f32.mrf.mxu0
    %v463 = vadd.f32 0.0, %v462
    %464 = vmatmul.f32.gmra.mxu0 %v439
    %v465 = vpop.f32.mrf.mxu0
    %v466 = vadd.f32 0.0, %v465
    %467 = vdwg.mxu0
    %v468 = vmul.f32 %v463, 0.35355338
    %v469 = vmul.f32 %v466, 0.35355338
    %v470 = vadd.f32 %v468, %v287
    %v471 = vadd.f32 %v469, %v288
    %vm472 = vcmask 113664
    %v473 = vsel %vm472, %v470, -inf
    %474 = vmax.xlane.f32.xlu0 %v473
    %v475 = vpop.xlane.xlu0 %474
    %vm476 = vcmask 111616
    %v477 = vsel %vm476, %v471, -inf
    %478 = vmax.xlane.f32.xlu0 %v477
    %v479 = vpop.xlane.xlu0 %478
    %v480 = vsub.f32 %v470, %v475
    %v481 = vsub.f32 %v471, %v479
    %v482 = vmul.f32 %v480, 1.442695
    %v483 = vpow.pop %v482
    %v484 = vmul.f32 %v481, 1.442695
    %v485 = vpow.pop %v484
    %v486 = vsel %vm472, %v483, 0.0
    %487 = vadd.xlane.f32.xlu0 %v486
    %v488 = vpop.xlane.xlu0 %487
    %v489 = vsel %vm476, %v485, 0.0
    %490 = vadd.xlane.f32.xlu0 %v489
    %v491 = vpop.xlane.xlu0 %490
    %v492 = vrcp.pop %v488
    %v493 = vrcp.pop %v491
    %v494 = vmul.f32 %v483, %v492
    %v495 = vmul.f32 %v485, %v493
    %496 = vrot.lane.b32.xlu0 %v420, 64
    %v497 = vpop.permute.xlu0 %496
    %498 = vrot.lane.b32.xlu0 %v423, 64
    %v499 = vpop.permute.xlu0 %498
    %v502 = vsel %vm472, %v494, 0
    %v505 = vsel %vm472, %v495, 0
    %vm507 = vcmask 1045504
    %v508 = vsel %vm507, %v499, 0
    %510 = vmatpush.msra.mxu0 0.0
    %511 = vmatpush.msra.mxu0 0.0
    %512 = vmatpush.msra.mxu0 0.0
    %513 = vmatpush.msra.mxu0 0.0
    %514 = vmatpush.msra.mxu0 0.0
    %515 = vmatpush.msra.mxu0 0.0
    %516 = vmatpush.msra.mxu0 0.0
    %517 = vmatpush.msra.mxu0 0.0
    %518 = vmatpush.msra.mxu0 0.0
    %519 = vmatpush.msra.mxu0 0.0
    %520 = vmatpush.msra.mxu0 0.0
    %521 = vmatpush.msra.mxu0 0.0
    %522 = vmatpush.msra.mxu0 0.0
    %523 = vmatpush.msra.mxu0 0.0
    %524 = vmatpush.msra.mxu0 %v508
    %525 = vmatpush.msra.mxu0 %v497
    %526 = vmatmul.f32.gmra.mxu0 %v502
    %v527 = vpop.f32.mrf.mxu0
    %v528 = vadd.f32 0.0, %v527
    %529 = vmatmul.f32.gmra.mxu0 %v505
    %v530 = vpop.f32.mrf.mxu0
    %v531 = vadd.f32 0.0, %v530
    %532 = vdwg.mxu0
    %533 = vrot.lane.b32.xlu0 %v420, 120
    %v534 = vpop.permute.xlu0 %533
    %535 = vrot.lane.b32.xlu0 %v423, 120
    %v536 = vpop.permute.xlu0 %535
    %537 = vrot.lane.b32.xlu0 %v420, 88
    %v538 = vpop.permute.xlu0 %537
    %539 = vrot.lane.b32.xlu0 %v423, 88
    %v540 = vpop.permute.xlu0 %539
    %v541 = vsel %vm436, %v534, 0
    %v543 = vsel %vm436, %v536, 0
    %v545 = vsel %vm436, %v538, 0
    %v547 = vsel %vm436, %v540, 0
    %549 = vmatpush.xpose.msra.mxu0 0.0
    %550 = vmatpush.xpose.msra.mxu0 0.0
    %551 = vmatpush.xpose.msra.mxu0 0.0
    %552 = vmatpush.xpose.msra.mxu0 0.0
    %553 = vmatpush.xpose.msra.mxu0 0.0
    %554 = vmatpush.xpose.msra.mxu0 0.0
    %555 = vmatpush.xpose.msra.mxu0 0.0
    %556 = vmatpush.xpose.msra.mxu0 0.0
    %557 = vmatpush.xpose.msra.mxu0 0.0
    %558 = vmatpush.xpose.msra.mxu0 0.0
    %559 = vmatpush.xpose.msra.mxu0 0.0
    %560 = vmatpush.xpose.msra.mxu0 0.0
    %561 = vmatpush.xpose.msra.mxu0 0.0
    %562 = vmatpush.xpose.msra.mxu0 0.0
    %563 = vmatpush.xpose.msra.mxu0 %v547
    %564 = vmatpush.xpose.msra.mxu0 %v545
    %565 = vmatmul.f32.gmra.mxu0 %v541
    %v566 = vpop.f32.mrf.mxu0
    %v567 = vadd.f32 0.0, %v566
    %568 = vmatmul.f32.gmra.mxu0 %v543
    %v569 = vpop.f32.mrf.mxu0
    %v570 = vadd.f32 0.0, %v569
    %571 = vdwg.mxu0
    %v572 = vmul.f32 %v567, 0.35355338
    %v573 = vmul.f32 %v570, 0.35355338
    %v574 = vadd.f32 %v572, %v287
    %v575 = vadd.f32 %v573, %v288
    %v576 = vsel %vm472, %v574, -inf
    %577 = vmax.xlane.f32.xlu0 %v576
    %v578 = vpop.xlane.xlu0 %577
    %v579 = vsel %vm476, %v575, -inf
    %580 = vmax.xlane.f32.xlu0 %v579
    %v581 = vpop.xlane.xlu0 %580
    %v582 = vsub.f32 %v574, %v578
    %v583 = vsub.f32 %v575, %v581
    %v584 = vmul.f32 %v582, 1.442695
    %v585 = vpow.pop %v584
    %v586 = vmul.f32 %v583, 1.442695
    %v587 = vpow.pop %v586
    %v588 = vsel %vm472, %v585, 0.0
    %589 = vadd.xlane.f32.xlu0 %v588
    %v590 = vpop.xlane.xlu0 %589
    %v591 = vsel %vm476, %v587, 0.0
    %592 = vadd.xlane.f32.xlu0 %v591
    %v593 = vpop.xlane.xlu0 %592
    %v594 = vrcp.pop %v590
    %v595 = vrcp.pop %v593
    %v596 = vmul.f32 %v585, %v594
    %v597 = vmul.f32 %v587, %v595
    %598 = vrot.lane.b32.xlu0 %v420, 56
    %v599 = vpop.permute.xlu0 %598
    %600 = vrot.lane.b32.xlu0 %v423, 56
    %v601 = vpop.permute.xlu0 %600
    %v604 = vsel %vm472, %v596, 0
    %v607 = vsel %vm472, %v597, 0
    %v609 = vsel %vm507, %v601, 0
    %611 = vmatpush.msra.mxu0 0.0
    %612 = vmatpush.msra.mxu0 0.0
    %613 = vmatpush.msra.mxu0 0.0
    %614 = vmatpush.msra.mxu0 0.0
    %615 = vmatpush.msra.mxu0 0.0
    %616 = vmatpush.msra.mxu0 0.0
    %617 = vmatpush.msra.mxu0 0.0
    %618 = vmatpush.msra.mxu0 0.0
    %619 = vmatpush.msra.mxu0 0.0
    %620 = vmatpush.msra.mxu0 0.0
    %621 = vmatpush.msra.mxu0 0.0
    %622 = vmatpush.msra.mxu0 0.0
    %623 = vmatpush.msra.mxu0 0.0
    %624 = vmatpush.msra.mxu0 0.0
    %625 = vmatpush.msra.mxu0 %v609
    %626 = vmatpush.msra.mxu0 %v599
    %627 = vmatmul.f32.gmra.mxu0 %v604
    %v628 = vpop.f32.mrf.mxu0
    %v629 = vadd.f32 0.0, %v628
    %630 = vmatmul.f32.gmra.mxu0 %v607
    %v631 = vpop.f32.mrf.mxu0
    %v632 = vadd.f32 0.0, %v631
    %633 = vdwg.mxu0
    %634 = vrot.lane.b32.xlu0 %v420, 112
    %v635 = vpop.permute.xlu0 %634
    %636 = vrot.lane.b32.xlu0 %v423, 112
    %v637 = vpop.permute.xlu0 %636
    %638 = vrot.lane.b32.xlu0 %v420, 80
    %v639 = vpop.permute.xlu0 %638
    %640 = vrot.lane.b32.xlu0 %v423, 80
    %v641 = vpop.permute.xlu0 %640
    %v642 = vsel %vm436, %v635, 0
    %v644 = vsel %vm436, %v637, 0
    %v646 = vsel %vm436, %v639, 0
    %v648 = vsel %vm436, %v641, 0
    %650 = vmatpush.xpose.msra.mxu0 0.0
    %651 = vmatpush.xpose.msra.mxu0 0.0
    %652 = vmatpush.xpose.msra.mxu0 0.0
    %653 = vmatpush.xpose.msra.mxu0 0.0
    %654 = vmatpush.xpose.msra.mxu0 0.0
    %655 = vmatpush.xpose.msra.mxu0 0.0
    %656 = vmatpush.xpose.msra.mxu0 0.0
    %657 = vmatpush.xpose.msra.mxu0 0.0
    %658 = vmatpush.xpose.msra.mxu0 0.0
    %659 = vmatpush.xpose.msra.mxu0 0.0
    %660 = vmatpush.xpose.msra.mxu0 0.0
    %661 = vmatpush.xpose.msra.mxu0 0.0
    %662 = vmatpush.xpose.msra.mxu0 0.0
    %663 = vmatpush.xpose.msra.mxu0 0.0
    %664 = vmatpush.xpose.msra.mxu0 %v648
    %665 = vmatpush.xpose.msra.mxu0 %v646
    %666 = vmatmul.f32.gmra.mxu0 %v642
    %v667 = vpop.f32.mrf.mxu0
    %v668 = vadd.f32 0.0, %v667
    %669 = vmatmul.f32.gmra.mxu0 %v644
    %v670 = vpop.f32.mrf.mxu0
    %v671 = vadd.f32 0.0, %v670
    %672 = vdwg.mxu0
    %v673 = vmul.f32 %v668, 0.35355338
    %v674 = vmul.f32 %v671, 0.35355338
    %v675 = vadd.f32 %v673, %v287
    %v676 = vadd.f32 %v674, %v288
    %v677 = vsel %vm472, %v675, -inf
    %678 = vmax.xlane.f32.xlu0 %v677
    %v679 = vpop.xlane.xlu0 %678
    %v680 = vsel %vm476, %v676, -inf
    %681 = vmax.xlane.f32.xlu0 %v680
    %v682 = vpop.xlane.xlu0 %681
    %v683 = vsub.f32 %v675, %v679
    %v684 = vsub.f32 %v676, %v682
    %v685 = vmul.f32 %v683, 1.442695
    %v686 = vpow.pop %v685
    %v687 = vmul.f32 %v684, 1.442695
    %v688 = vpow.pop %v687
    %v689 = vsel %vm472, %v686, 0.0
    %690 = vadd.xlane.f32.xlu0 %v689
    %v691 = vpop.xlane.xlu0 %690
    %v692 = vsel %vm476, %v688, 0.0
    %693 = vadd.xlane.f32.xlu0 %v692
    %v694 = vpop.xlane.xlu0 %693
    %v695 = vrcp.pop %v691
    %v696 = vrcp.pop %v694
    %v697 = vmul.f32 %v686, %v695
    %v698 = vmul.f32 %v688, %v696
    %699 = vrot.lane.b32.xlu0 %v420, 48
    %v700 = vpop.permute.xlu0 %699
    %701 = vrot.lane.b32.xlu0 %v423, 48
    %v702 = vpop.permute.xlu0 %701
    %v705 = vsel %vm472, %v697, 0
    %v708 = vsel %vm472, %v698, 0
    %v710 = vsel %vm507, %v702, 0
    %712 = vmatpush.msra.mxu0 0.0
    %713 = vmatpush.msra.mxu0 0.0
    %714 = vmatpush.msra.mxu0 0.0
    %715 = vmatpush.msra.mxu0 0.0
    %716 = vmatpush.msra.mxu0 0.0
    %717 = vmatpush.msra.mxu0 0.0
    %718 = vmatpush.msra.mxu0 0.0
    %719 = vmatpush.msra.mxu0 0.0
    %720 = vmatpush.msra.mxu0 0.0
    %721 = vmatpush.msra.mxu0 0.0
    %722 = vmatpush.msra.mxu0 0.0
    %723 = vmatpush.msra.mxu0 0.0
    %724 = vmatpush.msra.mxu0 0.0
    %725 = vmatpush.msra.mxu0 0.0
    %726 = vmatpush.msra.mxu0 %v710
    %727 = vmatpush.msra.mxu0 %v700
    %728 = vmatmul.f32.gmra.mxu0 %v705
    %v729 = vpop.f32.mrf.mxu0
    %v730 = vadd.f32 0.0, %v729
    %731 = vmatmul.f32.gmra.mxu0 %v708
    %v732 = vpop.f32.mrf.mxu0
    %v733 = vadd.f32 0.0, %v732
    %734 = vdwg.mxu0
    %735 = vrot.lane.b32.xlu0 %v420, 104
    %v736 = vpop.permute.xlu0 %735
    %737 = vrot.lane.b32.xlu0 %v423, 104
    %v738 = vpop.permute.xlu0 %737
    %739 = vrot.lane.b32.xlu0 %v420, 72
    %v740 = vpop.permute.xlu0 %739
    %741 = vrot.lane.b32.xlu0 %v423, 72
    %v742 = vpop.permute.xlu0 %741
    %v743 = vsel %vm436, %v736, 0
    %v745 = vsel %vm436, %v738, 0
    %v747 = vsel %vm436, %v740, 0
    %v749 = vsel %vm436, %v742, 0
    %751 = vmatpush.xpose.msra.mxu0 0.0
    %752 = vmatpush.xpose.msra.mxu0 0.0
    %753 = vmatpush.xpose.msra.mxu0 0.0
    %754 = vmatpush.xpose.msra.mxu0 0.0
    %755 = vmatpush.xpose.msra.mxu0 0.0
    %756 = vmatpush.xpose.msra.mxu0 0.0
    %757 = vmatpush.xpose.msra.mxu0 0.0
    %758 = vmatpush.xpose.msra.mxu0 0.0
    %759 = vmatpush.xpose.msra.mxu0 0.0
    %760 = vmatpush.xpose.msra.mxu0 0.0
    %761 = vmatpush.xpose.msra.mxu0 0.0
    %762 = vmatpush.xpose.msra.mxu0 0.0
    %763 = vmatpush.xpose.msra.mxu0 0.0
    %764 = vmatpush.xpose.msra.mxu0 0.0
    %765 = vmatpush.xpose.msra.mxu0 %v749
    %766 = vmatpush.xpose.msra.mxu0 %v747
    %767 = vmatmul.f32.gmra.mxu0 %v743
    %v768 = vpop.f32.mrf.mxu0
    %v769 = vadd.f32 0.0, %v768
    %770 = vmatmul.f32.gmra.mxu0 %v745
    %v771 = vpop.f32.mrf.mxu0
    %v772 = vadd.f32 0.0, %v771
    %773 = vdwg.mxu0
    %v774 = vmul.f32 %v769, 0.35355338
    %v775 = vmul.f32 %v772, 0.35355338
    %v776 = vadd.f32 %v774, %v287
    %v777 = vadd.f32 %v775, %v288
    %v778 = vsel %vm472, %v776, -inf
    %779 = vmax.xlane.f32.xlu0 %v778
    %v780 = vpop.xlane.xlu0 %779
    %v781 = vsel %vm476, %v777, -inf
    %782 = vmax.xlane.f32.xlu0 %v781
    %v783 = vpop.xlane.xlu0 %782
    %v784 = vsub.f32 %v776, %v780
    %v785 = vsub.f32 %v777, %v783
    %v786 = vmul.f32 %v784, 1.442695
    %v787 = vpow.pop %v786
    %v788 = vmul.f32 %v785, 1.442695
    %v789 = vpow.pop %v788
    %v790 = vsel %vm472, %v787, 0.0
    %791 = vadd.xlane.f32.xlu0 %v790
    %v792 = vpop.xlane.xlu0 %791
    %v793 = vsel %vm476, %v789, 0.0
    %794 = vadd.xlane.f32.xlu0 %v793
    %v795 = vpop.xlane.xlu0 %794
    %v796 = vrcp.pop %v792
    %v797 = vrcp.pop %v795
    %v798 = vmul.f32 %v787, %v796
    %v799 = vmul.f32 %v789, %v797
    %800 = vrot.lane.b32.xlu0 %v420, 40
    %v801 = vpop.permute.xlu0 %800
    %802 = vrot.lane.b32.xlu0 %v423, 40
    %v803 = vpop.permute.xlu0 %802
    %v806 = vsel %vm472, %v798, 0
    %v809 = vsel %vm472, %v799, 0
    %v811 = vsel %vm507, %v803, 0
    %813 = vmatpush.msra.mxu0 0.0
    %814 = vmatpush.msra.mxu0 0.0
    %815 = vmatpush.msra.mxu0 0.0
    %816 = vmatpush.msra.mxu0 0.0
    %817 = vmatpush.msra.mxu0 0.0
    %818 = vmatpush.msra.mxu0 0.0
    %819 = vmatpush.msra.mxu0 0.0
    %820 = vmatpush.msra.mxu0 0.0
    %821 = vmatpush.msra.mxu0 0.0
    %822 = vmatpush.msra.mxu0 0.0
    %823 = vmatpush.msra.mxu0 0.0
    %824 = vmatpush.msra.mxu0 0.0
    %825 = vmatpush.msra.mxu0 0.0
    %826 = vmatpush.msra.mxu0 0.0
    %827 = vmatpush.msra.mxu0 %v811
    %828 = vmatpush.msra.mxu0 %v801
    %829 = vmatmul.f32.gmra.mxu0 %v806
    %v830 = vpop.f32.mrf.mxu0
    %v831 = vadd.f32 0.0, %v830
    %832 = vmatmul.f32.gmra.mxu0 %v809
    %v833 = vpop.f32.mrf.mxu0
    %v834 = vadd.f32 0.0, %v833
    %835 = vdwg.mxu0
    %838 = vrot.lane.b32.xlu0 %v629, 8
    %v839 = vpop.permute.xlu0 %838
    %840 = vrot.lane.b32.xlu0 %v632, 8
    %v841 = vpop.permute.xlu0 %840
    %846 = vrot.lane.b32.xlu0 %v730, 16
    %v847 = vpop.permute.xlu0 %846
    %848 = vrot.lane.b32.xlu0 %v733, 16
    %v849 = vpop.permute.xlu0 %848
    %854 = vrot.lane.b32.xlu0 %v831, 24
    %v855 = vpop.permute.xlu0 %854
    %856 = vrot.lane.b32.xlu0 %v834, 24
    %v857 = vpop.permute.xlu0 %856
    %v860 = vsel %vm436, %v528, %v839
    %v861 = vsel %vm436, %v531, %v841
    %vm862 = vcmask 130048
    %v863 = vsel %vm862, %v860, %v847
    %v864 = vsel %vm862, %v861, %v849
    %vm865 = vcmask 195584
    %v866 = vsel %vm865, %v863, %v855
    %v867 = vsel %vm865, %v864, %v857
    %v869 = vperm.slane %v429, 0
    %v872 = vsel %vm293, %v866, 0
    %v875 = vsel %vm293, %v867, 0
    %877 = vmatpush.msra.mxu0 0.0
    %878 = vmatpush.msra.mxu0 0.0
    %879 = vmatpush.msra.mxu0 0.0
    %880 = vmatpush.msra.mxu0 0.0
    %881 = vmatpush.msra.mxu0 0.0
    %882 = vmatpush.msra.mxu0 0.0
    %883 = vmatpush.msra.mxu0 0.0
    %884 = vmatpush.msra.mxu0 0.0
    %885 = vmatpush.msra.mxu0 0.0
    %886 = vmatpush.msra.mxu0 0.0
    %887 = vmatpush.msra.mxu0 0.0
    %888 = vmatpush.msra.mxu0 0.0
    %889 = vmatpush.msra.mxu0 %v428
    %890 = vmatpush.msra.mxu0 %v427
    %891 = vmatpush.msra.mxu0 %v426
    %892 = vmatpush.msra.mxu0 %v425
    %893 = vmatmul.f32.gmra.mxu0 %v872
    %v894 = vpop.f32.mrf.mxu0
    %v895 = vadd.f32 %v869, %v894
    %896 = vmatmul.f32.gmra.mxu0 %v875
    %v897 = vpop.f32.mrf.mxu0
    %v898 = vadd.f32 %v869, %v897
    %899 = vdwg.mxu0
    %v900 = vadd.f32 %v283, %v895
    %v901 = vadd.f32 %v284, %v898
    %s902 = scalar_lea.vmem %s19, 1
    %v903 = vld [vmem:[%s902] sm:$0x1]
    %s904 = scalar_lea.vmem %s20, 1
    %v905 = vld [vmem:[%s904] sm:$0x1]
    %v906 = vsel %vm293, %v900, 0.0
    %907 = vadd.xlane.f32.xlu0 %v906
    %v908 = vpop.xlane.xlu0 %907
    %v909 = vsel %vm297, %v901, 0.0
    %910 = vadd.xlane.f32.xlu0 %v909
    %v911 = vpop.xlane.xlu0 %910
    %v912 = vmul.f32 %v908, %v307
    %v913 = vmul.f32 %v911, %v307
    %v914 = vsub.f32 %v900, %v912
    %v915 = vsub.f32 %v901, %v913
    %v916 = vmul.f32 %v914, %v914
    %v917 = vmul.f32 %v915, %v915
    %v918 = vsel %vm293, %v916, 0.0
    %919 = vadd.xlane.f32.xlu0 %v918
    %v920 = vpop.xlane.xlu0 %919
    %v921 = vsel %vm297, %v917, 0.0
    %922 = vadd.xlane.f32.xlu0 %v921
    %v923 = vpop.xlane.xlu0 %922
    %v924 = vmul.f32 %v920, 0.032258064
    %v925 = vmul.f32 %v923, 0.032258064
    %v927 = vperm.slane %v903, 0
    %v929 = vmul.f32 %v927, %v914
    %v930 = vmul.f32 %v927, %v915
    %v931 = vrsqrt.pop %v924
    %v932 = vmul.f32 %v931, %v924
    %v933 = vmul.f32 %v932, %v931
    %v934 = vmul.f32 0.5, %v933
    %v935 = vsub.f32 1.5, %v934
    %v936 = vmul.f32 %v931, %v935
    %v937 = vmul.f32 %v924, %v936
    %vm938 = vcmp.eq.f32.partialorder %v924, inf
    %v939 = vsel %vm938, %v924, %v937
    %vm940 = vcmp.eq.f32.partialorder %v924, 0.0
    %v941 = vand.u32 %v924, 2147483648
    %v942 = vsel %vm940, %v941, %v939
    %v943 = vrsqrt.pop %v925
    %v944 = vmul.f32 %v943, %v925
    %v945 = vmul.f32 %v944, %v943
    %v946 = vmul.f32 0.5, %v945
    %v947 = vsub.f32 1.5, %v946
    %v948 = vmul.f32 %v943, %v947
    %v949 = vmul.f32 %v925, %v948
    %vm950 = vcmp.eq.f32.partialorder %v925, inf
    %v951 = vsel %vm950, %v925, %v949
    %vm952 = vcmp.eq.f32.partialorder %v925, 0.0
    %v953 = vand.u32 %v925, 2147483648
    %v954 = vsel %vm952, %v953, %v951
    %v955 = vadd.f32 %v942, 1e-06
    %v956 = vadd.f32 %v954, 1e-06
    %v957 = vrcp.pop %v955
    %v958 = vmul.f32 %v955, %v957
    %v959 = vsub.f32 1.0, %v958
    %v960 = vmul.f32 %v957, %v959
    %v961 = vadd.f32 %v957, %v960
    %vm962 = vweird.f32 %v955
    %vm963 = vweird.f32 %v957
    %vm964 = vmor %vm962, %vm963
    %v965 = vsel %vm964, %v957, %v961
    %v966 = vand.u32 2147483647, %v955
    %vm967 = vcmp.eq.f32.partialorder %v966, 8.507059e+37
    %v968 = vand.u32 %v955, 2147483648
    %v969 = vor.u32 1.1754944e-38, %v968
    %v970 = vsel %vm967, %v969, %v965
    %v971 = vmul.f32 %v929, %v970
    %v972 = vrcp.pop %v956
    %v973 = vmul.f32 %v956, %v972
    %v974 = vsub.f32 1.0, %v973
    %v975 = vmul.f32 %v972, %v974
    %v976 = vadd.f32 %v972, %v975
    %vm977 = vweird.f32 %v956
    %vm978 = vweird.f32 %v972
    %vm979 = vmor %vm977, %vm978
    %v980 = vsel %vm979, %v972, %v976
    %v981 = vand.u32 2147483647, %v956
    %vm982 = vcmp.eq.f32.partialorder %v981, 8.507059e+37
    %v983 = vand.u32 %v956, 2147483648
    %v984 = vor.u32 1.1754944e-38, %v983
    %v985 = vsel %vm982, %v984, %v980
    %v986 = vmul.f32 %v930, %v985
    %v988 = vperm.slane %v905, 0
    %v990 = vadd.f32 %v971, %v988
    %v991 = vadd.f32 %v986, %v988
    %v992 = vld [vmem:[%s9] sm:$0xff]
    %v993 = vld [vmem:[%s9 + $0x8] sm:$0xff]
    %v994 = vld [vmem:[%s9 + $0x10] sm:$0xff]
    %v995 = vld [vmem:[%s9 + $0x18] sm:$0xff]
    %v996 = vld [vmem:[#allocation13] sm:$0x1]
    %v998 = vperm.slane %v996, 0
    %v1001 = vsel %vm293, %v990, 0
    %v1004 = vsel %vm293, %v991, 0
    %1006 = vmatpush.msra.mxu0 0.0
    %1007 = vmatpush.msra.mxu0 0.0
    %1008 = vmatpush.msra.mxu0 0.0
    %1009 = vmatpush.msra.mxu0 0.0
    %1010 = vmatpush.msra.mxu0 0.0
    %1011 = vmatpush.msra.mxu0 0.0
    %1012 = vmatpush.msra.mxu0 0.0
    %1013 = vmatpush.msra.mxu0 0.0
    %1014 = vmatpush.msra.mxu0 0.0
    %1015 = vmatpush.msra.mxu0 0.0
    %1016 = vmatpush.msra.mxu0 0.0
    %1017 = vmatpush.msra.mxu0 0.0
    %1018 = vmatpush.msra.mxu0 %v995
    %1019 = vmatpush.msra.mxu0 %v994
    %1020 = vmatpush.msra.mxu0 %v993
    %1021 = vmatpush.msra.mxu0 %v992
    %1022 = vmatmul.f32.gmra.mxu0 %v1001
    %v1023 = vpop.f32.mrf.mxu0
    %v1024 = vadd.f32 %v998, %v1023
    %1025 = vmatmul.f32.gmra.mxu0 %v1004
    %v1026 = vpop.f32.mrf.mxu0
    %v1027 = vadd.f32 %v998, %v1026
    %1028 = vdwg.mxu0
    %v1029 = vld [vmem:[#allocation14] sm:$0xff]
    %v1030 = vld [vmem:[#allocation14 + $0x8] sm:$0xff]
    %v1031 = vld [vmem:[#allocation14 + $0x10] sm:$0xff]
    %v1032 = vld [vmem:[#allocation14 + $0x18] sm:$0xff]
    %v1033 = vld [vmem:[#allocation16] sm:$0x1]
    %v1035 = vperm.slane %v1033, 0
    %v1038 = vsel %vm293, %v285, 0
    %v1041 = vsel %vm293, %v286, 0
    %1043 = vmatpush.msra.mxu0 0.0
    %1044 = vmatpush.msra.mxu0 0.0
    %1045 = vmatpush.msra.mxu0 0.0
    %1046 = vmatpush.msra.mxu0 0.0
    %1047 = vmatpush.msra.mxu0 0.0
    %1048 = vmatpush.msra.mxu0 0.0
    %1049 = vmatpush.msra.mxu0 0.0
    %1050 = vmatpush.msra.mxu0 0.0
    %1051 = vmatpush.msra.mxu0 0.0
    %1052 = vmatpush.msra.mxu0 0.0
    %1053 = vmatpush.msra.mxu0 0.0
    %1054 = vmatpush.msra.mxu0 0.0
    %1055 = vmatpush.msra.mxu0 %v1032
    %1056 = vmatpush.msra.mxu0 %v1031
    %1057 = vmatpush.msra.mxu0 %v1030
    %1058 = vmatpush.msra.mxu0 %v1029
    %1059 = vmatmul.f32.gmra.mxu0 %v1038
    %v1060 = vpop.f32.mrf.mxu0
    %v1061 = vadd.f32 %v1035, %v1060
    %1062 = vmatmul.f32.gmra.mxu0 %v1041
    %v1063 = vpop.f32.mrf.mxu0
    %v1064 = vadd.f32 %v1035, %v1063
    %1065 = vdwg.mxu0
    %v1066 = vld [vmem:[#allocation17] sm:$0xff]
    %v1067 = vld [vmem:[#allocation17 + $0x8] sm:$0xff]
    %v1068 = vld [vmem:[#allocation17 + $0x10] sm:$0xff]
    %v1069 = vld [vmem:[#allocation17 + $0x18] sm:$0xff]
    %v1070 = vld [vmem:[#allocation19] sm:$0x1]
    %v1072 = vsel %vm436, %v1024, 0
    %v1075 = vsel %vm436, %v1027, 0
    %v1078 = vsel %vm436, %v1061, 0
    %v1081 = vsel %vm436, %v1064, 0
    %1083 = vmatpush.xpose.msra.mxu0 0.0
    %1084 = vmatpush.xpose.msra.mxu0 0.0
    %1085 = vmatpush.xpose.msra.mxu0 0.0
    %1086 = vmatpush.xpose.msra.mxu0 0.0
    %1087 = vmatpush.xpose.msra.mxu0 0.0
    %1088 = vmatpush.xpose.msra.mxu0 0.0
    %1089 = vmatpush.xpose.msra.mxu0 0.0
    %1090 = vmatpush.xpose.msra.mxu0 0.0
    %1091 = vmatpush.xpose.msra.mxu0 0.0
    %1092 = vmatpush.xpose.msra.mxu0 0.0
    %1093 = vmatpush.xpose.msra.mxu0 0.0
    %1094 = vmatpush.xpose.msra.mxu0 0.0
    %1095 = vmatpush.xpose.msra.mxu0 0.0
    %1096 = vmatpush.xpose.msra.mxu0 0.0
    %1097 = vmatpush.xpose.msra.mxu0 %v1081
    %1098 = vmatpush.xpose.msra.mxu0 %v1078
    %1099 = vmatmul.f32.gmra.mxu0 %v1072
    %v1100 = vpop.f32.mrf.mxu0
    %v1101 = vadd.f32 0.0, %v1100
    %1102 = vmatmul.f32.gmra.mxu0 %v1075
    %v1103 = vpop.f32.mrf.mxu0
    %v1104 = vadd.f32 0.0, %v1103
    %1105 = vdwg.mxu0
    %v1106 = vmul.f32 %v1101, 0.35355338
    %v1107 = vmul.f32 %v1104, 0.35355338
    %v1108 = vadd.f32 %v1106, %v289
    %v1109 = vadd.f32 %v1107, %v290
    %v1110 = vsel %vm862, %v1108, -inf
    %1111 = vmax.xlane.f32.xlu0 %v1110
    %v1112 = vpop.xlane.xlu0 %1111
    %vm1113 = vcmask 128000
    %v1114 = vsel %vm1113, %v1109, -inf
    %1115 = vmax.xlane.f32.xlu0 %v1114
    %v1116 = vpop.xlane.xlu0 %1115
    %v1117 = vsub.f32 %v1108, %v1112
    %v1118 = vsub.f32 %v1109, %v1116
    %v1119 = vmul.f32 %v1117, 1.442695
    %v1120 = vpow.pop %v1119
    %v1121 = vmul.f32 %v1118, 1.442695
    %v1122 = vpow.pop %v1121
    %v1123 = vsel %vm862, %v1120, 0.0
    %1124 = vadd.xlane.f32.xlu0 %v1123
    %v1125 = vpop.xlane.xlu0 %1124
    %v1126 = vsel %vm1113, %v1122, 0.0
    %1127 = vadd.xlane.f32.xlu0 %v1126
    %v1128 = vpop.xlane.xlu0 %1127
    %v1129 = vrcp.pop %v1125
    %v1130 = vrcp.pop %v1128
    %v1131 = vmul.f32 %v1120, %v1129
    %v1132 = vmul.f32 %v1122, %v1130
    %1133 = vrot.lane.b32.xlu0 %v1061, 96
    %v1134 = vpop.permute.xlu0 %1133
    %1135 = vrot.lane.b32.xlu0 %v1064, 96
    %v1136 = vpop.permute.xlu0 %1135
    %v1140 = vsel %vm862, %v1131, 0
    %v1143 = vsel %vm862, %v1132, 0
    %1145 = vmatpush.msra.mxu0 0.0
    %1146 = vmatpush.msra.mxu0 0.0
    %1147 = vmatpush.msra.mxu0 0.0
    %1148 = vmatpush.msra.mxu0 0.0
    %1149 = vmatpush.msra.mxu0 0.0
    %1150 = vmatpush.msra.mxu0 0.0
    %1151 = vmatpush.msra.mxu0 0.0
    %1152 = vmatpush.msra.mxu0 0.0
    %1153 = vmatpush.msra.mxu0 0.0
    %1154 = vmatpush.msra.mxu0 0.0
    %1155 = vmatpush.msra.mxu0 0.0
    %1156 = vmatpush.msra.mxu0 0.0
    %1157 = vmatpush.msra.mxu0 0.0
    %1158 = vmatpush.msra.mxu0 0.0
    %1159 = vmatpush.msra.mxu0 %v1136
    %1160 = vmatpush.msra.mxu0 %v1134
    %1161 = vmatmul.f32.gmra.mxu0 %v1140
    %v1162 = vpop.f32.mrf.mxu0
    %v1163 = vadd.f32 0.0, %v1162
    %1164 = vmatmul.f32.gmra.mxu0 %v1143
    %v1165 = vpop.f32.mrf.mxu0
    %v1166 = vadd.f32 0.0, %v1165
    %1167 = vdwg.mxu0
    %1168 = vrot.lane.b32.xlu0 %v1024, 120
    %v1169 = vpop.permute.xlu0 %1168
    %1170 = vrot.lane.b32.xlu0 %v1027, 120
    %v1171 = vpop.permute.xlu0 %1170
    %1172 = vrot.lane.b32.xlu0 %v1061, 120
    %v1173 = vpop.permute.xlu0 %1172
    %1174 = vrot.lane.b32.xlu0 %v1064, 120
    %v1175 = vpop.permute.xlu0 %1174
    %v1176 = vsel %vm436, %v1169, 0
    %v1178 = vsel %vm436, %v1171, 0
    %v1180 = vsel %vm436, %v1173, 0
    %v1182 = vsel %vm436, %v1175, 0
    %1184 = vmatpush.xpose.msra.mxu0 0.0
    %1185 = vmatpush.xpose.msra.mxu0 0.0
    %1186 = vmatpush.xpose.msra.mxu0 0.0
    %1187 = vmatpush.xpose.msra.mxu0 0.0
    %1188 = vmatpush.xpose.msra.mxu0 0.0
    %1189 = vmatpush.xpose.msra.mxu0 0.0
    %1190 = vmatpush.xpose.msra.mxu0 0.0
    %1191 = vmatpush.xpose.msra.mxu0 0.0
    %1192 = vmatpush.xpose.msra.mxu0 0.0
    %1193 = vmatpush.xpose.msra.mxu0 0.0
    %1194 = vmatpush.xpose.msra.mxu0 0.0
    %1195 = vmatpush.xpose.msra.mxu0 0.0
    %1196 = vmatpush.xpose.msra.mxu0 0.0
    %1197 = vmatpush.xpose.msra.mxu0 0.0
    %1198 = vmatpush.xpose.msra.mxu0 %v1182
    %1199 = vmatpush.xpose.msra.mxu0 %v1180
    %1200 = vmatmul.f32.gmra.mxu0 %v1176
    %v1201 = vpop.f32.mrf.mxu0
    %v1202 = vadd.f32 0.0, %v1201
    %1203 = vmatmul.f32.gmra.mxu0 %v1178
    %v1204 = vpop.f32.mrf.mxu0
    %v1205 = vadd.f32 0.0, %v1204
    %1206 = vdwg.mxu0
    %v1207 = vmul.f32 %v1202, 0.35355338
    %v1208 = vmul.f32 %v1205, 0.35355338
    %v1209 = vadd.f32 %v1207, %v289
    %v1210 = vadd.f32 %v1208, %v290
    %v1211 = vsel %vm862, %v1209, -inf
    %1212 = vmax.xlane.f32.xlu0 %v1211
    %v1213 = vpop.xlane.xlu0 %1212
    %v1214 = vsel %vm1113, %v1210, -inf
    %1215 = vmax.xlane.f32.xlu0 %v1214
    %v1216 = vpop.xlane.xlu0 %1215
    %v1217 = vsub.f32 %v1209, %v1213
    %v1218 = vsub.f32 %v1210, %v1216
    %v1219 = vmul.f32 %v1217, 1.442695
    %v1220 = vpow.pop %v1219
    %v1221 = vmul.f32 %v1218, 1.442695
    %v1222 = vpow.pop %v1221
    %v1223 = vsel %vm862, %v1220, 0.0
    %1224 = vadd.xlane.f32.xlu0 %v1223
    %v1225 = vpop.xlane.xlu0 %1224
    %v1226 = vsel %vm1113, %v1222, 0.0
    %1227 = vadd.xlane.f32.xlu0 %v1226
    %v1228 = vpop.xlane.xlu0 %1227
    %v1229 = vrcp.pop %v1225
    %v1230 = vrcp.pop %v1228
    %v1231 = vmul.f32 %v1220, %v1229
    %v1232 = vmul.f32 %v1222, %v1230
    %1233 = vrot.lane.b32.xlu0 %v1061, 88
    %v1234 = vpop.permute.xlu0 %1233
    %1235 = vrot.lane.b32.xlu0 %v1064, 88
    %v1236 = vpop.permute.xlu0 %1235
    %v1240 = vsel %vm862, %v1231, 0
    %v1243 = vsel %vm862, %v1232, 0
    %1245 = vmatpush.msra.mxu0 0.0
    %1246 = vmatpush.msra.mxu0 0.0
    %1247 = vmatpush.msra.mxu0 0.0
    %1248 = vmatpush.msra.mxu0 0.0
    %1249 = vmatpush.msra.mxu0 0.0
    %1250 = vmatpush.msra.mxu0 0.0
    %1251 = vmatpush.msra.mxu0 0.0
    %1252 = vmatpush.msra.mxu0 0.0
    %1253 = vmatpush.msra.mxu0 0.0
    %1254 = vmatpush.msra.mxu0 0.0
    %1255 = vmatpush.msra.mxu0 0.0
    %1256 = vmatpush.msra.mxu0 0.0
    %1257 = vmatpush.msra.mxu0 0.0
    %1258 = vmatpush.msra.mxu0 0.0
    %1259 = vmatpush.msra.mxu0 %v1236
    %1260 = vmatpush.msra.mxu0 %v1234
    %1261 = vmatmul.f32.gmra.mxu0 %v1240
    %v1262 = vpop.f32.mrf.mxu0
    %v1263 = vadd.f32 0.0, %v1262
    %1264 = vmatmul.f32.gmra.mxu0 %v1243
    %v1265 = vpop.f32.mrf.mxu0
    %v1266 = vadd.f32 0.0, %v1265
    %1267 = vdwg.mxu0
    %1268 = vrot.lane.b32.xlu0 %v1024, 112
    %v1269 = vpop.permute.xlu0 %1268
    %1270 = vrot.lane.b32.xlu0 %v1027, 112
    %v1271 = vpop.permute.xlu0 %1270
    %1272 = vrot.lane.b32.xlu0 %v1061, 112
    %v1273 = vpop.permute.xlu0 %1272
    %1274 = vrot.lane.b32.xlu0 %v1064, 112
    %v1275 = vpop.permute.xlu0 %1274
    %v1276 = vsel %vm436, %v1269, 0
    %v1278 = vsel %vm436, %v1271, 0
    %v1280 = vsel %vm436, %v1273, 0
    %v1282 = vsel %vm436, %v1275, 0
    %1284 = vmatpush.xpose.msra.mxu0 0.0
    %1285 = vmatpush.xpose.msra.mxu0 0.0
    %1286 = vmatpush.xpose.msra.mxu0 0.0
    %1287 = vmatpush.xpose.msra.mxu0 0.0
    %1288 = vmatpush.xpose.msra.mxu0 0.0
    %1289 = vmatpush.xpose.msra.mxu0 0.0
    %1290 = vmatpush.xpose.msra.mxu0 0.0
    %1291 = vmatpush.xpose.msra.mxu0 0.0
    %1292 = vmatpush.xpose.msra.mxu0 0.0
    %1293 = vmatpush.xpose.msra.mxu0 0.0
    %1294 = vmatpush.xpose.msra.mxu0 0.0
    %1295 = vmatpush.xpose.msra.mxu0 0.0
    %1296 = vmatpush.xpose.msra.mxu0 0.0
    %1297 = vmatpush.xpose.msra.mxu0 0.0
    %1298 = vmatpush.xpose.msra.mxu0 %v1282
    %1299 = vmatpush.xpose.msra.mxu0 %v1280
    %1300 = vmatmul.f32.gmra.mxu0 %v1276
    %v1301 = vpop.f32.mrf.mxu0
    %v1302 = vadd.f32 0.0, %v1301
    %1303 = vmatmul.f32.gmra.mxu0 %v1278
    %v1304 = vpop.f32.mrf.mxu0
    %v1305 = vadd.f32 0.0, %v1304
    %1306 = vdwg.mxu0
    %v1307 = vmul.f32 %v1302, 0.35355338
    %v1308 = vmul.f32 %v1305, 0.35355338
    %v1309 = vadd.f32 %v1307, %v289
    %v1310 = vadd.f32 %v1308, %v290
    %v1311 = vsel %vm862, %v1309, -inf
    %1312 = vmax.xlane.f32.xlu0 %v1311
    %v1313 = vpop.xlane.xlu0 %1312
    %v1314 = vsel %vm1113, %v1310, -inf
    %1315 = vmax.xlane.f32.xlu0 %v1314
    %v1316 = vpop.xlane.xlu0 %1315
    %v1317 = vsub.f32 %v1309, %v1313
    %v1318 = vsub.f32 %v1310, %v1316
    %v1319 = vmul.f32 %v1317, 1.442695
    %v1320 = vpow.pop %v1319
    %v1321 = vmul.f32 %v1318, 1.442695
    %v1322 = vpow.pop %v1321
    %v1323 = vsel %vm862, %v1320, 0.0
    %1324 = vadd.xlane.f32.xlu0 %v1323
    %v1325 = vpop.xlane.xlu0 %1324
    %v1326 = vsel %vm1113, %v1322, 0.0
    %1327 = vadd.xlane.f32.xlu0 %v1326
    %v1328 = vpop.xlane.xlu0 %1327
    %v1329 = vrcp.pop %v1325
    %v1330 = vrcp.pop %v1328
    %v1331 = vmul.f32 %v1320, %v1329
    %v1332 = vmul.f32 %v1322, %v1330
    %1333 = vrot.lane.b32.xlu0 %v1061, 80
    %v1334 = vpop.permute.xlu0 %1333
    %1335 = vrot.lane.b32.xlu0 %v1064, 80
    %v1336 = vpop.permute.xlu0 %1335
    %v1340 = vsel %vm862, %v1331, 0
    %v1343 = vsel %vm862, %v1332, 0
    %1345 = vmatpush.msra.mxu0 0.0
    %1346 = vmatpush.msra.mxu0 0.0
    %1347 = vmatpush.msra.mxu0 0.0
    %1348 = vmatpush.msra.mxu0 0.0
    %1349 = vmatpush.msra.mxu0 0.0
    %1350 = vmatpush.msra.mxu0 0.0
    %1351 = vmatpush.msra.mxu0 0.0
    %1352 = vmatpush.msra.mxu0 0.0
    %1353 = vmatpush.msra.mxu0 0.0
    %1354 = vmatpush.msra.mxu0 0.0
    %1355 = vmatpush.msra.mxu0 0.0
    %1356 = vmatpush.msra.mxu0 0.0
    %1357 = vmatpush.msra.mxu0 0.0
    %1358 = vmatpush.msra.mxu0 0.0
    %1359 = vmatpush.msra.mxu0 %v1336
    %1360 = vmatpush.msra.mxu0 %v1334
    %1361 = vmatmul.f32.gmra.mxu0 %v1340
    %v1362 = vpop.f32.mrf.mxu0
    %v1363 = vadd.f32 0.0, %v1362
    %1364 = vmatmul.f32.gmra.mxu0 %v1343
    %v1365 = vpop.f32.mrf.mxu0
    %v1366 = vadd.f32 0.0, %v1365
    %1367 = vdwg.mxu0
    %1368 = vrot.lane.b32.xlu0 %v1024, 104
    %v1369 = vpop.permute.xlu0 %1368
    %1370 = vrot.lane.b32.xlu0 %v1027, 104
    %v1371 = vpop.permute.xlu0 %1370
    %1372 = vrot.lane.b32.xlu0 %v1061, 104
    %v1373 = vpop.permute.xlu0 %1372
    %1374 = vrot.lane.b32.xlu0 %v1064, 104
    %v1375 = vpop.permute.xlu0 %1374
    %v1376 = vsel %vm436, %v1369, 0
    %v1378 = vsel %vm436, %v1371, 0
    %v1380 = vsel %vm436, %v1373, 0
    %v1382 = vsel %vm436, %v1375, 0
    %1384 = vmatpush.xpose.msra.mxu0 0.0
    %1385 = vmatpush.xpose.msra.mxu0 0.0
    %1386 = vmatpush.xpose.msra.mxu0 0.0
    %1387 = vmatpush.xpose.msra.mxu0 0.0
    %1388 = vmatpush.xpose.msra.mxu0 0.0
    %1389 = vmatpush.xpose.msra.mxu0 0.0
    %1390 = vmatpush.xpose.msra.mxu0 0.0
    %1391 = vmatpush.xpose.msra.mxu0 0.0
    %1392 = vmatpush.xpose.msra.mxu0 0.0
    %1393 = vmatpush.xpose.msra.mxu0 0.0
    %1394 = vmatpush.xpose.msra.mxu0 0.0
    %1395 = vmatpush.xpose.msra.mxu0 0.0
    %1396 = vmatpush.xpose.msra.mxu0 0.0
    %1397 = vmatpush.xpose.msra.mxu0 0.0
    %1398 = vmatpush.xpose.msra.mxu0 %v1382
    %1399 = vmatpush.xpose.msra.mxu0 %v1380
    %1400 = vmatmul.f32.gmra.mxu0 %v1376
    %v1401 = vpop.f32.mrf.mxu0
    %v1402 = vadd.f32 0.0, %v1401
    %1403 = vmatmul.f32.gmra.mxu0 %v1378
    %v1404 = vpop.f32.mrf.mxu0
    %v1405 = vadd.f32 0.0, %v1404
    %1406 = vdwg.mxu0
    %v1407 = vmul.f32 %v1402, 0.35355338
    %v1408 = vmul.f32 %v1405, 0.35355338
    %v1409 = vadd.f32 %v1407, %v289
    %v1410 = vadd.f32 %v1408, %v290
    %v1411 = vsel %vm862, %v1409, -inf
    %1412 = vmax.xlane.f32.xlu0 %v1411
    %v1413 = vpop.xlane.xlu0 %1412
    %v1414 = vsel %vm1113, %v1410, -inf
    %1415 = vmax.xlane.f32.xlu0 %v1414
    %v1416 = vpop.xlane.xlu0 %1415
    %v1417 = vsub.f32 %v1409, %v1413
    %v1418 = vsub.f32 %v1410, %v1416
    %v1419 = vmul.f32 %v1417, 1.442695
    %v1420 = vpow.pop %v1419
    %v1421 = vmul.f32 %v1418, 1.442695
    %v1422 = vpow.pop %v1421
    %v1423 = vsel %vm862, %v1420, 0.0
    %1424 = vadd.xlane.f32.xlu0 %v1423
    %v1425 = vpop.xlane.xlu0 %1424
    %v1426 = vsel %vm1113, %v1422, 0.0
    %1427 = vadd.xlane.f32.xlu0 %v1426
    %v1428 = vpop.xlane.xlu0 %1427
    %v1429 = vrcp.pop %v1425
    %v1430 = vrcp.pop %v1428
    %v1431 = vmul.f32 %v1420, %v1429
    %v1432 = vmul.f32 %v1422, %v1430
    %1433 = vrot.lane.b32.xlu0 %v1061, 72
    %v1434 = vpop.permute.xlu0 %1433
    %1435 = vrot.lane.b32.xlu0 %v1064, 72
    %v1436 = vpop.permute.xlu0 %1435
    %v1440 = vsel %vm862, %v1431, 0
    %v1443 = vsel %vm862, %v1432, 0
    %1445 = vmatpush.msra.mxu0 0.0
    %1446 = vmatpush.msra.mxu0 0.0
    %1447 = vmatpush.msra.mxu0 0.0
    %1448 = vmatpush.msra.mxu0 0.0
    %1449 = vmatpush.msra.mxu0 0.0
    %1450 = vmatpush.msra.mxu0 0.0
    %1451 = vmatpush.msra.mxu0 0.0
    %1452 = vmatpush.msra.mxu0 0.0
    %1453 = vmatpush.msra.mxu0 0.0
    %1454 = vmatpush.msra.mxu0 0.0
    %1455 = vmatpush.msra.mxu0 0.0
    %1456 = vmatpush.msra.mxu0 0.0
    %1457 = vmatpush.msra.mxu0 0.0
    %1458 = vmatpush.msra.mxu0 0.0
    %1459 = vmatpush.msra.mxu0 %v1436
    %1460 = vmatpush.msra.mxu0 %v1434
    %1461 = vmatmul.f32.gmra.mxu0 %v1440
    %v1462 = vpop.f32.mrf.mxu0
    %v1463 = vadd.f32 0.0, %v1462
    %1464 = vmatmul.f32.gmra.mxu0 %v1443
    %v1465 = vpop.f32.mrf.mxu0
    %v1466 = vadd.f32 0.0, %v1465
    %1467 = vdwg.mxu0
    %1470 = vrot.lane.b32.xlu0 %v1263, 8
    %v1471 = vpop.permute.xlu0 %1470
    %1472 = vrot.lane.b32.xlu0 %v1266, 8
    %v1473 = vpop.permute.xlu0 %1472
    %1478 = vrot.lane.b32.xlu0 %v1363, 16
    %v1479 = vpop.permute.xlu0 %1478
    %1480 = vrot.lane.b32.xlu0 %v1366, 16
    %v1481 = vpop.permute.xlu0 %1480
    %1486 = vrot.lane.b32.xlu0 %v1463, 24
    %v1487 = vpop.permute.xlu0 %1486
    %1488 = vrot.lane.b32.xlu0 %v1466, 24
    %v1489 = vpop.permute.xlu0 %1488
    %v1492 = vsel %vm436, %v1163, %v1471
    %v1493 = vsel %vm436, %v1166, %v1473
    %v1494 = vsel %vm862, %v1492, %v1479
    %v1495 = vsel %vm862, %v1493, %v1481
    %v1496 = vsel %vm865, %v1494, %v1487
    %v1497 = vsel %vm865, %v1495, %v1489
    %v1499 = vperm.slane %v1070, 0
    %v1502 = vsel %vm293, %v1496, 0
    %v1505 = vsel %vm293, %v1497, 0
    %1507 = vmatpush.msra.mxu0 0.0
    %1508 = vmatpush.msra.mxu0 0.0
    %1509 = vmatpush.msra.mxu0 0.0
    %1510 = vmatpush.msra.mxu0 0.0
    %1511 = vmatpush.msra.mxu0 0.0
    %1512 = vmatpush.msra.mxu0 0.0
    %1513 = vmatpush.msra.mxu0 0.0
    %1514 = vmatpush.msra.mxu0 0.0
    %1515 = vmatpush.msra.mxu0 0.0
    %1516 = vmatpush.msra.mxu0 0.0
    %1517 = vmatpush.msra.mxu0 0.0
    %1518 = vmatpush.msra.mxu0 0.0
    %1519 = vmatpush.msra.mxu0 %v1069
    %1520 = vmatpush.msra.mxu0 %v1068
    %1521 = vmatpush.msra.mxu0 %v1067
    %1522 = vmatpush.msra.mxu0 %v1066
    %1523 = vmatmul.f32.gmra.mxu0 %v1502
    %v1524 = vpop.f32.mrf.mxu0
    %v1525 = vadd.f32 %v1499, %v1524
    %1526 = vmatmul.f32.gmra.mxu0 %v1505
    %v1527 = vpop.f32.mrf.mxu0
    %v1528 = vadd.f32 %v1499, %v1527
    %1529 = vdwg.mxu0
    %v1530 = vadd.f32 %v900, %v1525
    %v1531 = vadd.f32 %v901, %v1528
    %s1532 = scalar_lea.vmem %s19, 2
    %v1533 = vld [vmem:[%s1532] sm:$0x1]
    %s1534 = scalar_lea.vmem %s20, 2
    %v1535 = vld [vmem:[%s1534] sm:$0x1]
    %v1536 = vsel %vm293, %v1530, 0.0
    %1537 = vadd.xlane.f32.xlu0 %v1536
    %v1538 = vpop.xlane.xlu0 %1537
    %v1539 = vsel %vm297, %v1531, 0.0
    %1540 = vadd.xlane.f32.xlu0 %v1539
    %v1541 = vpop.xlane.xlu0 %1540
    %v1542 = vmul.f32 %v1538, %v307
    %v1543 = vmul.f32 %v1541, %v307
    %v1544 = vsub.f32 %v1530, %v1542
    %v1545 = vsub.f32 %v1531, %v1543
    %v1546 = vmul.f32 %v1544, %v1544
    %v1547 = vmul.f32 %v1545, %v1545
    %v1548 = vsel %vm293, %v1546, 0.0
    %1549 = vadd.xlane.f32.xlu0 %v1548
    %v1550 = vpop.xlane.xlu0 %1549
    %v1551 = vsel %vm297, %v1547, 0.0
    %1552 = vadd.xlane.f32.xlu0 %v1551
    %v1553 = vpop.xlane.xlu0 %1552
    %v1554 = vmul.f32 %v1550, 0.032258064
    %v1555 = vmul.f32 %v1553, 0.032258064
    %v1557 = vperm.slane %v1533, 0
    %v1559 = vmul.f32 %v1557, %v1544
    %v1560 = vmul.f32 %v1557, %v1545
    %v1561 = vrsqrt.pop %v1554
    %v1562 = vmul.f32 %v1561, %v1554
    %v1563 = vmul.f32 %v1562, %v1561
    %v1564 = vmul.f32 0.5, %v1563
    %v1565 = vsub.f32 1.5, %v1564
    %v1566 = vmul.f32 %v1561, %v1565
    %v1567 = vmul.f32 %v1554, %v1566
    %vm1568 = vcmp.eq.f32.partialorder %v1554, inf
    %v1569 = vsel %vm1568, %v1554, %v1567
    %vm1570 = vcmp.eq.f32.partialorder %v1554, 0.0
    %v1571 = vand.u32 %v1554, 2147483648
    %v1572 = vsel %vm1570, %v1571, %v1569
    %v1573 = vrsqrt.pop %v1555
    %v1574 = vmul.f32 %v1573, %v1555
    %v1575 = vmul.f32 %v1574, %v1573
    %v1576 = vmul.f32 0.5, %v1575
    %v1577 = vsub.f32 1.5, %v1576
    %v1578 = vmul.f32 %v1573, %v1577
    %v1579 = vmul.f32 %v1555, %v1578
    %vm1580 = vcmp.eq.f32.partialorder %v1555, inf
    %v1581 = vsel %vm1580, %v1555, %v1579
    %vm1582 = vcmp.eq.f32.partialorder %v1555, 0.0
    %v1583 = vand.u32 %v1555, 2147483648
    %v1584 = vsel %vm1582, %v1583, %v1581
    %v1585 = vadd.f32 %v1572, 1e-06
    %v1586 = vadd.f32 %v1584, 1e-06
    %v1587 = vrcp.pop %v1585
    %v1588 = vmul.f32 %v1585, %v1587
    %v1589 = vsub.f32 1.0, %v1588
    %v1590 = vmul.f32 %v1587, %v1589
    %v1591 = vadd.f32 %v1587, %v1590
    %vm1592 = vweird.f32 %v1585
    %vm1593 = vweird.f32 %v1587
    %vm1594 = vmor %vm1592, %vm1593
    %v1595 = vsel %vm1594, %v1587, %v1591
    %v1596 = vand.u32 2147483647, %v1585
    %vm1597 = vcmp.eq.f32.partialorder %v1596, 8.507059e+37
    %v1598 = vand.u32 %v1585, 2147483648
    %v1599 = vor.u32 1.1754944e-38, %v1598
    %v1600 = vsel %vm1597, %v1599, %v1595
    %v1601 = vmul.f32 %v1559, %v1600
    %v1602 = vrcp.pop %v1586
    %v1603 = vmul.f32 %v1586, %v1602
    %v1604 = vsub.f32 1.0, %v1603
    %v1605 = vmul.f32 %v1602, %v1604
    %v1606 = vadd.f32 %v1602, %v1605
    %vm1607 = vweird.f32 %v1586
    %vm1608 = vweird.f32 %v1602
    %vm1609 = vmor %vm1607, %vm1608
    %v1610 = vsel %vm1609, %v1602, %v1606
    %v1611 = vand.u32 2147483647, %v1586
    %vm1612 = vcmp.eq.f32.partialorder %v1611, 8.507059e+37
    %v1613 = vand.u32 %v1586, 2147483648
    %v1614 = vor.u32 1.1754944e-38, %v1613
    %v1615 = vsel %vm1612, %v1614, %v1610
    %v1616 = vmul.f32 %v1560, %v1615
    %v1618 = vperm.slane %v1535, 0
    %v1620 = vadd.f32 %v1601, %v1618
    %v1621 = vadd.f32 %v1616, %v1618
    %v1622 = vld [vmem:[#allocation20] sm:$0xff]
    %v1623 = vld [vmem:[#allocation20 + $0x8] sm:$0xff]
    %v1624 = vld [vmem:[#allocation20 + $0x10] sm:$0xff]
    %v1625 = vld [vmem:[#allocation20 + $0x18] sm:$0xff]
    %v1626 = vld [vmem:[#allocation22] sm:$0x1]
    %v1628 = vperm.slane %v1626, 0
    %v1631 = vsel %vm293, %v1620, 0
    %v1634 = vsel %vm293, %v1621, 0
    %1636 = vmatpush.msra.mxu0 0.0
    %1637 = vmatpush.msra.mxu0 0.0
    %1638 = vmatpush.msra.mxu0 0.0
    %1639 = vmatpush.msra.mxu0 0.0
    %1640 = vmatpush.msra.mxu0 0.0
    %1641 = vmatpush.msra.mxu0 0.0
    %1642 = vmatpush.msra.mxu0 0.0
    %1643 = vmatpush.msra.mxu0 0.0
    %1644 = vmatpush.msra.mxu0 0.0
    %1645 = vmatpush.msra.mxu0 0.0
    %1646 = vmatpush.msra.mxu0 0.0
    %1647 = vmatpush.msra.mxu0 0.0
    %1648 = vmatpush.msra.mxu0 %v1625
    %1649 = vmatpush.msra.mxu0 %v1624
    %1650 = vmatpush.msra.mxu0 %v1623
    %1651 = vmatpush.msra.mxu0 %v1622
    %1652 = vmatmul.f32.gmra.mxu0 %v1631
    %v1653 = vpop.f32.mrf.mxu0
    %v1654 = vadd.f32 %v1628, %v1653
    %1655 = vmatmul.f32.gmra.mxu0 %v1634
    %v1656 = vpop.f32.mrf.mxu0
    %v1657 = vadd.f32 %v1628, %v1656
    %1658 = vdwg.mxu0
    %v1659 = vmax.f32 %v1654, 0.0
    %v1660 = vmax.f32 %v1657, 0.0
    %v1661 = vld [vmem:[%s17] sm:$0xff]
    %v1662 = vld [vmem:[%s17 + $0x8] sm:$0xff]
    %v1663 = vld [vmem:[%s17 + $0x10] sm:$0xff]
    %v1664 = vld [vmem:[%s17 + $0x18] sm:$0xff]
    %v1665 = vld [vmem:[%s17 + $0x20] sm:$0xff]
    %v1666 = vld [vmem:[%s17 + $0x28] sm:$0xff]
    %v1667 = vld [vmem:[%s17 + $0x30] sm:$0xff]
    %v1668 = vld [vmem:[%s17 + $0x38] sm:$0xff]
    %vm1669 = vcmask 523264
    %v1671 = vsel %vm1669, %v1659, 0
    %v1674 = vsel %vm1669, %v1660, 0
    %1676 = vmatpush.msra.mxu0 0.0
    %1677 = vmatpush.msra.mxu0 0.0
    %1678 = vmatpush.msra.mxu0 0.0
    %1679 = vmatpush.msra.mxu0 0.0
    %1680 = vmatpush.msra.mxu0 0.0
    %1681 = vmatpush.msra.mxu0 0.0
    %1682 = vmatpush.msra.mxu0 0.0
    %1683 = vmatpush.msra.mxu0 0.0
    %1684 = vmatpush.msra.mxu0 %v1668
    %1685 = vmatpush.msra.mxu0 %v1667
    %1686 = vmatpush.msra.mxu0 %v1666
    %1687 = vmatpush.msra.mxu0 %v1665
    %1688 = vmatpush.msra.mxu0 %v1664
    %1689 = vmatpush.msra.mxu0 %v1663
    %1690 = vmatpush.msra.mxu0 %v1662
    %1691 = vmatpush.msra.mxu0 %v1661
    %1692 = vmatmul.f32.gmra.mxu0 %v1671
    %v1693 = vpop.f32.mrf.mxu0
    %v1694 = vadd.f32 0.0, %v1693
    %1695 = vmatmul.f32.gmra.mxu0 %v1674
    %v1696 = vpop.f32.mrf.mxu0
    %v1697 = vadd.f32 0.0, %v1696
    %1698 = vdwg.mxu0
    %v1699 = vadd.f32 %v1530, %v1694
    %v1700 = vadd.f32 %v1531, %v1697
    %v1701 = vld [vmem:[%s18] sm:$0x1]
    %v1703 = vperm.slane %v1701, 0
    %v1705 = vadd.f32 %v1699, %v1703
    %v1706 = vadd.f32 %v1700, %v1703
    %s1707 = scalar_lea.vmem %s19, 3
    %v1708 = vld [vmem:[%s1707] sm:$0x1]
    %s1709 = scalar_lea.vmem %s20, 3
    %v1710 = vld [vmem:[%s1709] sm:$0x1]
    %v1711 = vsel %vm293, %v1705, 0.0
    %1712 = vadd.xlane.f32.xlu0 %v1711
    %v1713 = vpop.xlane.xlu0 %1712
    %v1714 = vsel %vm297, %v1706, 0.0
    %1715 = vadd.xlane.f32.xlu0 %v1714
    %v1716 = vpop.xlane.xlu0 %1715
    %v1717 = vmul.f32 %v1713, %v307
    %v1718 = vmul.f32 %v1716, %v307
    %v1719 = vsub.f32 %v1705, %v1717
    %v1720 = vsub.f32 %v1706, %v1718
    %v1721 = vmul.f32 %v1719, %v1719
    %v1722 = vmul.f32 %v1720, %v1720
    %v1723 = vsel %vm293, %v1721, 0.0
    %1724 = vadd.xlane.f32.xlu0 %v1723
    %v1725 = vpop.xlane.xlu0 %1724
    %v1726 = vsel %vm297, %v1722, 0.0
    %1727 = vadd.xlane.f32.xlu0 %v1726
    %v1728 = vpop.xlane.xlu0 %1727
    %v1729 = vmul.f32 %v1725, 0.032258064
    %v1730 = vmul.f32 %v1728, 0.032258064
    %v1732 = vperm.slane %v1708, 0
    %v1734 = vmul.f32 %v1732, %v1719
    %v1735 = vmul.f32 %v1732, %v1720
    %v1736 = vrsqrt.pop %v1729
    %v1737 = vmul.f32 %v1736, %v1729
    %v1738 = vmul.f32 %v1737, %v1736
    %v1739 = vmul.f32 0.5, %v1738
    %v1740 = vsub.f32 1.5, %v1739
    %v1741 = vmul.f32 %v1736, %v1740
    %v1742 = vmul.f32 %v1729, %v1741
    %vm1743 = vcmp.eq.f32.partialorder %v1729, inf
    %v1744 = vsel %vm1743, %v1729, %v1742
    %vm1745 = vcmp.eq.f32.partialorder %v1729, 0.0
    %v1746 = vand.u32 %v1729, 2147483648
    %v1747 = vsel %vm1745, %v1746, %v1744
    %v1748 = vrsqrt.pop %v1730
    %v1749 = vmul.f32 %v1748, %v1730
    %v1750 = vmul.f32 %v1749, %v1748
    %v1751 = vmul.f32 0.5, %v1750
    %v1752 = vsub.f32 1.5, %v1751
    %v1753 = vmul.f32 %v1748, %v1752
    %v1754 = vmul.f32 %v1730, %v1753
    %vm1755 = vcmp.eq.f32.partialorder %v1730, inf
    %v1756 = vsel %vm1755, %v1730, %v1754
    %vm1757 = vcmp.eq.f32.partialorder %v1730, 0.0
    %v1758 = vand.u32 %v1730, 2147483648
    %v1759 = vsel %vm1757, %v1758, %v1756
    %v1760 = vadd.f32 %v1747, 1e-06
    %v1761 = vadd.f32 %v1759, 1e-06
    %v1762 = vrcp.pop %v1760
    %v1763 = vmul.f32 %v1760, %v1762
    %v1764 = vsub.f32 1.0, %v1763
    %v1765 = vmul.f32 %v1762, %v1764
    %v1766 = vadd.f32 %v1762, %v1765
    %vm1767 = vweird.f32 %v1760
    %vm1768 = vweird.f32 %v1762
    %vm1769 = vmor %vm1767, %vm1768
    %v1770 = vsel %vm1769, %v1762, %v1766
    %v1771 = vand.u32 2147483647, %v1760
    %vm1772 = vcmp.eq.f32.partialorder %v1771, 8.507059e+37
    %v1773 = vand.u32 %v1760, 2147483648
    %v1774 = vor.u32 1.1754944e-38, %v1773
    %v1775 = vsel %vm1772, %v1774, %v1770
    %v1776 = vmul.f32 %v1734, %v1775
    %v1777 = vrcp.pop %v1761
    %v1778 = vmul.f32 %v1761, %v1777
    %v1779 = vsub.f32 1.0, %v1778
    %v1780 = vmul.f32 %v1777, %v1779
    %v1781 = vadd.f32 %v1777, %v1780
    %vm1782 = vweird.f32 %v1761
    %vm1783 = vweird.f32 %v1777
    %vm1784 = vmor %vm1782, %vm1783
    %v1785 = vsel %vm1784, %v1777, %v1781
    %v1786 = vand.u32 2147483647, %v1761
    %vm1787 = vcmp.eq.f32.partialorder %v1786, 8.507059e+37
    %v1788 = vand.u32 %v1761, 2147483648
    %v1789 = vor.u32 1.1754944e-38, %v1788
    %v1790 = vsel %vm1787, %v1789, %v1785
    %v1791 = vmul.f32 %v1735, %v1790
    %v1793 = vperm.slane %v1710, 0
    %v1795 = vadd.f32 %v1776, %v1793
    %v1796 = vadd.f32 %v1791, %v1793
    %s1797 = scalar_lea.vmem %s5, 32
    %v1798 = vld [vmem:[%s1797] sm:$0xff]
    %v1799 = vld [vmem:[%s1797 + $0x8] sm:$0xff]
    %v1800 = vld [vmem:[%s1797 + $0x10] sm:$0xff]
    %v1801 = vld [vmem:[%s1797 + $0x18] sm:$0xff]
    %s1802 = scalar_lea.vmem %s6, 1
    %v1803 = vld [vmem:[%s1802] sm:$0x1]
    %v1805 = vperm.slane %v1803, 0
    %v1808 = vsel %vm293, %v1795, 0
    %v1811 = vsel %vm293, %v1796, 0
    %1813 = vmatpush.msra.mxu0 0.0
    %1814 = vmatpush.msra.mxu0 0.0
    %1815 = vmatpush.msra.mxu0 0.0
    %1816 = vmatpush.msra.mxu0 0.0
    %1817 = vmatpush.msra.mxu0 0.0
    %1818 = vmatpush.msra.mxu0 0.0
    %1819 = vmatpush.msra.mxu0 0.0
    %1820 = vmatpush.msra.mxu0 0.0
    %1821 = vmatpush.msra.mxu0 0.0
    %1822 = vmatpush.msra.mxu0 0.0
    %1823 = vmatpush.msra.mxu0 0.0
    %1824 = vmatpush.msra.mxu0 0.0
    %1825 = vmatpush.msra.mxu0 %v1801
    %1826 = vmatpush.msra.mxu0 %v1800
    %1827 = vmatpush.msra.mxu0 %v1799
    %1828 = vmatpush.msra.mxu0 %v1798
    %1829 = vmatmul.f32.gmra.mxu0 %v1808
    %v1830 = vpop.f32.mrf.mxu0
    %v1831 = vadd.f32 %v1805, %v1830
    %1832 = vmatmul.f32.gmra.mxu0 %v1811
    %v1833 = vpop.f32.mrf.mxu0
    %v1834 = vadd.f32 %v1805, %v1833
    %1835 = vdwg.mxu0
    %s1836 = scalar_lea.vmem %s7, 32
    %v1837 = vld [vmem:[%s1836] sm:$0xff]
    %v1838 = vld [vmem:[%s1836 + $0x8] sm:$0xff]
    %v1839 = vld [vmem:[%s1836 + $0x10] sm:$0xff]
    %v1840 = vld [vmem:[%s1836 + $0x18] sm:$0xff]
    %s1841 = scalar_lea.vmem [#allocation11], 1
    %v1842 = vld [vmem:[%s1841] sm:$0x1]
    %1845 = vrot.lane.b32.xlu0 %v1831, 96
    %v1846 = vpop.permute.xlu0 %1845
    %1847 = vrot.lane.b32.xlu0 %v1834, 96
    %v1848 = vpop.permute.xlu0 %1847
    %v1849 = vsel %vm436, %v1831, 0
    %v1851 = vsel %vm436, %v1834, 0
    %v1853 = vsel %vm436, %v1846, 0
    %v1855 = vsel %vm436, %v1848, 0
    %1857 = vmatpush.xpose.msra.mxu0 0.0
    %1858 = vmatpush.xpose.msra.mxu0 0.0
    %1859 = vmatpush.xpose.msra.mxu0 0.0
    %1860 = vmatpush.xpose.msra.mxu0 0.0
    %1861 = vmatpush.xpose.msra.mxu0 0.0
    %1862 = vmatpush.xpose.msra.mxu0 0.0
    %1863 = vmatpush.xpose.msra.mxu0 0.0
    %1864 = vmatpush.xpose.msra.mxu0 0.0
    %1865 = vmatpush.xpose.msra.mxu0 0.0
    %1866 = vmatpush.xpose.msra.mxu0 0.0
    %1867 = vmatpush.xpose.msra.mxu0 0.0
    %1868 = vmatpush.xpose.msra.mxu0 0.0
    %1869 = vmatpush.xpose.msra.mxu0 0.0
    %1870 = vmatpush.xpose.msra.mxu0 0.0
    %1871 = vmatpush.xpose.msra.mxu0 %v1855
    %1872 = vmatpush.xpose.msra.mxu0 %v1853
    %1873 = vmatmul.f32.gmra.mxu0 %v1849
    %v1874 = vpop.f32.mrf.mxu0
    %v1875 = vadd.f32 0.0, %v1874
    %1876 = vmatmul.f32.gmra.mxu0 %v1851
    %v1877 = vpop.f32.mrf.mxu0
    %v1878 = vadd.f32 0.0, %v1877
    %1879 = vdwg.mxu0
    %v1880 = vmul.f32 %v1875, 0.35355338
    %v1881 = vmul.f32 %v1878, 0.35355338
    %v1882 = vadd.f32 %v1880, %v287
    %v1883 = vadd.f32 %v1881, %v288
    %v1884 = vsel %vm472, %v1882, -inf
    %1885 = vmax.xlane.f32.xlu0 %v1884
    %v1886 = vpop.xlane.xlu0 %1885
    %v1887 = vsel %vm476, %v1883, -inf
    %1888 = vmax.xlane.f32.xlu0 %v1887
    %v1889 = vpop.xlane.xlu0 %1888
    %v1890 = vsub.f32 %v1882, %v1886
    %v1891 = vsub.f32 %v1883, %v1889
    %v1892 = vmul.f32 %v1890, 1.442695
    %v1893 = vpow.pop %v1892
    %v1894 = vmul.f32 %v1891, 1.442695
    %v1895 = vpow.pop %v1894
    %v1896 = vsel %vm472, %v1893, 0.0
    %1897 = vadd.xlane.f32.xlu0 %v1896
    %v1898 = vpop.xlane.xlu0 %1897
    %v1899 = vsel %vm476, %v1895, 0.0
    %1900 = vadd.xlane.f32.xlu0 %v1899
    %v1901 = vpop.xlane.xlu0 %1900
    %v1902 = vrcp.pop %v1898
    %v1903 = vrcp.pop %v1901
    %v1904 = vmul.f32 %v1893, %v1902
    %v1905 = vmul.f32 %v1895, %v1903
    %1906 = vrot.lane.b32.xlu0 %v1831, 64
    %v1907 = vpop.permute.xlu0 %1906
    %1908 = vrot.lane.b32.xlu0 %v1834, 64
    %v1909 = vpop.permute.xlu0 %1908
    %v1912 = vsel %vm472, %v1904, 0
    %v1915 = vsel %vm472, %v1905, 0
    %v1917 = vsel %vm507, %v1909, 0
    %1919 = vmatpush.msra.mxu0 0.0
    %1920 = vmatpush.msra.mxu0 0.0
    %1921 = vmatpush.msra.mxu0 0.0
    %1922 = vmatpush.msra.mxu0 0.0
    %1923 = vmatpush.msra.mxu0 0.0
    %1924 = vmatpush.msra.mxu0 0.0
    %1925 = vmatpush.msra.mxu0 0.0
    %1926 = vmatpush.msra.mxu0 0.0
    %1927 = vmatpush.msra.mxu0 0.0
    %1928 = vmatpush.msra.mxu0 0.0
    %1929 = vmatpush.msra.mxu0 0.0
    %1930 = vmatpush.msra.mxu0 0.0
    %1931 = vmatpush.msra.mxu0 0.0
    %1932 = vmatpush.msra.mxu0 0.0
    %1933 = vmatpush.msra.mxu0 %v1917
    %1934 = vmatpush.msra.mxu0 %v1907
    %1935 = vmatmul.f32.gmra.mxu0 %v1912
    %v1936 = vpop.f32.mrf.mxu0
    %v1937 = vadd.f32 0.0, %v1936
    %1938 = vmatmul.f32.gmra.mxu0 %v1915
    %v1939 = vpop.f32.mrf.mxu0
    %v1940 = vadd.f32 0.0, %v1939
    %1941 = vdwg.mxu0
    %1942 = vrot.lane.b32.xlu0 %v1831, 120
    %v1943 = vpop.permute.xlu0 %1942
    %1944 = vrot.lane.b32.xlu0 %v1834, 120
    %v1945 = vpop.permute.xlu0 %1944
    %1946 = vrot.lane.b32.xlu0 %v1831, 88
    %v1947 = vpop.permute.xlu0 %1946
    %1948 = vrot.lane.b32.xlu0 %v1834, 88
    %v1949 = vpop.permute.xlu0 %1948
    %v1950 = vsel %vm436, %v1943, 0
    %v1952 = vsel %vm436, %v1945, 0
    %v1954 = vsel %vm436, %v1947, 0
    %v1956 = vsel %vm436, %v1949, 0
    %1958 = vmatpush.xpose.msra.mxu0 0.0
    %1959 = vmatpush.xpose.msra.mxu0 0.0
    %1960 = vmatpush.xpose.msra.mxu0 0.0
    %1961 = vmatpush.xpose.msra.mxu0 0.0
    %1962 = vmatpush.xpose.msra.mxu0 0.0
    %1963 = vmatpush.xpose.msra.mxu0 0.0
    %1964 = vmatpush.xpose.msra.mxu0 0.0
    %1965 = vmatpush.xpose.msra.mxu0 0.0
    %1966 = vmatpush.xpose.msra.mxu0 0.0
    %1967 = vmatpush.xpose.msra.mxu0 0.0
    %1968 = vmatpush.xpose.msra.mxu0 0.0
    %1969 = vmatpush.xpose.msra.mxu0 0.0
    %1970 = vmatpush.xpose.msra.mxu0 0.0
    %1971 = vmatpush.xpose.msra.mxu0 0.0
    %1972 = vmatpush.xpose.msra.mxu0 %v1956
    %1973 = vmatpush.xpose.msra.mxu0 %v1954
    %1974 = vmatmul.f32.gmra.mxu0 %v1950
    %v1975 = vpop.f32.mrf.mxu0
    %v1976 = vadd.f32 0.0, %v1975
    %1977 = vmatmul.f32.gmra.mxu0 %v1952
    %v1978 = vpop.f32.mrf.mxu0
    %v1979 = vadd.f32 0.0, %v1978
    %1980 = vdwg.mxu0
    %v1981 = vmul.f32 %v1976, 0.35355338
    %v1982 = vmul.f32 %v1979, 0.35355338
    %v1983 = vadd.f32 %v1981, %v287
    %v1984 = vadd.f32 %v1982, %v288
    %v1985 = vsel %vm472, %v1983, -inf
    %1986 = vmax.xlane.f32.xlu0 %v1985
    %v1987 = vpop.xlane.xlu0 %1986
    %v1988 = vsel %vm476, %v1984, -inf
    %1989 = vmax.xlane.f32.xlu0 %v1988
    %v1990 = vpop.xlane.xlu0 %1989
    %v1991 = vsub.f32 %v1983, %v1987
    %v1992 = vsub.f32 %v1984, %v1990
    %v1993 = vmul.f32 %v1991, 1.442695
    %v1994 = vpow.pop %v1993
    %v1995 = vmul.f32 %v1992, 1.442695
    %v1996 = vpow.pop %v1995
    %v1997 = vsel %vm472, %v1994, 0.0
    %1998 = vadd.xlane.f32.xlu0 %v1997
    %v1999 = vpop.xlane.xlu0 %1998
    %v2000 = vsel %vm476, %v1996, 0.0
    %2001 = vadd.xlane.f32.xlu0 %v2000
    %v2002 = vpop.xlane.xlu0 %2001
    %v2003 = vrcp.pop %v1999
    %v2004 = vrcp.pop %v2002
    %v2005 = vmul.f32 %v1994, %v2003
    %v2006 = vmul.f32 %v1996, %v2004
    %2007 = vrot.lane.b32.xlu0 %v1831, 56
    %v2008 = vpop.permute.xlu0 %2007
    %2009 = vrot.lane.b32.xlu0 %v1834, 56
    %v2010 = vpop.permute.xlu0 %2009
    %v2013 = vsel %vm472, %v2005, 0
    %v2016 = vsel %vm472, %v2006, 0
    %v2018 = vsel %vm507, %v2010, 0
    %2020 = vmatpush.msra.mxu0 0.0
    %2021 = vmatpush.msra.mxu0 0.0
    %2022 = vmatpush.msra.mxu0 0.0
    %2023 = vmatpush.msra.mxu0 0.0
    %2024 = vmatpush.msra.mxu0 0.0
    %2025 = vmatpush.msra.mxu0 0.0
    %2026 = vmatpush.msra.mxu0 0.0
    %2027 = vmatpush.msra.mxu0 0.0
    %2028 = vmatpush.msra.mxu0 0.0
    %2029 = vmatpush.msra.mxu0 0.0
    %2030 = vmatpush.msra.mxu0 0.0
    %2031 = vmatpush.msra.mxu0 0.0
    %2032 = vmatpush.msra.mxu0 0.0
    %2033 = vmatpush.msra.mxu0 0.0
    %2034 = vmatpush.msra.mxu0 %v2018
    %2035 = vmatpush.msra.mxu0 %v2008
    %2036 = vmatmul.f32.gmra.mxu0 %v2013
    %v2037 = vpop.f32.mrf.mxu0
    %v2038 = vadd.f32 0.0, %v2037
    %2039 = vmatmul.f32.gmra.mxu0 %v2016
    %v2040 = vpop.f32.mrf.mxu0
    %v2041 = vadd.f32 0.0, %v2040
    %2042 = vdwg.mxu0
    %2043 = vrot.lane.b32.xlu0 %v1831, 112
    %v2044 = vpop.permute.xlu0 %2043
    %2045 = vrot.lane.b32.xlu0 %v1834, 112
    %v2046 = vpop.permute.xlu0 %2045
    %2047 = vrot.lane.b32.xlu0 %v1831, 80
    %v2048 = vpop.permute.xlu0 %2047
    %2049 = vrot.lane.b32.xlu0 %v1834, 80
    %v2050 = vpop.permute.xlu0 %2049
    %v2051 = vsel %vm436, %v2044, 0
    %v2053 = vsel %vm436, %v2046, 0
    %v2055 = vsel %vm436, %v2048, 0
    %v2057 = vsel %vm436, %v2050, 0
    %2059 = vmatpush.xpose.msra.mxu0 0.0
    %2060 = vmatpush.xpose.msra.mxu0 0.0
    %2061 = vmatpush.xpose.msra.mxu0 0.0
    %2062 = vmatpush.xpose.msra.mxu0 0.0
    %2063 = vmatpush.xpose.msra.mxu0 0.0
    %2064 = vmatpush.xpose.msra.mxu0 0.0
    %2065 = vmatpush.xpose.msra.mxu0 0.0
    %2066 = vmatpush.xpose.msra.mxu0 0.0
    %2067 = vmatpush.xpose.msra.mxu0 0.0
    %2068 = vmatpush.xpose.msra.mxu0 0.0
    %2069 = vmatpush.xpose.msra.mxu0 0.0
    %2070 = vmatpush.xpose.msra.mxu0 0.0
    %2071 = vmatpush.xpose.msra.mxu0 0.0
    %2072 = vmatpush.xpose.msra.mxu0 0.0
    %2073 = vmatpush.xpose.msra.mxu0 %v2057
    %2074 = vmatpush.xpose.msra.mxu0 %v2055
    %2075 = vmatmul.f32.gmra.mxu0 %v2051
    %v2076 = vpop.f32.mrf.mxu0
    %v2077 = vadd.f32 0.0, %v2076
    %2078 = vmatmul.f32.gmra.mxu0 %v2053
    %v2079 = vpop.f32.mrf.mxu0
    %v2080 = vadd.f32 0.0, %v2079
    %2081 = vdwg.mxu0
    %v2082 = vmul.f32 %v2077, 0.35355338
    %v2083 = vmul.f32 %v2080, 0.35355338
    %v2084 = vadd.f32 %v2082, %v287
    %v2085 = vadd.f32 %v2083, %v288
    %v2086 = vsel %vm472, %v2084, -inf
    %2087 = vmax.xlane.f32.xlu0 %v2086
    %v2088 = vpop.xlane.xlu0 %2087
    %v2089 = vsel %vm476, %v2085, -inf
    %2090 = vmax.xlane.f32.xlu0 %v2089
    %v2091 = vpop.xlane.xlu0 %2090
    %v2092 = vsub.f32 %v2084, %v2088
    %v2093 = vsub.f32 %v2085, %v2091
    %v2094 = vmul.f32 %v2092, 1.442695
    %v2095 = vpow.pop %v2094
    %v2096 = vmul.f32 %v2093, 1.442695
    %v2097 = vpow.pop %v2096
    %v2098 = vsel %vm472, %v2095, 0.0
    %2099 = vadd.xlane.f32.xlu0 %v2098
    %v2100 = vpop.xlane.xlu0 %2099
    %v2101 = vsel %vm476, %v2097, 0.0
    %2102 = vadd.xlane.f32.xlu0 %v2101
    %v2103 = vpop.xlane.xlu0 %2102
    %v2104 = vrcp.pop %v2100
    %v2105 = vrcp.pop %v2103
    %v2106 = vmul.f32 %v2095, %v2104
    %v2107 = vmul.f32 %v2097, %v2105
    %2108 = vrot.lane.b32.xlu0 %v1831, 48
    %v2109 = vpop.permute.xlu0 %2108
    %2110 = vrot.lane.b32.xlu0 %v1834, 48
    %v2111 = vpop.permute.xlu0 %2110
    %v2114 = vsel %vm472, %v2106, 0
    %v2117 = vsel %vm472, %v2107, 0
    %v2119 = vsel %vm507, %v2111, 0
    %2121 = vmatpush.msra.mxu0 0.0
    %2122 = vmatpush.msra.mxu0 0.0
    %2123 = vmatpush.msra.mxu0 0.0
    %2124 = vmatpush.msra.mxu0 0.0
    %2125 = vmatpush.msra.mxu0 0.0
    %2126 = vmatpush.msra.mxu0 0.0
    %2127 = vmatpush.msra.mxu0 0.0
    %2128 = vmatpush.msra.mxu0 0.0
    %2129 = vmatpush.msra.mxu0 0.0
    %2130 = vmatpush.msra.mxu0 0.0
    %2131 = vmatpush.msra.mxu0 0.0
    %2132 = vmatpush.msra.mxu0 0.0
    %2133 = vmatpush.msra.mxu0 0.0
    %2134 = vmatpush.msra.mxu0 0.0
    %2135 = vmatpush.msra.mxu0 %v2119
    %2136 = vmatpush.msra.mxu0 %v2109
    %2137 = vmatmul.f32.gmra.mxu0 %v2114
    %v2138 = vpop.f32.mrf.mxu0
    %v2139 = vadd.f32 0.0, %v2138
    %2140 = vmatmul.f32.gmra.mxu0 %v2117
    %v2141 = vpop.f32.mrf.mxu0
    %v2142 = vadd.f32 0.0, %v2141
    %2143 = vdwg.mxu0
    %2144 = vrot.lane.b32.xlu0 %v1831, 104
    %v2145 = vpop.permute.xlu0 %2144
    %2146 = vrot.lane.b32.xlu0 %v1834, 104
    %v2147 = vpop.permute.xlu0 %2146
    %2148 = vrot.lane.b32.xlu0 %v1831, 72
    %v2149 = vpop.permute.xlu0 %2148
    %2150 = vrot.lane.b32.xlu0 %v1834, 72
    %v2151 = vpop.permute.xlu0 %2150
    %v2152 = vsel %vm436, %v2145, 0
    %v2154 = vsel %vm436, %v2147, 0
    %v2156 = vsel %vm436, %v2149, 0
    %v2158 = vsel %vm436, %v2151, 0
    %2160 = vmatpush.xpose.msra.mxu0 0.0
    %2161 = vmatpush.xpose.msra.mxu0 0.0
    %2162 = vmatpush.xpose.msra.mxu0 0.0
    %2163 = vmatpush.xpose.msra.mxu0 0.0
    %2164 = vmatpush.xpose.msra.mxu0 0.0
    %2165 = vmatpush.xpose.msra.mxu0 0.0
    %2166 = vmatpush.xpose.msra.mxu0 0.0
    %2167 = vmatpush.xpose.msra.mxu0 0.0
    %2168 = vmatpush.xpose.msra.mxu0 0.0
    %2169 = vmatpush.xpose.msra.mxu0 0.0
    %2170 = vmatpush.xpose.msra.mxu0 0.0
    %2171 = vmatpush.xpose.msra.mxu0 0.0
    %2172 = vmatpush.xpose.msra.mxu0 0.0
    %2173 = vmatpush.xpose.msra.mxu0 0.0
    %2174 = vmatpush.xpose.msra.mxu0 %v2158
    %2175 = vmatpush.xpose.msra.mxu0 %v2156
    %2176 = vmatmul.f32.gmra.mxu0 %v2152
    %v2177 = vpop.f32.mrf.mxu0
    %v2178 = vadd.f32 0.0, %v2177
    %2179 = vmatmul.f32.gmra.mxu0 %v2154
    %v2180 = vpop.f32.mrf.mxu0
    %v2181 = vadd.f32 0.0, %v2180
    %2182 = vdwg.mxu0
    %v2183 = vmul.f32 %v2178, 0.35355338
    %v2184 = vmul.f32 %v2181, 0.35355338
    %v2185 = vadd.f32 %v2183, %v287
    %v2186 = vadd.f32 %v2184, %v288
    %v2187 = vsel %vm472, %v2185, -inf
    %2188 = vmax.xlane.f32.xlu0 %v2187
    %v2189 = vpop.xlane.xlu0 %2188
    %v2190 = vsel %vm476, %v2186, -inf
    %2191 = vmax.xlane.f32.xlu0 %v2190
    %v2192 = vpop.xlane.xlu0 %2191
    %v2193 = vsub.f32 %v2185, %v2189
    %v2194 = vsub.f32 %v2186, %v2192
    %v2195 = vmul.f32 %v2193, 1.442695
    %v2196 = vpow.pop %v2195
    %v2197 = vmul.f32 %v2194, 1.442695
    %v2198 = vpow.pop %v2197
    %v2199 = vsel %vm472, %v2196, 0.0
    %2200 = vadd.xlane.f32.xlu0 %v2199
    %v2201 = vpop.xlane.xlu0 %2200
    %v2202 = vsel %vm476, %v2198, 0.0
    %2203 = vadd.xlane.f32.xlu0 %v2202
    %v2204 = vpop.xlane.xlu0 %2203
    %v2205 = vrcp.pop %v2201
    %v2206 = vrcp.pop %v2204
    %v2207 = vmul.f32 %v2196, %v2205
    %v2208 = vmul.f32 %v2198, %v2206
    %2209 = vrot.lane.b32.xlu0 %v1831, 40
    %v2210 = vpop.permute.xlu0 %2209
    %2211 = vrot.lane.b32.xlu0 %v1834, 40
    %v2212 = vpop.permute.xlu0 %2211
    %v2215 = vsel %vm472, %v2207, 0
    %v2218 = vsel %vm472, %v2208, 0
    %v2220 = vsel %vm507, %v2212, 0
    %2222 = vmatpush.msra.mxu0 0.0
    %2223 = vmatpush.msra.mxu0 0.0
    %2224 = vmatpush.msra.mxu0 0.0
    %2225 = vmatpush.msra.mxu0 0.0
    %2226 = vmatpush.msra.mxu0 0.0
    %2227 = vmatpush.msra.mxu0 0.0
    %2228 = vmatpush.msra.mxu0 0.0
    %2229 = vmatpush.msra.mxu0 0.0
    %2230 = vmatpush.msra.mxu0 0.0
    %2231 = vmatpush.msra.mxu0 0.0
    %2232 = vmatpush.msra.mxu0 0.0
    %2233 = vmatpush.msra.mxu0 0.0
    %2234 = vmatpush.msra.mxu0 0.0
    %2235 = vmatpush.msra.mxu0 0.0
    %2236 = vmatpush.msra.mxu0 %v2220
    %2237 = vmatpush.msra.mxu0 %v2210
    %2238 = vmatmul.f32.gmra.mxu0 %v2215
    %v2239 = vpop.f32.mrf.mxu0
    %v2240 = vadd.f32 0.0, %v2239
    %2241 = vmatmul.f32.gmra.mxu0 %v2218
    %v2242 = vpop.f32.mrf.mxu0
    %v2243 = vadd.f32 0.0, %v2242
    %2244 = vdwg.mxu0
    %2247 = vrot.lane.b32.xlu0 %v2038, 8
    %v2248 = vpop.permute.xlu0 %2247
    %2249 = vrot.lane.b32.xlu0 %v2041, 8
    %v2250 = vpop.permute.xlu0 %2249
    %2255 = vrot.lane.b32.xlu0 %v2139, 16
    %v2256 = vpop.permute.xlu0 %2255
    %2257 = vrot.lane.b32.xlu0 %v2142, 16
    %v2258 = vpop.permute.xlu0 %2257
    %2263 = vrot.lane.b32.xlu0 %v2240, 24
    %v2264 = vpop.permute.xlu0 %2263
    %2265 = vrot.lane.b32.xlu0 %v2243, 24
    %v2266 = vpop.permute.xlu0 %2265
    %v2269 = vsel %vm436, %v1937, %v2248
    %v2270 = vsel %vm436, %v1940, %v2250
    %v2271 = vsel %vm862, %v2269, %v2256
    %v2272 = vsel %vm862, %v2270, %v2258
    %v2273 = vsel %vm865, %v2271, %v2264
    %v2274 = vsel %vm865, %v2272, %v2266
    %v2276 = vperm.slane %v1842, 0
    %v2279 = vsel %vm293, %v2273, 0
    %v2282 = vsel %vm293, %v2274, 0
    %2284 = vmatpush.msra.mxu0 0.0
    %2285 = vmatpush.msra.mxu0 0.0
    %2286 = vmatpush.msra.mxu0 0.0
    %2287 = vmatpush.msra.mxu0 0.0
    %2288 = vmatpush.msra.mxu0 0.0
    %2289 = vmatpush.msra.mxu0 0.0
    %2290 = vmatpush.msra.mxu0 0.0
    %2291 = vmatpush.msra.mxu0 0.0
    %2292 = vmatpush.msra.mxu0 0.0
    %2293 = vmatpush.msra.mxu0 0.0
    %2294 = vmatpush.msra.mxu0 0.0
    %2295 = vmatpush.msra.mxu0 0.0
    %2296 = vmatpush.msra.mxu0 %v1840
    %2297 = vmatpush.msra.mxu0 %v1839
    %2298 = vmatpush.msra.mxu0 %v1838
    %2299 = vmatpush.msra.mxu0 %v1837
    %2300 = vmatmul.f32.gmra.mxu0 %v2279
    %v2301 = vpop.f32.mrf.mxu0
    %v2302 = vadd.f32 %v2276, %v2301
    %2303 = vmatmul.f32.gmra.mxu0 %v2282
    %v2304 = vpop.f32.mrf.mxu0
    %v2305 = vadd.f32 %v2276, %v2304
    %2306 = vdwg.mxu0
    %v2307 = vadd.f32 %v1705, %v2302
    %v2308 = vadd.f32 %v1706, %v2305
    %s2309 = scalar_lea.vmem %s19, 4
    %v2310 = vld [vmem:[%s2309] sm:$0x1]
    %s2311 = scalar_lea.vmem %s20, 4
    %v2312 = vld [vmem:[%s2311] sm:$0x1]
    %v2313 = vsel %vm293, %v2307, 0.0
    %2314 = vadd.xlane.f32.xlu0 %v2313
    %v2315 = vpop.xlane.xlu0 %2314
    %v2316 = vsel %vm297, %v2308, 0.0
    %2317 = vadd.xlane.f32.xlu0 %v2316
    %v2318 = vpop.xlane.xlu0 %2317
    %v2319 = vmul.f32 %v2315, %v307
    %v2320 = vmul.f32 %v2318, %v307
    %v2321 = vsub.f32 %v2307, %v2319
    %v2322 = vsub.f32 %v2308, %v2320
    %v2323 = vmul.f32 %v2321, %v2321
    %v2324 = vmul.f32 %v2322, %v2322
    %v2325 = vsel %vm293, %v2323, 0.0
    %2326 = vadd.xlane.f32.xlu0 %v2325
    %v2327 = vpop.xlane.xlu0 %2326
    %v2328 = vsel %vm297, %v2324, 0.0
    %2329 = vadd.xlane.f32.xlu0 %v2328
    %v2330 = vpop.xlane.xlu0 %2329
    %v2331 = vmul.f32 %v2327, 0.032258064
    %v2332 = vmul.f32 %v2330, 0.032258064
    %v2334 = vperm.slane %v2310, 0
    %v2336 = vmul.f32 %v2334, %v2321
    %v2337 = vmul.f32 %v2334, %v2322
    %v2338 = vrsqrt.pop %v2331
    %v2339 = vmul.f32 %v2338, %v2331
    %v2340 = vmul.f32 %v2339, %v2338
    %v2341 = vmul.f32 0.5, %v2340
    %v2342 = vsub.f32 1.5, %v2341
    %v2343 = vmul.f32 %v2338, %v2342
    %v2344 = vmul.f32 %v2331, %v2343
    %vm2345 = vcmp.eq.f32.partialorder %v2331, inf
    %v2346 = vsel %vm2345, %v2331, %v2344
    %vm2347 = vcmp.eq.f32.partialorder %v2331, 0.0
    %v2348 = vand.u32 %v2331, 2147483648
    %v2349 = vsel %vm2347, %v2348, %v2346
    %v2350 = vrsqrt.pop %v2332
    %v2351 = vmul.f32 %v2350, %v2332
    %v2352 = vmul.f32 %v2351, %v2350
    %v2353 = vmul.f32 0.5, %v2352
    %v2354 = vsub.f32 1.5, %v2353
    %v2355 = vmul.f32 %v2350, %v2354
    %v2356 = vmul.f32 %v2332, %v2355
    %vm2357 = vcmp.eq.f32.partialorder %v2332, inf
    %v2358 = vsel %vm2357, %v2332, %v2356
    %vm2359 = vcmp.eq.f32.partialorder %v2332, 0.0
    %v2360 = vand.u32 %v2332, 2147483648
    %v2361 = vsel %vm2359, %v2360, %v2358
    %v2362 = vadd.f32 %v2349, 1e-06
    %v2363 = vadd.f32 %v2361, 1e-06
    %v2364 = vrcp.pop %v2362
    %v2365 = vmul.f32 %v2362, %v2364
    %v2366 = vsub.f32 1.0, %v2365
    %v2367 = vmul.f32 %v2364, %v2366
    %v2368 = vadd.f32 %v2364, %v2367
    %vm2369 = vweird.f32 %v2362
    %vm2370 = vweird.f32 %v2364
    %vm2371 = vmor %vm2369, %vm2370
    %v2372 = vsel %vm2371, %v2364, %v2368
    %v2373 = vand.u32 2147483647, %v2362
    %vm2374 = vcmp.eq.f32.partialorder %v2373, 8.507059e+37
    %v2375 = vand.u32 %v2362, 2147483648
    %v2376 = vor.u32 1.1754944e-38, %v2375
    %v2377 = vsel %vm2374, %v2376, %v2372
    %v2378 = vmul.f32 %v2336, %v2377
    %v2379 = vrcp.pop %v2363
    %v2380 = vmul.f32 %v2363, %v2379
    %v2381 = vsub.f32 1.0, %v2380
    %v2382 = vmul.f32 %v2379, %v2381
    %v2383 = vadd.f32 %v2379, %v2382
    %vm2384 = vweird.f32 %v2363
    %vm2385 = vweird.f32 %v2379
    %vm2386 = vmor %vm2384, %vm2385
    %v2387 = vsel %vm2386, %v2379, %v2383
    %v2388 = vand.u32 2147483647, %v2363
    %vm2389 = vcmp.eq.f32.partialorder %v2388, 8.507059e+37
    %v2390 = vand.u32 %v2363, 2147483648
    %v2391 = vor.u32 1.1754944e-38, %v2390
    %v2392 = vsel %vm2389, %v2391, %v2387
    %v2393 = vmul.f32 %v2337, %v2392
    %v2395 = vperm.slane %v2312, 0
    %v2397 = vadd.f32 %v2378, %v2395
    %v2398 = vadd.f32 %v2393, %v2395
    %s2399 = scalar_lea.vmem %s9, 32
    %v2400 = vld [vmem:[%s2399] sm:$0xff]
    %v2401 = vld [vmem:[%s2399 + $0x8] sm:$0xff]
    %v2402 = vld [vmem:[%s2399 + $0x10] sm:$0xff]
    %v2403 = vld [vmem:[%s2399 + $0x18] sm:$0xff]
    %s2404 = scalar_lea.vmem [#allocation13], 1
    %v2405 = vld [vmem:[%s2404] sm:$0x1]
    %v2407 = vperm.slane %v2405, 0
    %v2410 = vsel %vm293, %v2397, 0
    %v2413 = vsel %vm293, %v2398, 0
    %2415 = vmatpush.msra.mxu0 0.0
    %2416 = vmatpush.msra.mxu0 0.0
    %2417 = vmatpush.msra.mxu0 0.0
    %2418 = vmatpush.msra.mxu0 0.0
    %2419 = vmatpush.msra.mxu0 0.0
    %2420 = vmatpush.msra.mxu0 0.0
    %2421 = vmatpush.msra.mxu0 0.0
    %2422 = vmatpush.msra.mxu0 0.0
    %2423 = vmatpush.msra.mxu0 0.0
    %2424 = vmatpush.msra.mxu0 0.0
    %2425 = vmatpush.msra.mxu0 0.0
    %2426 = vmatpush.msra.mxu0 0.0
    %2427 = vmatpush.msra.mxu0 %v2403
    %2428 = vmatpush.msra.mxu0 %v2402
    %2429 = vmatpush.msra.mxu0 %v2401
    %2430 = vmatpush.msra.mxu0 %v2400
    %2431 = vmatmul.f32.gmra.mxu0 %v2410
    %v2432 = vpop.f32.mrf.mxu0
    %v2433 = vadd.f32 %v2407, %v2432
    %2434 = vmatmul.f32.gmra.mxu0 %v2413
    %v2435 = vpop.f32.mrf.mxu0
    %v2436 = vadd.f32 %v2407, %v2435
    %2437 = vdwg.mxu0
    %s2438 = scalar_lea.vmem [#allocation14], 32
    %v2439 = vld [vmem:[%s2438] sm:$0xff]
    %v2440 = vld [vmem:[%s2438 + $0x8] sm:$0xff]
    %v2441 = vld [vmem:[%s2438 + $0x10] sm:$0xff]
    %v2442 = vld [vmem:[%s2438 + $0x18] sm:$0xff]
    %s2443 = scalar_lea.vmem [#allocation16], 1
    %v2444 = vld [vmem:[%s2443] sm:$0x1]
    %v2446 = vperm.slane %v2444, 0
    %2448 = vmatpush.msra.mxu0 0.0
    %2449 = vmatpush.msra.mxu0 0.0
    %2450 = vmatpush.msra.mxu0 0.0
    %2451 = vmatpush.msra.mxu0 0.0
    %2452 = vmatpush.msra.mxu0 0.0
    %2453 = vmatpush.msra.mxu0 0.0
    %2454 = vmatpush.msra.mxu0 0.0
    %2455 = vmatpush.msra.mxu0 0.0
    %2456 = vmatpush.msra.mxu0 0.0
    %2457 = vmatpush.msra.mxu0 0.0
    %2458 = vmatpush.msra.mxu0 0.0
    %2459 = vmatpush.msra.mxu0 0.0
    %2460 = vmatpush.msra.mxu0 %v2442
    %2461 = vmatpush.msra.mxu0 %v2441
    %2462 = vmatpush.msra.mxu0 %v2440
    %2463 = vmatpush.msra.mxu0 %v2439
    %2464 = vmatmul.f32.gmra.mxu0 %v1038
    %v2465 = vpop.f32.mrf.mxu0
    %v2466 = vadd.f32 %v2446, %v2465
    %2467 = vmatmul.f32.gmra.mxu0 %v1041
    %v2468 = vpop.f32.mrf.mxu0
    %v2469 = vadd.f32 %v2446, %v2468
    %2470 = vdwg.mxu0
    %s2471 = scalar_lea.vmem [#allocation17], 32
    %v2472 = vld [vmem:[%s2471] sm:$0xff]
    %v2473 = vld [vmem:[%s2471 + $0x8] sm:$0xff]
    %v2474 = vld [vmem:[%s2471 + $0x10] sm:$0xff]
    %v2475 = vld [vmem:[%s2471 + $0x18] sm:$0xff]
    %s2476 = scalar_lea.vmem [#allocation19], 1
    %v2477 = vld [vmem:[%s2476] sm:$0x1]
    %v2479 = vsel %vm436, %v2433, 0
    %v2482 = vsel %vm436, %v2436, 0
    %v2485 = vsel %vm436, %v2466, 0
    %v2488 = vsel %vm436, %v2469, 0
    %2490 = vmatpush.xpose.msra.mxu0 0.0
    %2491 = vmatpush.xpose.msra.mxu0 0.0
    %2492 = vmatpush.xpose.msra.mxu0 0.0
    %2493 = vmatpush.xpose.msra.mxu0 0.0
    %2494 = vmatpush.xpose.msra.mxu0 0.0
    %2495 = vmatpush.xpose.msra.mxu0 0.0
    %2496 = vmatpush.xpose.msra.mxu0 0.0
    %2497 = vmatpush.xpose.msra.mxu0 0.0
    %2498 = vmatpush.xpose.msra.mxu0 0.0
    %2499 = vmatpush.xpose.msra.mxu0 0.0
    %2500 = vmatpush.xpose.msra.mxu0 0.0
    %2501 = vmatpush.xpose.msra.mxu0 0.0
    %2502 = vmatpush.xpose.msra.mxu0 0.0
    %2503 = vmatpush.xpose.msra.mxu0 0.0
    %2504 = vmatpush.xpose.msra.mxu0 %v2488
    %2505 = vmatpush.xpose.msra.mxu0 %v2485
    %2506 = vmatmul.f32.gmra.mxu0 %v2479
    %v2507 = vpop.f32.mrf.mxu0
    %v2508 = vadd.f32 0.0, %v2507
    %2509 = vmatmul.f32.gmra.mxu0 %v2482
    %v2510 = vpop.f32.mrf.mxu0
    %v2511 = vadd.f32 0.0, %v2510
    %2512 = vdwg.mxu0
    %v2513 = vmul.f32 %v2508, 0.35355338
    %v2514 = vmul.f32 %v2511, 0.35355338
    %v2515 = vadd.f32 %v2513, %v289
    %v2516 = vadd.f32 %v2514, %v290
    %v2517 = vsel %vm862, %v2515, -inf
    %2518 = vmax.xlane.f32.xlu0 %v2517
    %v2519 = vpop.xlane.xlu0 %2518
    %v2520 = vsel %vm1113, %v2516, -inf
    %2521 = vmax.xlane.f32.xlu0 %v2520
    %v2522 = vpop.xlane.xlu0 %2521
    %v2523 = vsub.f32 %v2515, %v2519
    %v2524 = vsub.f32 %v2516, %v2522
    %v2525 = vmul.f32 %v2523, 1.442695
    %v2526 = vpow.pop %v2525
    %v2527 = vmul.f32 %v2524, 1.442695
    %v2528 = vpow.pop %v2527
    %v2529 = vsel %vm862, %v2526, 0.0
    %2530 = vadd.xlane.f32.xlu0 %v2529
    %v2531 = vpop.xlane.xlu0 %2530
    %v2532 = vsel %vm1113, %v2528, 0.0
    %2533 = vadd.xlane.f32.xlu0 %v2532
    %v2534 = vpop.xlane.xlu0 %2533
    %v2535 = vrcp.pop %v2531
    %v2536 = vrcp.pop %v2534
    %v2537 = vmul.f32 %v2526, %v2535
    %v2538 = vmul.f32 %v2528, %v2536
    %2539 = vrot.lane.b32.xlu0 %v2466, 96
    %v2540 = vpop.permute.xlu0 %2539
    %2541 = vrot.lane.b32.xlu0 %v2469, 96
    %v2542 = vpop.permute.xlu0 %2541
    %v2546 = vsel %vm862, %v2537, 0
    %v2549 = vsel %vm862, %v2538, 0
    %2551 = vmatpush.msra.mxu0 0.0
    %2552 = vmatpush.msra.mxu0 0.0
    %2553 = vmatpush.msra.mxu0 0.0
    %2554 = vmatpush.msra.mxu0 0.0
    %2555 = vmatpush.msra.mxu0 0.0
    %2556 = vmatpush.msra.mxu0 0.0
    %2557 = vmatpush.msra.mxu0 0.0
    %2558 = vmatpush.msra.mxu0 0.0
    %2559 = vmatpush.msra.mxu0 0.0
    %2560 = vmatpush.msra.mxu0 0.0
    %2561 = vmatpush.msra.mxu0 0.0
    %2562 = vmatpush.msra.mxu0 0.0
    %2563 = vmatpush.msra.mxu0 0.0
    %2564 = vmatpush.msra.mxu0 0.0
    %2565 = vmatpush.msra.mxu0 %v2542
    %2566 = vmatpush.msra.mxu0 %v2540
    %2567 = vmatmul.f32.gmra.mxu0 %v2546
    %v2568 = vpop.f32.mrf.mxu0
    %v2569 = vadd.f32 0.0, %v2568
    %2570 = vmatmul.f32.gmra.mxu0 %v2549
    %v2571 = vpop.f32.mrf.mxu0
    %v2572 = vadd.f32 0.0, %v2571
    %2573 = vdwg.mxu0
    %2574 = vrot.lane.b32.xlu0 %v2433, 120
    %v2575 = vpop.permute.xlu0 %2574
    %2576 = vrot.lane.b32.xlu0 %v2436, 120
    %v2577 = vpop.permute.xlu0 %2576
    %2578 = vrot.lane.b32.xlu0 %v2466, 120
    %v2579 = vpop.permute.xlu0 %2578
    %2580 = vrot.lane.b32.xlu0 %v2469, 120
    %v2581 = vpop.permute.xlu0 %2580
    %v2582 = vsel %vm436, %v2575, 0
    %v2584 = vsel %vm436, %v2577, 0
    %v2586 = vsel %vm436, %v2579, 0
    %v2588 = vsel %vm436, %v2581, 0
    %2590 = vmatpush.xpose.msra.mxu0 0.0
    %2591 = vmatpush.xpose.msra.mxu0 0.0
    %2592 = vmatpush.xpose.msra.mxu0 0.0
    %2593 = vmatpush.xpose.msra.mxu0 0.0
    %2594 = vmatpush.xpose.msra.mxu0 0.0
    %2595 = vmatpush.xpose.msra.mxu0 0.0
    %2596 = vmatpush.xpose.msra.mxu0 0.0
    %2597 = vmatpush.xpose.msra.mxu0 0.0
    %2598 = vmatpush.xpose.msra.mxu0 0.0
    %2599 = vmatpush.xpose.msra.mxu0 0.0
    %2600 = vmatpush.xpose.msra.mxu0 0.0
    %2601 = vmatpush.xpose.msra.mxu0 0.0
    %2602 = vmatpush.xpose.msra.mxu0 0.0
    %2603 = vmatpush.xpose.msra.mxu0 0.0
    %2604 = vmatpush.xpose.msra.mxu0 %v2588
    %2605 = vmatpush.xpose.msra.mxu0 %v2586
    %2606 = vmatmul.f32.gmra.mxu0 %v2582
    %v2607 = vpop.f32.mrf.mxu0
    %v2608 = vadd.f32 0.0, %v2607
    %2609 = vmatmul.f32.gmra.mxu0 %v2584
    %v2610 = vpop.f32.mrf.mxu0
    %v2611 = vadd.f32 0.0, %v2610
    %2612 = vdwg.mxu0
    %v2613 = vmul.f32 %v2608, 0.35355338
    %v2614 = vmul.f32 %v2611, 0.35355338
    %v2615 = vadd.f32 %v2613, %v289
    %v2616 = vadd.f32 %v2614, %v290
    %v2617 = vsel %vm862, %v2615, -inf
    %2618 = vmax.xlane.f32.xlu0 %v2617
    %v2619 = vpop.xlane.xlu0 %2618
    %v2620 = vsel %vm1113, %v2616, -inf
    %2621 = vmax.xlane.f32.xlu0 %v2620
    %v2622 = vpop.xlane.xlu0 %2621
    %v2623 = vsub.f32 %v2615, %v2619
    %v2624 = vsub.f32 %v2616, %v2622
    %v2625 = vmul.f32 %v2623, 1.442695
    %v2626 = vpow.pop %v2625
    %v2627 = vmul.f32 %v2624, 1.442695
    %v2628 = vpow.pop %v2627
    %v2629 = vsel %vm862, %v2626, 0.0
    %2630 = vadd.xlane.f32.xlu0 %v2629
    %v2631 = vpop.xlane.xlu0 %2630
    %v2632 = vsel %vm1113, %v2628, 0.0
    %2633 = vadd.xlane.f32.xlu0 %v2632
    %v2634 = vpop.xlane.xlu0 %2633
    %v2635 = vrcp.pop %v2631
    %v2636 = vrcp.pop %v2634
    %v2637 = vmul.f32 %v2626, %v2635
    %v2638 = vmul.f32 %v2628, %v2636
    %2639 = vrot.lane.b32.xlu0 %v2466, 88
    %v2640 = vpop.permute.xlu0 %2639
    %2641 = vrot.lane.b32.xlu0 %v2469, 88
    %v2642 = vpop.permute.xlu0 %2641
    %v2646 = vsel %vm862, %v2637, 0
    %v2649 = vsel %vm862, %v2638, 0
    %2651 = vmatpush.msra.mxu0 0.0
    %2652 = vmatpush.msra.mxu0 0.0
    %2653 = vmatpush.msra.mxu0 0.0
    %2654 = vmatpush.msra.mxu0 0.0
    %2655 = vmatpush.msra.mxu0 0.0
    %2656 = vmatpush.msra.mxu0 0.0
    %2657 = vmatpush.msra.mxu0 0.0
    %2658 = vmatpush.msra.mxu0 0.0
    %2659 = vmatpush.msra.mxu0 0.0
    %2660 = vmatpush.msra.mxu0 0.0
    %2661 = vmatpush.msra.mxu0 0.0
    %2662 = vmatpush.msra.mxu0 0.0
    %2663 = vmatpush.msra.mxu0 0.0
    %2664 = vmatpush.msra.mxu0 0.0
    %2665 = vmatpush.msra.mxu0 %v2642
    %2666 = vmatpush.msra.mxu0 %v2640
    %2667 = vmatmul.f32.gmra.mxu0 %v2646
    %v2668 = vpop.f32.mrf.mxu0
    %v2669 = vadd.f32 0.0, %v2668
    %2670 = vmatmul.f32.gmra.mxu0 %v2649
    %v2671 = vpop.f32.mrf.mxu0
    %v2672 = vadd.f32 0.0, %v2671
    %2673 = vdwg.mxu0
    %2674 = vrot.lane.b32.xlu0 %v2433, 112
    %v2675 = vpop.permute.xlu0 %2674
    %2676 = vrot.lane.b32.xlu0 %v2436, 112
    %v2677 = vpop.permute.xlu0 %2676
    %2678 = vrot.lane.b32.xlu0 %v2466, 112
    %v2679 = vpop.permute.xlu0 %2678
    %2680 = vrot.lane.b32.xlu0 %v2469, 112
    %v2681 = vpop.permute.xlu0 %2680
    %v2682 = vsel %vm436, %v2675, 0
    %v2684 = vsel %vm436, %v2677, 0
    %v2686 = vsel %vm436, %v2679, 0
    %v2688 = vsel %vm436, %v2681, 0
    %2690 = vmatpush.xpose.msra.mxu0 0.0
    %2691 = vmatpush.xpose.msra.mxu0 0.0
    %2692 = vmatpush.xpose.msra.mxu0 0.0
    %2693 = vmatpush.xpose.msra.mxu0 0.0
    %2694 = vmatpush.xpose.msra.mxu0 0.0
    %2695 = vmatpush.xpose.msra.mxu0 0.0
    %2696 = vmatpush.xpose.msra.mxu0 0.0
    %2697 = vmatpush.xpose.msra.mxu0 0.0
    %2698 = vmatpush.xpose.msra.mxu0 0.0
    %2699 = vmatpush.xpose.msra.mxu0 0.0
    %2700 = vmatpush.xpose.msra.mxu0 0.0
    %2701 = vmatpush.xpose.msra.mxu0 0.0
    %2702 = vmatpush.xpose.msra.mxu0 0.0
    %2703 = vmatpush.xpose.msra.mxu0 0.0
    %2704 = vmatpush.xpose.msra.mxu0 %v2688
    %2705 = vmatpush.xpose.msra.mxu0 %v2686
    %2706 = vmatmul.f32.gmra.mxu0 %v2682
    %v2707 = vpop.f32.mrf.mxu0
    %v2708 = vadd.f32 0.0, %v2707
    %2709 = vmatmul.f32.gmra.mxu0 %v2684
    %v2710 = vpop.f32.mrf.mxu0
    %v2711 = vadd.f32 0.0, %v2710
    %2712 = vdwg.mxu0
    %v2713 = vmul.f32 %v2708, 0.35355338
    %v2714 = vmul.f32 %v2711, 0.35355338
    %v2715 = vadd.f32 %v2713, %v289
    %v2716 = vadd.f32 %v2714, %v290
    %v2717 = vsel %vm862, %v2715, -inf
    %2718 = vmax.xlane.f32.xlu0 %v2717
    %v2719 = vpop.xlane.xlu0 %2718
    %v2720 = vsel %vm1113, %v2716, -inf
    %2721 = vmax.xlane.f32.xlu0 %v2720
    %v2722 = vpop.xlane.xlu0 %2721
    %v2723 = vsub.f32 %v2715, %v2719
    %v2724 = vsub.f32 %v2716, %v2722
    %v2725 = vmul.f32 %v2723, 1.442695
    %v2726 = vpow.pop %v2725
    %v2727 = vmul.f32 %v2724, 1.442695
    %v2728 = vpow.pop %v2727
    %v2729 = vsel %vm862, %v2726, 0.0
    %2730 = vadd.xlane.f32.xlu0 %v2729
    %v2731 = vpop.xlane.xlu0 %2730
    %v2732 = vsel %vm1113, %v2728, 0.0
    %2733 = vadd.xlane.f32.xlu0 %v2732
    %v2734 = vpop.xlane.xlu0 %2733
    %v2735 = vrcp.pop %v2731
    %v2736 = vrcp.pop %v2734
    %v2737 = vmul.f32 %v2726, %v2735
    %v2738 = vmul.f32 %v2728, %v2736
    %2739 = vrot.lane.b32.xlu0 %v2466, 80
    %v2740 = vpop.permute.xlu0 %2739
    %2741 = vrot.lane.b32.xlu0 %v2469, 80
    %v2742 = vpop.permute.xlu0 %2741
    %v2746 = vsel %vm862, %v2737, 0
    %v2749 = vsel %vm862, %v2738, 0
    %2751 = vmatpush.msra.mxu0 0.0
    %2752 = vmatpush.msra.mxu0 0.0
    %2753 = vmatpush.msra.mxu0 0.0
    %2754 = vmatpush.msra.mxu0 0.0
    %2755 = vmatpush.msra.mxu0 0.0
    %2756 = vmatpush.msra.mxu0 0.0
    %2757 = vmatpush.msra.mxu0 0.0
    %2758 = vmatpush.msra.mxu0 0.0
    %2759 = vmatpush.msra.mxu0 0.0
    %2760 = vmatpush.msra.mxu0 0.0
    %2761 = vmatpush.msra.mxu0 0.0
    %2762 = vmatpush.msra.mxu0 0.0
    %2763 = vmatpush.msra.mxu0 0.0
    %2764 = vmatpush.msra.mxu0 0.0
    %2765 = vmatpush.msra.mxu0 %v2742
    %2766 = vmatpush.msra.mxu0 %v2740
    %2767 = vmatmul.f32.gmra.mxu0 %v2746
    %v2768 = vpop.f32.mrf.mxu0
    %v2769 = vadd.f32 0.0, %v2768
    %2770 = vmatmul.f32.gmra.mxu0 %v2749
    %v2771 = vpop.f32.mrf.mxu0
    %v2772 = vadd.f32 0.0, %v2771
    %2773 = vdwg.mxu0
    %2774 = vrot.lane.b32.xlu0 %v2433, 104
    %v2775 = vpop.permute.xlu0 %2774
    %2776 = vrot.lane.b32.xlu0 %v2436, 104
    %v2777 = vpop.permute.xlu0 %2776
    %2778 = vrot.lane.b32.xlu0 %v2466, 104
    %v2779 = vpop.permute.xlu0 %2778
    %2780 = vrot.lane.b32.xlu0 %v2469, 104
    %v2781 = vpop.permute.xlu0 %2780
    %v2782 = vsel %vm436, %v2775, 0
    %v2784 = vsel %vm436, %v2777, 0
    %v2786 = vsel %vm436, %v2779, 0
    %v2788 = vsel %vm436, %v2781, 0
    %2790 = vmatpush.xpose.msra.mxu0 0.0
    %2791 = vmatpush.xpose.msra.mxu0 0.0
    %2792 = vmatpush.xpose.msra.mxu0 0.0
    %2793 = vmatpush.xpose.msra.mxu0 0.0
    %2794 = vmatpush.xpose.msra.mxu0 0.0
    %2795 = vmatpush.xpose.msra.mxu0 0.0
    %2796 = vmatpush.xpose.msra.mxu0 0.0
    %2797 = vmatpush.xpose.msra.mxu0 0.0
    %2798 = vmatpush.xpose.msra.mxu0 0.0
    %2799 = vmatpush.xpose.msra.mxu0 0.0
    %2800 = vmatpush.xpose.msra.mxu0 0.0
    %2801 = vmatpush.xpose.msra.mxu0 0.0
    %2802 = vmatpush.xpose.msra.mxu0 0.0
    %2803 = vmatpush.xpose.msra.mxu0 0.0
    %2804 = vmatpush.xpose.msra.mxu0 %v2788
    %2805 = vmatpush.xpose.msra.mxu0 %v2786
    %2806 = vmatmul.f32.gmra.mxu0 %v2782
    %v2807 = vpop.f32.mrf.mxu0
    %v2808 = vadd.f32 0.0, %v2807
    %2809 = vmatmul.f32.gmra.mxu0 %v2784
    %v2810 = vpop.f32.mrf.mxu0
    %v2811 = vadd.f32 0.0, %v2810
    %2812 = vdwg.mxu0
    %v2813 = vmul.f32 %v2808, 0.35355338
    %v2814 = vmul.f32 %v2811, 0.35355338
    %v2815 = vadd.f32 %v2813, %v289
    %v2816 = vadd.f32 %v2814, %v290
    %v2817 = vsel %vm862, %v2815, -inf
    %2818 = vmax.xlane.f32.xlu0 %v2817
    %v2819 = vpop.xlane.xlu0 %2818
    %v2820 = vsel %vm1113, %v2816, -inf
    %2821 = vmax.xlane.f32.xlu0 %v2820
    %v2822 = vpop.xlane.xlu0 %2821
    %v2823 = vsub.f32 %v2815, %v2819
    %v2824 = vsub.f32 %v2816, %v2822
    %v2825 = vmul.f32 %v2823, 1.442695
    %v2826 = vpow.pop %v2825
    %v2827 = vmul.f32 %v2824, 1.442695
    %v2828 = vpow.pop %v2827
    %v2829 = vsel %vm862, %v2826, 0.0
    %2830 = vadd.xlane.f32.xlu0 %v2829
    %v2831 = vpop.xlane.xlu0 %2830
    %v2832 = vsel %vm1113, %v2828, 0.0
    %2833 = vadd.xlane.f32.xlu0 %v2832
    %v2834 = vpop.xlane.xlu0 %2833
    %v2835 = vrcp.pop %v2831
    %v2836 = vrcp.pop %v2834
    %v2837 = vmul.f32 %v2826, %v2835
    %v2838 = vmul.f32 %v2828, %v2836
    %2839 = vrot.lane.b32.xlu0 %v2466, 72
    %v2840 = vpop.permute.xlu0 %2839
    %2841 = vrot.lane.b32.xlu0 %v2469, 72
    %v2842 = vpop.permute.xlu0 %2841
    %v2846 = vsel %vm862, %v2837, 0
    %v2849 = vsel %vm862, %v2838, 0
    %2851 = vmatpush.msra.mxu0 0.0
    %2852 = vmatpush.msra.mxu0 0.0
    %2853 = vmatpush.msra.mxu0 0.0
    %2854 = vmatpush.msra.mxu0 0.0
    %2855 = vmatpush.msra.mxu0 0.0
    %2856 = vmatpush.msra.mxu0 0.0
    %2857 = vmatpush.msra.mxu0 0.0
    %2858 = vmatpush.msra.mxu0 0.0
    %2859 = vmatpush.msra.mxu0 0.0
    %2860 = vmatpush.msra.mxu0 0.0
    %2861 = vmatpush.msra.mxu0 0.0
    %2862 = vmatpush.msra.mxu0 0.0
    %2863 = vmatpush.msra.mxu0 0.0
    %2864 = vmatpush.msra.mxu0 0.0
    %2865 = vmatpush.msra.mxu0 %v2842
    %2866 = vmatpush.msra.mxu0 %v2840
    %2867 = vmatmul.f32.gmra.mxu0 %v2846
    %v2868 = vpop.f32.mrf.mxu0
    %v2869 = vadd.f32 0.0, %v2868
    %2870 = vmatmul.f32.gmra.mxu0 %v2849
    %v2871 = vpop.f32.mrf.mxu0
    %v2872 = vadd.f32 0.0, %v2871
    %2873 = vdwg.mxu0
    %2876 = vrot.lane.b32.xlu0 %v2669, 8
    %v2877 = vpop.permute.xlu0 %2876
    %2878 = vrot.lane.b32.xlu0 %v2672, 8
    %v2879 = vpop.permute.xlu0 %2878
    %2884 = vrot.lane.b32.xlu0 %v2769, 16
    %v2885 = vpop.permute.xlu0 %2884
    %2886 = vrot.lane.b32.xlu0 %v2772, 16
    %v2887 = vpop.permute.xlu0 %2886
    %2892 = vrot.lane.b32.xlu0 %v2869, 24
    %v2893 = vpop.permute.xlu0 %2892
    %2894 = vrot.lane.b32.xlu0 %v2872, 24
    %v2895 = vpop.permute.xlu0 %2894
    %v2898 = vsel %vm436, %v2569, %v2877
    %v2899 = vsel %vm436, %v2572, %v2879
    %v2900 = vsel %vm862, %v2898, %v2885
    %v2901 = vsel %vm862, %v2899, %v2887
    %v2902 = vsel %vm865, %v2900, %v2893
    %v2903 = vsel %vm865, %v2901, %v2895
    %v2905 = vperm.slane %v2477, 0
    %v2908 = vsel %vm293, %v2902, 0
    %v2911 = vsel %vm293, %v2903, 0
    %2913 = vmatpush.msra.mxu0 0.0
    %2914 = vmatpush.msra.mxu0 0.0
    %2915 = vmatpush.msra.mxu0 0.0
    %2916 = vmatpush.msra.mxu0 0.0
    %2917 = vmatpush.msra.mxu0 0.0
    %2918 = vmatpush.msra.mxu0 0.0
    %2919 = vmatpush.msra.mxu0 0.0
    %2920 = vmatpush.msra.mxu0 0.0
    %2921 = vmatpush.msra.mxu0 0.0
    %2922 = vmatpush.msra.mxu0 0.0
    %2923 = vmatpush.msra.mxu0 0.0
    %2924 = vmatpush.msra.mxu0 0.0
    %2925 = vmatpush.msra.mxu0 %v2475
    %2926 = vmatpush.msra.mxu0 %v2474
    %2927 = vmatpush.msra.mxu0 %v2473
    %2928 = vmatpush.msra.mxu0 %v2472
    %2929 = vmatmul.f32.gmra.mxu0 %v2908
    %v2930 = vpop.f32.mrf.mxu0
    %v2931 = vadd.f32 %v2905, %v2930
    %2932 = vmatmul.f32.gmra.mxu0 %v2911
    %v2933 = vpop.f32.mrf.mxu0
    %v2934 = vadd.f32 %v2905, %v2933
    %2935 = vdwg.mxu0
    %v2936 = vadd.f32 %v2307, %v2931
    %v2937 = vadd.f32 %v2308, %v2934
    %s2938 = scalar_lea.vmem %s19, 5
    %v2939 = vld [vmem:[%s2938] sm:$0x1]
    %s2940 = scalar_lea.vmem %s20, 5
    %v2941 = vld [vmem:[%s2940] sm:$0x1]
    %v2942 = vsel %vm293, %v2936, 0.0
    %2943 = vadd.xlane.f32.xlu0 %v2942
    %v2944 = vpop.xlane.xlu0 %2943
    %v2945 = vsel %vm297, %v2937, 0.0
    %2946 = vadd.xlane.f32.xlu0 %v2945
    %v2947 = vpop.xlane.xlu0 %2946
    %v2948 = vmul.f32 %v2944, %v307
    %v2949 = vmul.f32 %v2947, %v307
    %v2950 = vsub.f32 %v2936, %v2948
    %v2951 = vsub.f32 %v2937, %v2949
    %v2952 = vmul.f32 %v2950, %v2950
    %v2953 = vmul.f32 %v2951, %v2951
    %v2954 = vsel %vm293, %v2952, 0.0
    %2955 = vadd.xlane.f32.xlu0 %v2954
    %v2956 = vpop.xlane.xlu0 %2955
    %v2957 = vsel %vm297, %v2953, 0.0
    %2958 = vadd.xlane.f32.xlu0 %v2957
    %v2959 = vpop.xlane.xlu0 %2958
    %v2960 = vmul.f32 %v2956, 0.032258064
    %v2961 = vmul.f32 %v2959, 0.032258064
    %v2963 = vperm.slane %v2939, 0
    %v2965 = vmul.f32 %v2963, %v2950
    %v2966 = vmul.f32 %v2963, %v2951
    %v2967 = vrsqrt.pop %v2960
    %v2968 = vmul.f32 %v2967, %v2960
    %v2969 = vmul.f32 %v2968, %v2967
    %v2970 = vmul.f32 0.5, %v2969
    %v2971 = vsub.f32 1.5, %v2970
    %v2972 = vmul.f32 %v2967, %v2971
    %v2973 = vmul.f32 %v2960, %v2972
    %vm2974 = vcmp.eq.f32.partialorder %v2960, inf
    %v2975 = vsel %vm2974, %v2960, %v2973
    %vm2976 = vcmp.eq.f32.partialorder %v2960, 0.0
    %v2977 = vand.u32 %v2960, 2147483648
    %v2978 = vsel %vm2976, %v2977, %v2975
    %v2979 = vrsqrt.pop %v2961
    %v2980 = vmul.f32 %v2979, %v2961
    %v2981 = vmul.f32 %v2980, %v2979
    %v2982 = vmul.f32 0.5, %v2981
    %v2983 = vsub.f32 1.5, %v2982
    %v2984 = vmul.f32 %v2979, %v2983
    %v2985 = vmul.f32 %v2961, %v2984
    %vm2986 = vcmp.eq.f32.partialorder %v2961, inf
    %v2987 = vsel %vm2986, %v2961, %v2985
    %vm2988 = vcmp.eq.f32.partialorder %v2961, 0.0
    %v2989 = vand.u32 %v2961, 2147483648
    %v2990 = vsel %vm2988, %v2989, %v2987
    %v2991 = vadd.f32 %v2978, 1e-06
    %v2992 = vadd.f32 %v2990, 1e-06
    %v2993 = vrcp.pop %v2991
    %v2994 = vmul.f32 %v2991, %v2993
    %v2995 = vsub.f32 1.0, %v2994
    %v2996 = vmul.f32 %v2993, %v2995
    %v2997 = vadd.f32 %v2993, %v2996
    %vm2998 = vweird.f32 %v2991
    %vm2999 = vweird.f32 %v2993
    %vm3000 = vmor %vm2998, %vm2999
    %v3001 = vsel %vm3000, %v2993, %v2997
    %v3002 = vand.u32 2147483647, %v2991
    %vm3003 = vcmp.eq.f32.partialorder %v3002, 8.507059e+37
    %v3004 = vand.u32 %v2991, 2147483648
    %v3005 = vor.u32 1.1754944e-38, %v3004
    %v3006 = vsel %vm3003, %v3005, %v3001
    %v3007 = vmul.f32 %v2965, %v3006
    %v3008 = vrcp.pop %v2992
    %v3009 = vmul.f32 %v2992, %v3008
    %v3010 = vsub.f32 1.0, %v3009
    %v3011 = vmul.f32 %v3008, %v3010
    %v3012 = vadd.f32 %v3008, %v3011
    %vm3013 = vweird.f32 %v2992
    %vm3014 = vweird.f32 %v3008
    %vm3015 = vmor %vm3013, %vm3014
    %v3016 = vsel %vm3015, %v3008, %v3012
    %v3017 = vand.u32 2147483647, %v2992
    %vm3018 = vcmp.eq.f32.partialorder %v3017, 8.507059e+37
    %v3019 = vand.u32 %v2992, 2147483648
    %v3020 = vor.u32 1.1754944e-38, %v3019
    %v3021 = vsel %vm3018, %v3020, %v3016
    %v3022 = vmul.f32 %v2966, %v3021
    %v3024 = vperm.slane %v2941, 0
    %v3026 = vadd.f32 %v3007, %v3024
    %v3027 = vadd.f32 %v3022, %v3024
    %s3028 = scalar_lea.vmem [#allocation20], 32
    %v3029 = vld [vmem:[%s3028] sm:$0xff]
    %v3030 = vld [vmem:[%s3028 + $0x8] sm:$0xff]
    %v3031 = vld [vmem:[%s3028 + $0x10] sm:$0xff]
    %v3032 = vld [vmem:[%s3028 + $0x18] sm:$0xff]
    %s3033 = scalar_lea.vmem [#allocation22], 1
    %v3034 = vld [vmem:[%s3033] sm:$0x1]
    %v3036 = vperm.slane %v3034, 0
    %v3039 = vsel %vm293, %v3026, 0
    %v3042 = vsel %vm293, %v3027, 0
    %3044 = vmatpush.msra.mxu0 0.0
    %3045 = vmatpush.msra.mxu0 0.0
    %3046 = vmatpush.msra.mxu0 0.0
    %3047 = vmatpush.msra.mxu0 0.0
    %3048 = vmatpush.msra.mxu0 0.0
    %3049 = vmatpush.msra.mxu0 0.0
    %3050 = vmatpush.msra.mxu0 0.0
    %3051 = vmatpush.msra.mxu0 0.0
    %3052 = vmatpush.msra.mxu0 0.0
    %3053 = vmatpush.msra.mxu0 0.0
    %3054 = vmatpush.msra.mxu0 0.0
    %3055 = vmatpush.msra.mxu0 0.0
    %3056 = vmatpush.msra.mxu0 %v3032
    %3057 = vmatpush.msra.mxu0 %v3031
    %3058 = vmatpush.msra.mxu0 %v3030
    %3059 = vmatpush.msra.mxu0 %v3029
    %3060 = vmatmul.f32.gmra.mxu0 %v3039
    %v3061 = vpop.f32.mrf.mxu0
    %v3062 = vadd.f32 %v3036, %v3061
    %3063 = vmatmul.f32.gmra.mxu0 %v3042
    %v3064 = vpop.f32.mrf.mxu0
    %v3065 = vadd.f32 %v3036, %v3064
    %3066 = vdwg.mxu0
    %v3067 = vmax.f32 %v3062, 0.0
    %v3068 = vmax.f32 %v3065, 0.0
    %s3069 = scalar_lea.vmem %s17, 64
    %v3070 = vld [vmem:[%s3069] sm:$0xff]
    %v3071 = vld [vmem:[%s3069 + $0x8] sm:$0xff]
    %v3072 = vld [vmem:[%s3069 + $0x10] sm:$0xff]
    %v3073 = vld [vmem:[%s3069 + $0x18] sm:$0xff]
    %v3074 = vld [vmem:[%s3069 + $0x20] sm:$0xff]
    %v3075 = vld [vmem:[%s3069 + $0x28] sm:$0xff]
    %v3076 = vld [vmem:[%s3069 + $0x30] sm:$0xff]
    %v3077 = vld [vmem:[%s3069 + $0x38] sm:$0xff]
    %v3079 = vsel %vm1669, %v3067, 0
    %v3082 = vsel %vm1669, %v3068, 0
    %3084 = vmatpush.msra.mxu0 0.0
    %3085 = vmatpush.msra.mxu0 0.0
    %3086 = vmatpush.msra.mxu0 0.0
    %3087 = vmatpush.msra.mxu0 0.0
    %3088 = vmatpush.msra.mxu0 0.0
    %3089 = vmatpush.msra.mxu0 0.0
    %3090 = vmatpush.msra.mxu0 0.0
    %3091 = vmatpush.msra.mxu0 0.0
    %3092 = vmatpush.msra.mxu0 %v3077
    %3093 = vmatpush.msra.mxu0 %v3076
    %3094 = vmatpush.msra.mxu0 %v3075
    %3095 = vmatpush.msra.mxu0 %v3074
    %3096 = vmatpush.msra.mxu0 %v3073
    %3097 = vmatpush.msra.mxu0 %v3072
    %3098 = vmatpush.msra.mxu0 %v3071
    %3099 = vmatpush.msra.mxu0 %v3070
    %3100 = vmatmul.f32.gmra.mxu0 %v3079
    %v3101 = vpop.f32.mrf.mxu0
    %v3102 = vadd.f32 0.0, %v3101
    %3103 = vmatmul.f32.gmra.mxu0 %v3082
    %v3104 = vpop.f32.mrf.mxu0
    %v3105 = vadd.f32 0.0, %v3104
    %3106 = vdwg.mxu0
    %v3107 = vadd.f32 %v2936, %v3102
    %v3108 = vadd.f32 %v2937, %v3105
    %s3109 = scalar_lea.vmem %s18, 1
    %v3110 = vld [vmem:[%s3109] sm:$0x1]
    %v3112 = vperm.slane %v3110, 0
    %v3114 = vadd.f32 %v3107, %v3112
    %v3115 = vadd.f32 %v3108, %v3112
    %v3116 = vld [vmem:[%s21] sm:$0x1]
    %v3117 = vld [vmem:[%s22] sm:$0x1]
    %v3118 = vsel %vm293, %v3114, 0.0
    %3119 = vadd.xlane.f32.xlu0 %v3118
    %v3120 = vpop.xlane.xlu0 %3119
    %v3121 = vsel %vm297, %v3115, 0.0
    %3122 = vadd.xlane.f32.xlu0 %v3121
    %v3123 = vpop.xlane.xlu0 %3122
    %v3124 = vmul.f32 %v3120, %v307
    %v3125 = vmul.f32 %v3123, %v307
    %v3126 = vsub.f32 %v3114, %v3124
    %v3127 = vsub.f32 %v3115, %v3125
    %v3128 = vmul.f32 %v3126, %v3126
    %v3129 = vmul.f32 %v3127, %v3127
    %v3130 = vsel %vm293, %v3128, 0.0
    %3131 = vadd.xlane.f32.xlu0 %v3130
    %v3132 = vpop.xlane.xlu0 %3131
    %v3133 = vsel %vm297, %v3129, 0.0
    %3134 = vadd.xlane.f32.xlu0 %v3133
    %v3135 = vpop.xlane.xlu0 %3134
    %v3136 = vmul.f32 %v3132, 0.032258064
    %v3137 = vmul.f32 %v3135, 0.032258064
    %v3139 = vperm.slane %v3116, 0
    %v3141 = vmul.f32 %v3139, %v3126
    %v3142 = vmul.f32 %v3139, %v3127
    %v3143 = vrsqrt.pop %v3136
    %v3144 = vmul.f32 %v3143, %v3136
    %v3145 = vmul.f32 %v3144, %v3143
    %v3146 = vmul.f32 0.5, %v3145
    %v3147 = vsub.f32 1.5, %v3146
    %v3148 = vmul.f32 %v3143, %v3147
    %v3149 = vmul.f32 %v3136, %v3148
    %vm3150 = vcmp.eq.f32.partialorder %v3136, inf
    %v3151 = vsel %vm3150, %v3136, %v3149
    %vm3152 = vcmp.eq.f32.partialorder %v3136, 0.0
    %v3153 = vand.u32 %v3136, 2147483648
    %v3154 = vsel %vm3152, %v3153, %v3151
    %v3155 = vrsqrt.pop %v3137
    %v3156 = vmul.f32 %v3155, %v3137
    %v3157 = vmul.f32 %v3156, %v3155
    %v3158 = vmul.f32 0.5, %v3157
    %v3159 = vsub.f32 1.5, %v3158
    %v3160 = vmul.f32 %v3155, %v3159
    %v3161 = vmul.f32 %v3137, %v3160
    %vm3162 = vcmp.eq.f32.partialorder %v3137, inf
    %v3163 = vsel %vm3162, %v3137, %v3161
    %vm3164 = vcmp.eq.f32.partialorder %v3137, 0.0
    %v3165 = vand.u32 %v3137, 2147483648
    %v3166 = vsel %vm3164, %v3165, %v3163
    %v3167 = vadd.f32 %v3154, 1e-06
    %v3168 = vadd.f32 %v3166, 1e-06
    %v3169 = vrcp.pop %v3167
    %v3170 = vmul.f32 %v3167, %v3169
    %v3171 = vsub.f32 1.0, %v3170
    %v3172 = vmul.f32 %v3169, %v3171
    %v3173 = vadd.f32 %v3169, %v3172
    %vm3174 = vweird.f32 %v3167
    %vm3175 = vweird.f32 %v3169
    %vm3176 = vmor %vm3174, %vm3175
    %v3177 = vsel %vm3176, %v3169, %v3173
    %v3178 = vand.u32 2147483647, %v3167
    %vm3179 = vcmp.eq.f32.partialorder %v3178, 8.507059e+37
    %v3180 = vand.u32 %v3167, 2147483648
    %v3181 = vor.u32 1.1754944e-38, %v3180
    %v3182 = vsel %vm3179, %v3181, %v3177
    %v3183 = vmul.f32 %v3141, %v3182
    %v3184 = vrcp.pop %v3168
    %v3185 = vmul.f32 %v3168, %v3184
    %v3186 = vsub.f32 1.0, %v3185
    %v3187 = vmul.f32 %v3184, %v3186
    %v3188 = vadd.f32 %v3184, %v3187
    %vm3189 = vweird.f32 %v3168
    %vm3190 = vweird.f32 %v3184
    %vm3191 = vmor %vm3189, %vm3190
    %v3192 = vsel %vm3191, %v3184, %v3188
    %v3193 = vand.u32 2147483647, %v3168
    %vm3194 = vcmp.eq.f32.partialorder %v3193, 8.507059e+37
    %v3195 = vand.u32 %v3168, 2147483648
    %v3196 = vor.u32 1.1754944e-38, %v3195
    %v3197 = vsel %vm3194, %v3196, %v3192
    %v3198 = vmul.f32 %v3142, %v3197
    %v3200 = vperm.slane %v3117, 0
    %v3202 = vadd.f32 %v3183, %v3200
    %v3203 = vadd.f32 %v3198, %v3200
    %3204 = vst.msk [vmem:[#allocation23] sm:$0xff] %vm293, %v3202
    %3205 = vst.msk [vmem:[#allocation23 + $0x8] sm:$0x3f] %vm297, %v3203
    // Predicated region
    $region146: #{tpu_custom_call.1} parent=1 // pred_check
      _
    $region147: #{tpu_custom_call.1} parent=1 // pred_check_branch
      %3207 = sbr.rel (0) target = $region149
    $region148: #{tpu_custom_call.1} parent=1 // pred_region
      %3209 = vsyncadd [#allocation4], 0
      %s3210 = sshll.u32 [#allocation23], 4
      %s3211 = int_to_ptr.vmem [resolvable:$true] %s3210
      %s3212 = sshll.u32 %s23, 4
      %s3213 = int_to_ptr.hbm [resolvable:$true] %s3212
      %3218 = dma.vmem_to_hbm [thread:$0]  %s3211, 256, %s3213, [#allocation4], 128, 128, 8
    $region149: #{tpu_custom_call.1} parent=1 // pred_fallthru
      _
    // Predicated region
    $region150: #{tpu_custom_call.1} parent=1 // pred_check
      _
    $region151: #{tpu_custom_call.1} parent=1 // pred_check_branch
      %3220 = sbr.rel (0) target = $region153
    $region152: #{tpu_custom_call.1} parent=1 // pred_region
      %3222 = dma.done [#allocation4], 256
    $region153: #{tpu_custom_call.1} parent=1 // pred_fallthru
      _
    %3223 = vsyncpa [#allocation3], 1
    %3224 = vsyncpa [#allocation6], 1
    %3225 = vsyncpa [#allocation9], 1
    %3226 = vsyncpa [#allocation12], 1
    %3227 = vsyncpa [#allocation15], 1
    %3228 = vsyncpa [#allocation18], 1
    %3229 = vsyncpa [#allocation21], 1
    %3230 = vsyncpa [#allocation4], 1

</llo_original>
